<compile_context>
chip_gen: v6e
topology: v6e:2x2x1
jax: 0.10.0
libtpu: 0.0.40
codegen_flags: <defaults>
</compile_context>

<pallas_src>
import math

import jax
import jax.numpy as jnp
from jax.experimental import pallas as pl
from jax.experimental.pallas import tpu as pltpu

N_HEAD = 4
N_LAYERS = 4
LN_EPS = 1e-5            # nn.LayerNorm default


# --------------------------------------------------------------------------
# kernel
# --------------------------------------------------------------------------
def _layer_norm(v, g, b):
    mu = jnp.mean(v, axis=-1, keepdims=True)
    var = jnp.mean((v - mu) ** 2, axis=-1, keepdims=True)
    return (v - mu) * jax.lax.rsqrt(var + LN_EPS) * g + b


def _make_kernel(B, T, C):
    H = N_HEAD
    hd = C // H
    BT = B * T
    inv_sqrt2 = 1.0 / math.sqrt(2.0)

    def block(x, wqkv, wp, w1, w2, cv, bqkv, b1):
        """One BERT block on a (B*T, C) f32 activation resident in VMEM."""
        ln1g, ln1b, bp = cv[0], cv[1], cv[2]
        ln2g, ln2b, b2 = cv[3], cv[4], cv[5]

        # ------------- attention: x = x + proj(MHSA(ln1(x))) -------------
        h = _layer_norm(x, ln1g, ln1b).astype(jnp.bfloat16)              # (BT, C)
        # fused QKV: one lane-dense matmul, f32 accumulation
        qkv = jnp.dot(h, wqkv, preferred_element_type=jnp.float32) + bqkv  # (BT, 3C)

        def heads(base):
            # (BT, 3C) -> (H*B, T, hd); leading-dim reshapes are layout-free,
            # only the small lane slices move data.
            parts = [qkv[:, base + i * hd: base + (i + 1) * hd].reshape(B, T, hd)
                     for i in range(H)]
            return jnp.concatenate(parts, axis=0).astype(jnp.bfloat16)

        qh = heads(0)          # 1/sqrt(hd) scale already folded into Wq/bq
        kh = heads(C)
        vh = heads(2 * C)

        # scores, batched over (head, batch): bf16 x bf16 -> f32 on MXU
        att = jax.lax.dot_general(
            qh, kh, (((2,), (2,)), ((0,), (0,))),
            preferred_element_type=jnp.float32)                          # (HB, T, T)
        att = jnp.exp(att - jnp.max(att, axis=-1, keepdims=True))
        att = att * pl.reciprocal(jnp.sum(att, axis=-1, keepdims=True), approx=True)

        yh = jax.lax.dot_general(
            att.astype(jnp.bfloat16), vh, (((2,), (1,)), ((0,), (0,))),
            preferred_element_type=jnp.float32)                          # (HB, T, hd)

        # merge heads back along lanes -> single dense projection matmul
        y = jnp.concatenate(
            [yh[i * B:(i + 1) * B].reshape(BT, hd) for i in range(H)],
            axis=-1).astype(jnp.bfloat16)                                # (BT, C)
        x = x + jnp.dot(y, wp, preferred_element_type=jnp.float32) + bp

        # ------------- MLP: x = x + W2(GELU(W1(ln2(x)))) -------------
        h2 = _layer_norm(x, ln2g, ln2b).astype(jnp.bfloat16)
        m = jnp.dot(h2, w1, preferred_element_type=jnp.float32) + b1
        m = 0.5 * m * (1.0 + jax.lax.erf(m * inv_sqrt2))                 # exact GELU
        m = jnp.dot(m.astype(jnp.bfloat16), w2,
                    preferred_element_type=jnp.float32) + b2
        return x + m          # nn.Dropout is identity at inference time

    def kernel(x_ref, wqkv_ref, wp_ref, w1_ref, w2_ref, cv_ref, bqkv_ref, b1_ref,
               o_ref):
        x = x_ref[...].astype(jnp.float32)          # (B*T, C) resident in VMEM
        for l in range(N_LAYERS):                   # static unroll, 4 blocks
            x = block(x, wqkv_ref[l], wp_ref[l], w1_ref[l], w2_ref[l],
                      cv_ref[l], bqkv_ref[l], b1_ref[l])
        o_ref[...] = x.astype(o_ref.dtype)

    return kernel


# --------------------------------------------------------------------------
# wrapper
# --------------------------------------------------------------------------
def bert_forward_pallas(x, params):
    """Full 4-layer BERT forward in a single pallas_call (single grid step)."""
    B, T, C = x.shape
    BT = B * T
    kernel = _make_kernel(B, T, C)

    def full_spec(a):
        n = a.ndim
        return pl.BlockSpec(a.shape, lambda i, n=n: (0,) * n)

    x2 = x.reshape(BT, C)                     # fold batch into rows (free in XLA)
    out = pl.pallas_call(
        kernel,
        out_shape=jax.ShapeDtypeStruct((BT, C), x.dtype),
        grid=(1,),
        in_specs=[pl.BlockSpec((BT, C), lambda i: (0, 0))]
                 + [full_spec(a) for a in params],
        out_specs=pl.BlockSpec((BT, C), lambda i: (0, 0)),
        compiler_params=pltpu.CompilerParams(
            dimension_semantics=("arbitrary",)),
    )(x2, *params)
    return out.reshape(B, T, C)


# --------------------------------------------------------------------------
# parameter construction (synthetic, deterministic) and packing
# --------------------------------------------------------------------------
def init_block_params(key, C):
    """(in, out)-convention weights so that y = x @ W + b (== nn.Linear)."""
    ks = jax.random.split(key, 12)

    def lin(kw, kb, din, dout):
        w = jax.random.normal(kw, (din, dout), jnp.float32) * 0.02
        b = jax.random.normal(kb, (dout,), jnp.float32) * 0.02
        return w, b

    wq, bq = lin(ks[0], ks[1], C, C)
    wk, bk = lin(ks[2], ks[3], C, C)
    wv, bv = lin(ks[4], ks[5], C, C)
    wp, bp = lin(ks[6], ks[7], C, C)
    w1, b1 = lin(ks[8], ks[9], C, 4 * C)
    w2, b2 = lin(ks[10], ks[11], 4 * C, C)
    return dict(
        ln1g=jnp.ones((C,), jnp.float32), ln1b=jnp.zeros((C,), jnp.float32),
        wq=wq, bq=bq, wk=wk, bk=bk, wv=wv, bv=bv, wp=wp, bp=bp,
        ln2g=jnp.ones((C,), jnp.float32), ln2b=jnp.zeros((C,), jnp.float32),
        w1=w1, b1=b1, w2=w2, b2=b2)


def pack_params(per_layer, C):
    """Pack 16 params/layer into 7 stacked arrays (4 bf16 weights, 3 f32 vecs).

    The 1/sqrt(head_dim) attention scale is folded into Wq/bq here (offline).
    """
    hd = C // N_HEAD
    scale = 1.0 / math.sqrt(hd)
    wqkv_l, wp_l, w1_l, w2_l, cv_l, bqkv_l, b1_l = [], [], [], [], [], [], []
    for p in per_layer:
        wqkv_l.append(jnp.concatenate(
            [p["wq"] * scale, p["wk"], p["wv"]], axis=1).astype(jnp.bfloat16))
        bqkv_l.append(jnp.concatenate([p["bq"] * scale, p["bk"], p["bv"]]))
        wp_l.append(p["wp"].astype(jnp.bfloat16))
        w1_l.append(p["w1"].astype(jnp.bfloat16))
        w2_l.append(p["w2"].astype(jnp.bfloat16))
        b1_l.append(p["b1"])
        cv_l.append(jnp.stack([p["ln1g"], p["ln1b"], p["bp"],
                               p["ln2g"], p["ln2b"], p["b2"]], axis=0))
    return (jnp.stack(wqkv_l),    # (L, C, 3C) bf16
            jnp.stack(wp_l),      # (L, C,  C) bf16
            jnp.stack(w1_l),      # (L, C, 4C) bf16
            jnp.stack(w2_l),      # (L, 4C, C) bf16
            jnp.stack(cv_l),      # (L, 6,  C) f32: ln1g, ln1b, bp, ln2g, ln2b, b2
            jnp.stack(bqkv_l),    # (L, 3C)    f32
            jnp.stack(b1_l))      # (L, 4C)    f32


# --------------------------------------------------------------------------
if __name__ == "__main__":
    B, T, C = 2, 8, 32            # n_embd=32, n_head=4, 4 transformer blocks
    assert C % N_HEAD == 0

    root = jax.random.PRNGKey(0)
    x_key, p_key = jax.random.split(root)
    x = jax.random.normal(x_key, (B, T, C), jnp.float32)

    layer_keys = jax.random.split(p_key, N_LAYERS)
    per_layer = [init_block_params(k, C) for k in layer_keys]
    params = pack_params(per_layer, C)

    fwd = jax.jit(bert_forward_pallas)
    out = fwd(x, params)
    jax.block_until_ready(out)

    assert out.shape == (B, T, C)
    assert bool(jnp.isfinite(out).all())
    print("KERNEL_OK")
</pallas_src>

<mosaic_0001>
module attributes {stable_mosaic.version = 11 : i64} {
  func.func @kernel(%arg0: i32, %arg1: memref<16x32xf32, #tpu.memory_space<vmem>>, %arg2: memref<4x32x96xbf16, #tpu.memory_space<vmem>>, %arg3: memref<4x32x32xbf16, #tpu.memory_space<vmem>>, %arg4: memref<4x32x128xbf16, #tpu.memory_space<vmem>>, %arg5: memref<4x128x32xbf16, #tpu.memory_space<vmem>>, %arg6: memref<4x6x32xf32, #tpu.memory_space<vmem>>, %arg7: memref<4x96xf32, #tpu.memory_space<vmem>>, %arg8: memref<4x128xf32, #tpu.memory_space<vmem>>, %arg9: memref<16x32xf32, #tpu.memory_space<vmem>>) attributes {dimension_semantics = [#tpu.dimension_semantics<arbitrary>], iteration_bounds = array<i64: 1>, scalar_prefetch = 0 : i64, scratch_operands = 0 : i64, tpu.core_type = #tpu.core_type<tc>, window_params = [{pipeline_mode = #tpu.pipeline_mode<synchronous>, transform_indices = @transform_0, window_bounds = array<i64: 16, 32>}, {pipeline_mode = #tpu.pipeline_mode<synchronous>, transform_indices = @transform_1, window_bounds = array<i64: 4, 32, 96>}, {pipeline_mode = #tpu.pipeline_mode<synchronous>, transform_indices = @transform_2, window_bounds = array<i64: 4, 32, 32>}, {pipeline_mode = #tpu.pipeline_mode<synchronous>, transform_indices = @transform_3, window_bounds = array<i64: 4, 32, 128>}, {pipeline_mode = #tpu.pipeline_mode<synchronous>, transform_indices = @transform_4, window_bounds = array<i64: 4, 128, 32>}, {pipeline_mode = #tpu.pipeline_mode<synchronous>, transform_indices = @transform_5, window_bounds = array<i64: 4, 6, 32>}, {pipeline_mode = #tpu.pipeline_mode<synchronous>, transform_indices = @transform_6, window_bounds = array<i64: 4, 96>}, {pipeline_mode = #tpu.pipeline_mode<synchronous>, transform_indices = @transform_7, window_bounds = array<i64: 4, 128>}, {pipeline_mode = #tpu.pipeline_mode<synchronous>, transform_indices = @transform_8, window_bounds = array<i64: 16, 32>}]} {
    %c0 = arith.constant 0 : index
    %c0_0 = arith.constant 0 : index
    %0 = vector.load %arg1[%c0, %c0_0] : memref<16x32xf32, #tpu.memory_space<vmem>>, vector<16x32xf32>
    %c0_1 = arith.constant 0 : index
    %c0_2 = arith.constant 0 : index
    %c0_3 = arith.constant 0 : index
    %1 = vector.load %arg2[%c0_1, %c0_2, %c0_3] : memref<4x32x96xbf16, #tpu.memory_space<vmem>>, vector<1x32x96xbf16>
    %2 = vector.shape_cast %1 : vector<1x32x96xbf16> to vector<32x96xbf16>
    %c0_4 = arith.constant 0 : index
    %c0_5 = arith.constant 0 : index
    %c0_6 = arith.constant 0 : index
    %3 = vector.load %arg3[%c0_4, %c0_5, %c0_6] : memref<4x32x32xbf16, #tpu.memory_space<vmem>>, vector<1x32x32xbf16>
    %4 = vector.shape_cast %3 : vector<1x32x32xbf16> to vector<32x32xbf16>
    %c0_7 = arith.constant 0 : index
    %c0_8 = arith.constant 0 : index
    %c0_9 = arith.constant 0 : index
    %5 = vector.load %arg4[%c0_7, %c0_8, %c0_9] : memref<4x32x128xbf16, #tpu.memory_space<vmem>>, vector<1x32x128xbf16>
    %6 = vector.shape_cast %5 : vector<1x32x128xbf16> to vector<32x128xbf16>
    %c0_10 = arith.constant 0 : index
    %c0_11 = arith.constant 0 : index
    %c0_12 = arith.constant 0 : index
    %7 = vector.load %arg5[%c0_10, %c0_11, %c0_12] : memref<4x128x32xbf16, #tpu.memory_space<vmem>>, vector<1x128x32xbf16>
    %8 = vector.shape_cast %7 : vector<1x128x32xbf16> to vector<128x32xbf16>
    %c0_13 = arith.constant 0 : index
    %c0_14 = arith.constant 0 : index
    %c0_15 = arith.constant 0 : index
    %9 = vector.load %arg6[%c0_13, %c0_14, %c0_15] : memref<4x6x32xf32, #tpu.memory_space<vmem>>, vector<1x6x32xf32>
    %10 = vector.shape_cast %9 : vector<1x6x32xf32> to vector<6x32xf32>
    %c0_16 = arith.constant 0 : index
    %c0_17 = arith.constant 0 : index
    %11 = vector.load %arg7[%c0_16, %c0_17] : memref<4x96xf32, #tpu.memory_space<vmem>>, vector<1x96xf32>
    %12 = vector.shape_cast %11 : vector<1x96xf32> to vector<96xf32>
    %c0_18 = arith.constant 0 : index
    %c0_19 = arith.constant 0 : index
    %13 = vector.load %arg8[%c0_18, %c0_19] : memref<4x128xf32, #tpu.memory_space<vmem>>, vector<1x128xf32>
    %14 = vector.shape_cast %13 : vector<1x128xf32> to vector<128xf32>
    %15 = vector.extract_strided_slice %10 {offsets = [0, 0], sizes = [1, 32], strides = [1, 1]} : vector<6x32xf32> to vector<1x32xf32>
    %16 = vector.shape_cast %15 : vector<1x32xf32> to vector<32xf32>
    %17 = vector.extract_strided_slice %10 {offsets = [1, 0], sizes = [1, 32], strides = [1, 1]} : vector<6x32xf32> to vector<1x32xf32>
    %18 = vector.shape_cast %17 : vector<1x32xf32> to vector<32xf32>
    %19 = vector.extract_strided_slice %10 {offsets = [2, 0], sizes = [1, 32], strides = [1, 1]} : vector<6x32xf32> to vector<1x32xf32>
    %20 = vector.shape_cast %19 : vector<1x32xf32> to vector<32xf32>
    %21 = vector.extract_strided_slice %10 {offsets = [3, 0], sizes = [1, 32], strides = [1, 1]} : vector<6x32xf32> to vector<1x32xf32>
    %22 = vector.shape_cast %21 : vector<1x32xf32> to vector<32xf32>
    %23 = vector.extract_strided_slice %10 {offsets = [4, 0], sizes = [1, 32], strides = [1, 1]} : vector<6x32xf32> to vector<1x32xf32>
    %24 = vector.shape_cast %23 : vector<1x32xf32> to vector<32xf32>
    %25 = vector.extract_strided_slice %10 {offsets = [5, 0], sizes = [1, 32], strides = [1, 1]} : vector<6x32xf32> to vector<1x32xf32>
    %26 = vector.shape_cast %25 : vector<1x32xf32> to vector<32xf32>
    %cst = arith.constant dense<0.000000e+00> : vector<16xf32>
    %27 = vector.multi_reduction <add>, %0, %cst [1] : vector<16x32xf32> to vector<16xf32>
    %28 = vector.shape_cast %27 : vector<16xf32> to vector<16x1xf32>
    %cst_20 = arith.constant 3.200000e+01 : f32
    %29 = vector.broadcast %cst_20 : f32 to vector<16x1xf32>
    %30 = arith.divf %28, %29 : vector<16x1xf32>
    %31 = vector.broadcast %30 : vector<16x1xf32> to vector<16x32xf32>
    %32 = arith.subf %0, %31 : vector<16x32xf32>
    %33 = arith.mulf %32, %32 : vector<16x32xf32>
    %cst_21 = arith.constant dense<0.000000e+00> : vector<16xf32>
    %34 = vector.multi_reduction <add>, %33, %cst_21 [1] : vector<16x32xf32> to vector<16xf32>
    %35 = vector.shape_cast %34 : vector<16xf32> to vector<16x1xf32>
    %cst_22 = arith.constant 3.200000e+01 : f32
    %36 = vector.broadcast %cst_22 : f32 to vector<16x1xf32>
    %37 = arith.divf %35, %36 : vector<16x1xf32>
    %38 = vector.broadcast %30 : vector<16x1xf32> to vector<16x32xf32>
    %39 = arith.subf %0, %38 : vector<16x32xf32>
    %cst_23 = arith.constant 9.99999974E-6 : f32
    %40 = vector.broadcast %cst_23 : f32 to vector<16x1xf32>
    %41 = arith.addf %37, %40 : vector<16x1xf32>
    %42 = math.rsqrt %41 : vector<16x1xf32>
    %43 = vector.broadcast %42 : vector<16x1xf32> to vector<16x32xf32>
    %44 = arith.mulf %39, %43 : vector<16x32xf32>
    %45 = vector.shape_cast %16 : vector<32xf32> to vector<1x32xf32>
    %46 = vector.broadcast %45 : vector<1x32xf32> to vector<16x32xf32>
    %47 = arith.mulf %44, %46 : vector<16x32xf32>
    %48 = vector.shape_cast %18 : vector<32xf32> to vector<1x32xf32>
    %49 = vector.broadcast %48 : vector<1x32xf32> to vector<16x32xf32>
    %50 = arith.addf %47, %49 : vector<16x32xf32>
    %51 = arith.truncf %50 : vector<16x32xf32> to vector<16x32xbf16>
    %cst_24 = arith.constant dense<0.000000e+00> : vector<16x96xf32>
    %52 = tpu.matmul %51, %2, %cst_24 {dimension_numbers = #tpu.dot_dimension_numbers<[1], [0], [0], [1], [0, 0, 1, 1], [], []>} : vector<16x32xbf16>, vector<32x96xbf16>, vector<16x96xf32> -> vector<16x96xf32>
    %53 = vector.shape_cast %12 : vector<96xf32> to vector<1x96xf32>
    %54 = vector.broadcast %53 : vector<1x96xf32> to vector<16x96xf32>
    %55 = arith.addf %52, %54 : vector<16x96xf32>
    %56 = vector.extract_strided_slice %55 {offsets = [0, 0], sizes = [16, 8], strides = [1, 1]} : vector<16x96xf32> to vector<16x8xf32>
    %57 = vector.shape_cast %56 : vector<16x8xf32> to vector<2x8x8xf32>
    %58 = vector.extract_strided_slice %55 {offsets = [0, 8], sizes = [16, 8], strides = [1, 1]} : vector<16x96xf32> to vector<16x8xf32>
    %59 = vector.shape_cast %58 : vector<16x8xf32> to vector<2x8x8xf32>
    %60 = vector.extract_strided_slice %55 {offsets = [0, 16], sizes = [16, 8], strides = [1, 1]} : vector<16x96xf32> to vector<16x8xf32>
    %61 = vector.shape_cast %60 : vector<16x8xf32> to vector<2x8x8xf32>
    %62 = vector.extract_strided_slice %55 {offsets = [0, 24], sizes = [16, 8], strides = [1, 1]} : vector<16x96xf32> to vector<16x8xf32>
    %63 = vector.shape_cast %62 : vector<16x8xf32> to vector<2x8x8xf32>
    %64 = tpu.concatenate %57, %59, %61, %63 in 0 : vector<2x8x8xf32>, vector<2x8x8xf32>, vector<2x8x8xf32>, vector<2x8x8xf32> -> vector<8x8x8xf32>
    %65 = arith.truncf %64 : vector<8x8x8xf32> to vector<8x8x8xbf16>
    %66 = vector.extract_strided_slice %55 {offsets = [0, 32], sizes = [16, 8], strides = [1, 1]} : vector<16x96xf32> to vector<16x8xf32>
    %67 = vector.shape_cast %66 : vector<16x8xf32> to vector<2x8x8xf32>
    %68 = vector.extract_strided_slice %55 {offsets = [0, 40], sizes = [16, 8], strides = [1, 1]} : vector<16x96xf32> to vector<16x8xf32>
    %69 = vector.shape_cast %68 : vector<16x8xf32> to vector<2x8x8xf32>
    %70 = vector.extract_strided_slice %55 {offsets = [0, 48], sizes = [16, 8], strides = [1, 1]} : vector<16x96xf32> to vector<16x8xf32>
    %71 = vector.shape_cast %70 : vector<16x8xf32> to vector<2x8x8xf32>
    %72 = vector.extract_strided_slice %55 {offsets = [0, 56], sizes = [16, 8], strides = [1, 1]} : vector<16x96xf32> to vector<16x8xf32>
    %73 = vector.shape_cast %72 : vector<16x8xf32> to vector<2x8x8xf32>
    %74 = tpu.concatenate %67, %69, %71, %73 in 0 : vector<2x8x8xf32>, vector<2x8x8xf32>, vector<2x8x8xf32>, vector<2x8x8xf32> -> vector<8x8x8xf32>
    %75 = arith.truncf %74 : vector<8x8x8xf32> to vector<8x8x8xbf16>
    %76 = vector.extract_strided_slice %55 {offsets = [0, 64], sizes = [16, 8], strides = [1, 1]} : vector<16x96xf32> to vector<16x8xf32>
    %77 = vector.shape_cast %76 : vector<16x8xf32> to vector<2x8x8xf32>
    %78 = vector.extract_strided_slice %55 {offsets = [0, 72], sizes = [16, 8], strides = [1, 1]} : vector<16x96xf32> to vector<16x8xf32>
    %79 = vector.shape_cast %78 : vector<16x8xf32> to vector<2x8x8xf32>
    %80 = vector.extract_strided_slice %55 {offsets = [0, 80], sizes = [16, 8], strides = [1, 1]} : vector<16x96xf32> to vector<16x8xf32>
    %81 = vector.shape_cast %80 : vector<16x8xf32> to vector<2x8x8xf32>
    %82 = vector.extract_strided_slice %55 {offsets = [0, 88], sizes = [16, 8], strides = [1, 1]} : vector<16x96xf32> to vector<16x8xf32>
    %83 = vector.shape_cast %82 : vector<16x8xf32> to vector<2x8x8xf32>
    %84 = tpu.concatenate %77, %79, %81, %83 in 0 : vector<2x8x8xf32>, vector<2x8x8xf32>, vector<2x8x8xf32>, vector<2x8x8xf32> -> vector<8x8x8xf32>
    %85 = arith.truncf %84 : vector<8x8x8xf32> to vector<8x8x8xbf16>
    %cst_25 = arith.constant dense<0.000000e+00> : vector<8x8x8xf32>
    %86 = tpu.matmul %65, %75, %cst_25 {dimension_numbers = #tpu.dot_dimension_numbers<[2], [2], [1], [1], [0, 0, 0, 1, 1, 1], [0], [0]>} : vector<8x8x8xbf16>, vector<8x8x8xbf16>, vector<8x8x8xf32> -> vector<8x8x8xf32>
    %cst_26 = arith.constant dense<0xFF800000> : vector<8x8xf32>
    %87 = vector.multi_reduction <maximumf>, %86, %cst_26 [2] : vector<8x8x8xf32> to vector<8x8xf32>
    %88 = vector.shape_cast %87 : vector<8x8xf32> to vector<8x8x1xf32>
    %89 = vector.broadcast %88 : vector<8x8x1xf32> to vector<8x8x8xf32>
    %90 = arith.subf %86, %89 : vector<8x8x8xf32>
    %91 = math.exp %90 : vector<8x8x8xf32>
    %cst_27 = arith.constant dense<0.000000e+00> : vector<8x8xf32>
    %92 = vector.multi_reduction <add>, %91, %cst_27 [2] : vector<8x8x8xf32> to vector<8x8xf32>
    %93 = vector.shape_cast %92 : vector<8x8xf32> to vector<8x8x1xf32>
    %94 = tpu.reciprocal %93 {approx = true} : vector<8x8x1xf32> -> vector<8x8x1xf32>
    %95 = vector.broadcast %94 : vector<8x8x1xf32> to vector<8x8x8xf32>
    %96 = arith.mulf %91, %95 : vector<8x8x8xf32>
    %97 = arith.truncf %96 : vector<8x8x8xf32> to vector<8x8x8xbf16>
    %cst_28 = arith.constant dense<0.000000e+00> : vector<8x8x8xf32>
    %98 = tpu.matmul %97, %85, %cst_28 {dimension_numbers = #tpu.dot_dimension_numbers<[2], [1], [1], [2], [0, 0, 0, 1, 1, 2], [0], [0]>} : vector<8x8x8xbf16>, vector<8x8x8xbf16>, vector<8x8x8xf32> -> vector<8x8x8xf32>
    %99 = vector.extract_strided_slice %98 {offsets = [0, 0, 0], sizes = [2, 8, 8], strides = [1, 1, 1]} : vector<8x8x8xf32> to vector<2x8x8xf32>
    %100 = vector.shape_cast %99 : vector<2x8x8xf32> to vector<16x8xf32>
    %101 = vector.extract_strided_slice %98 {offsets = [2, 0, 0], sizes = [2, 8, 8], strides = [1, 1, 1]} : vector<8x8x8xf32> to vector<2x8x8xf32>
    %102 = vector.shape_cast %101 : vector<2x8x8xf32> to vector<16x8xf32>
    %103 = vector.extract_strided_slice %98 {offsets = [4, 0, 0], sizes = [2, 8, 8], strides = [1, 1, 1]} : vector<8x8x8xf32> to vector<2x8x8xf32>
    %104 = vector.shape_cast %103 : vector<2x8x8xf32> to vector<16x8xf32>
    %105 = vector.extract_strided_slice %98 {offsets = [6, 0, 0], sizes = [2, 8, 8], strides = [1, 1, 1]} : vector<8x8x8xf32> to vector<2x8x8xf32>
    %106 = vector.shape_cast %105 : vector<2x8x8xf32> to vector<16x8xf32>
    %107 = tpu.concatenate %100, %102, %104, %106 in 1 : vector<16x8xf32>, vector<16x8xf32>, vector<16x8xf32>, vector<16x8xf32> -> vector<16x32xf32>
    %108 = arith.truncf %107 : vector<16x32xf32> to vector<16x32xbf16>
    %cst_29 = arith.constant dense<0.000000e+00> : vector<16x32xf32>
    %109 = tpu.matmul %108, %4, %cst_29 {dimension_numbers = #tpu.dot_dimension_numbers<[1], [0], [0], [1], [0, 0, 1, 1], [], []>} : vector<16x32xbf16>, vector<32x32xbf16>, vector<16x32xf32> -> vector<16x32xf32>
    %110 = arith.addf %0, %109 : vector<16x32xf32>
    %111 = vector.shape_cast %20 : vector<32xf32> to vector<1x32xf32>
    %112 = vector.broadcast %111 : vector<1x32xf32> to vector<16x32xf32>
    %113 = arith.addf %110, %112 : vector<16x32xf32>
    %cst_30 = arith.constant dense<0.000000e+00> : vector<16xf32>
    %114 = vector.multi_reduction <add>, %113, %cst_30 [1] : vector<16x32xf32> to vector<16xf32>
    %115 = vector.shape_cast %114 : vector<16xf32> to vector<16x1xf32>
    %cst_31 = arith.constant 3.200000e+01 : f32
    %116 = vector.broadcast %cst_31 : f32 to vector<16x1xf32>
    %117 = arith.divf %115, %116 : vector<16x1xf32>
    %118 = vector.broadcast %117 : vector<16x1xf32> to vector<16x32xf32>
    %119 = arith.subf %113, %118 : vector<16x32xf32>
    %120 = arith.mulf %119, %119 : vector<16x32xf32>
    %cst_32 = arith.constant dense<0.000000e+00> : vector<16xf32>
    %121 = vector.multi_reduction <add>, %120, %cst_32 [1] : vector<16x32xf32> to vector<16xf32>
    %122 = vector.shape_cast %121 : vector<16xf32> to vector<16x1xf32>
    %cst_33 = arith.constant 3.200000e+01 : f32
    %123 = vector.broadcast %cst_33 : f32 to vector<16x1xf32>
    %124 = arith.divf %122, %123 : vector<16x1xf32>
    %125 = vector.broadcast %117 : vector<16x1xf32> to vector<16x32xf32>
    %126 = arith.subf %113, %125 : vector<16x32xf32>
    %cst_34 = arith.constant 9.99999974E-6 : f32
    %127 = vector.broadcast %cst_34 : f32 to vector<16x1xf32>
    %128 = arith.addf %124, %127 : vector<16x1xf32>
    %129 = math.rsqrt %128 : vector<16x1xf32>
    %130 = vector.broadcast %129 : vector<16x1xf32> to vector<16x32xf32>
    %131 = arith.mulf %126, %130 : vector<16x32xf32>
    %132 = vector.shape_cast %22 : vector<32xf32> to vector<1x32xf32>
    %133 = vector.broadcast %132 : vector<1x32xf32> to vector<16x32xf32>
    %134 = arith.mulf %131, %133 : vector<16x32xf32>
    %135 = vector.shape_cast %24 : vector<32xf32> to vector<1x32xf32>
    %136 = vector.broadcast %135 : vector<1x32xf32> to vector<16x32xf32>
    %137 = arith.addf %134, %136 : vector<16x32xf32>
    %138 = arith.truncf %137 : vector<16x32xf32> to vector<16x32xbf16>
    %cst_35 = arith.constant dense<0.000000e+00> : vector<16x128xf32>
    %139 = tpu.matmul %138, %6, %cst_35 {dimension_numbers = #tpu.dot_dimension_numbers<[1], [0], [0], [1], [0, 0, 1, 1], [], []>} : vector<16x32xbf16>, vector<32x128xbf16>, vector<16x128xf32> -> vector<16x128xf32>
    %140 = vector.shape_cast %14 : vector<128xf32> to vector<1x128xf32>
    %141 = vector.broadcast %140 : vector<1x128xf32> to vector<16x128xf32>
    %142 = arith.addf %139, %141 : vector<16x128xf32>
    %cst_36 = arith.constant 5.000000e-01 : f32
    %143 = vector.broadcast %cst_36 : f32 to vector<16x128xf32>
    %144 = arith.mulf %143, %142 : vector<16x128xf32>
    %cst_37 = arith.constant 0.707106769 : f32
    %145 = vector.broadcast %cst_37 : f32 to vector<16x128xf32>
    %146 = arith.mulf %142, %145 : vector<16x128xf32>
    %147 = math.erf %146 : vector<16x128xf32>
    %cst_38 = arith.constant 1.000000e+00 : f32
    %148 = vector.broadcast %cst_38 : f32 to vector<16x128xf32>
    %149 = arith.addf %148, %147 : vector<16x128xf32>
    %150 = arith.mulf %144, %149 : vector<16x128xf32>
    %151 = arith.truncf %150 : vector<16x128xf32> to vector<16x128xbf16>
    %cst_39 = arith.constant dense<0.000000e+00> : vector<16x32xf32>
    %152 = tpu.matmul %151, %8, %cst_39 {dimension_numbers = #tpu.dot_dimension_numbers<[1], [0], [0], [1], [0, 0, 1, 1], [], []>} : vector<16x128xbf16>, vector<128x32xbf16>, vector<16x32xf32> -> vector<16x32xf32>
    %153 = vector.shape_cast %26 : vector<32xf32> to vector<1x32xf32>
    %154 = vector.broadcast %153 : vector<1x32xf32> to vector<16x32xf32>
    %155 = arith.addf %152, %154 : vector<16x32xf32>
    %156 = arith.addf %113, %155 : vector<16x32xf32>
    %c1 = arith.constant 1 : index
    %c0_40 = arith.constant 0 : index
    %c0_41 = arith.constant 0 : index
    %157 = vector.load %arg2[%c1, %c0_40, %c0_41] : memref<4x32x96xbf16, #tpu.memory_space<vmem>>, vector<1x32x96xbf16>
    %158 = vector.shape_cast %157 : vector<1x32x96xbf16> to vector<32x96xbf16>
    %c1_42 = arith.constant 1 : index
    %c0_43 = arith.constant 0 : index
    %c0_44 = arith.constant 0 : index
    %159 = vector.load %arg3[%c1_42, %c0_43, %c0_44] : memref<4x32x32xbf16, #tpu.memory_space<vmem>>, vector<1x32x32xbf16>
    %160 = vector.shape_cast %159 : vector<1x32x32xbf16> to vector<32x32xbf16>
    %c1_45 = arith.constant 1 : index
    %c0_46 = arith.constant 0 : index
    %c0_47 = arith.constant 0 : index
    %161 = vector.load %arg4[%c1_45, %c0_46, %c0_47] : memref<4x32x128xbf16, #tpu.memory_space<vmem>>, vector<1x32x128xbf16>
    %162 = vector.shape_cast %161 : vector<1x32x128xbf16> to vector<32x128xbf16>
    %c1_48 = arith.constant 1 : index
    %c0_49 = arith.constant 0 : index
    %c0_50 = arith.constant 0 : index
    %163 = vector.load %arg5[%c1_48, %c0_49, %c0_50] : memref<4x128x32xbf16, #tpu.memory_space<vmem>>, vector<1x128x32xbf16>
    %164 = vector.shape_cast %163 : vector<1x128x32xbf16> to vector<128x32xbf16>
    %c1_51 = arith.constant 1 : index
    %c0_52 = arith.constant 0 : index
    %c0_53 = arith.constant 0 : index
    %165 = vector.load %arg6[%c1_51, %c0_52, %c0_53] : memref<4x6x32xf32, #tpu.memory_space<vmem>>, vector<1x6x32xf32>
    %166 = vector.shape_cast %165 : vector<1x6x32xf32> to vector<6x32xf32>
    %c1_54 = arith.constant 1 : index
    %c0_55 = arith.constant 0 : index
    %167 = vector.load %arg7[%c1_54, %c0_55] : memref<4x96xf32, #tpu.memory_space<vmem>>, vector<1x96xf32>
    %168 = vector.shape_cast %167 : vector<1x96xf32> to vector<96xf32>
    %c1_56 = arith.constant 1 : index
    %c0_57 = arith.constant 0 : index
    %169 = vector.load %arg8[%c1_56, %c0_57] : memref<4x128xf32, #tpu.memory_space<vmem>>, vector<1x128xf32>
    %170 = vector.shape_cast %169 : vector<1x128xf32> to vector<128xf32>
    %171 = vector.extract_strided_slice %166 {offsets = [0, 0], sizes = [1, 32], strides = [1, 1]} : vector<6x32xf32> to vector<1x32xf32>
    %172 = vector.shape_cast %171 : vector<1x32xf32> to vector<32xf32>
    %173 = vector.extract_strided_slice %166 {offsets = [1, 0], sizes = [1, 32], strides = [1, 1]} : vector<6x32xf32> to vector<1x32xf32>
    %174 = vector.shape_cast %173 : vector<1x32xf32> to vector<32xf32>
    %175 = vector.extract_strided_slice %166 {offsets = [2, 0], sizes = [1, 32], strides = [1, 1]} : vector<6x32xf32> to vector<1x32xf32>
    %176 = vector.shape_cast %175 : vector<1x32xf32> to vector<32xf32>
    %177 = vector.extract_strided_slice %166 {offsets = [3, 0], sizes = [1, 32], strides = [1, 1]} : vector<6x32xf32> to vector<1x32xf32>
    %178 = vector.shape_cast %177 : vector<1x32xf32> to vector<32xf32>
    %179 = vector.extract_strided_slice %166 {offsets = [4, 0], sizes = [1, 32], strides = [1, 1]} : vector<6x32xf32> to vector<1x32xf32>
    %180 = vector.shape_cast %179 : vector<1x32xf32> to vector<32xf32>
    %181 = vector.extract_strided_slice %166 {offsets = [5, 0], sizes = [1, 32], strides = [1, 1]} : vector<6x32xf32> to vector<1x32xf32>
    %182 = vector.shape_cast %181 : vector<1x32xf32> to vector<32xf32>
    %cst_58 = arith.constant dense<0.000000e+00> : vector<16xf32>
    %183 = vector.multi_reduction <add>, %156, %cst_58 [1] : vector<16x32xf32> to vector<16xf32>
    %184 = vector.shape_cast %183 : vector<16xf32> to vector<16x1xf32>
    %cst_59 = arith.constant 3.200000e+01 : f32
    %185 = vector.broadcast %cst_59 : f32 to vector<16x1xf32>
    %186 = arith.divf %184, %185 : vector<16x1xf32>
    %187 = vector.broadcast %186 : vector<16x1xf32> to vector<16x32xf32>
    %188 = arith.subf %156, %187 : vector<16x32xf32>
    %189 = arith.mulf %188, %188 : vector<16x32xf32>
    %cst_60 = arith.constant dense<0.000000e+00> : vector<16xf32>
    %190 = vector.multi_reduction <add>, %189, %cst_60 [1] : vector<16x32xf32> to vector<16xf32>
    %191 = vector.shape_cast %190 : vector<16xf32> to vector<16x1xf32>
    %cst_61 = arith.constant 3.200000e+01 : f32
    %192 = vector.broadcast %cst_61 : f32 to vector<16x1xf32>
    %193 = arith.divf %191, %192 : vector<16x1xf32>
    %194 = vector.broadcast %186 : vector<16x1xf32> to vector<16x32xf32>
    %195 = arith.subf %156, %194 : vector<16x32xf32>
    %cst_62 = arith.constant 9.99999974E-6 : f32
    %196 = vector.broadcast %cst_62 : f32 to vector<16x1xf32>
    %197 = arith.addf %193, %196 : vector<16x1xf32>
    %198 = math.rsqrt %197 : vector<16x1xf32>
    %199 = vector.broadcast %198 : vector<16x1xf32> to vector<16x32xf32>
    %200 = arith.mulf %195, %199 : vector<16x32xf32>
    %201 = vector.shape_cast %172 : vector<32xf32> to vector<1x32xf32>
    %202 = vector.broadcast %201 : vector<1x32xf32> to vector<16x32xf32>
    %203 = arith.mulf %200, %202 : vector<16x32xf32>
    %204 = vector.shape_cast %174 : vector<32xf32> to vector<1x32xf32>
    %205 = vector.broadcast %204 : vector<1x32xf32> to vector<16x32xf32>
    %206 = arith.addf %203, %205 : vector<16x32xf32>
    %207 = arith.truncf %206 : vector<16x32xf32> to vector<16x32xbf16>
    %cst_63 = arith.constant dense<0.000000e+00> : vector<16x96xf32>
    %208 = tpu.matmul %207, %158, %cst_63 {dimension_numbers = #tpu.dot_dimension_numbers<[1], [0], [0], [1], [0, 0, 1, 1], [], []>} : vector<16x32xbf16>, vector<32x96xbf16>, vector<16x96xf32> -> vector<16x96xf32>
    %209 = vector.shape_cast %168 : vector<96xf32> to vector<1x96xf32>
    %210 = vector.broadcast %209 : vector<1x96xf32> to vector<16x96xf32>
    %211 = arith.addf %208, %210 : vector<16x96xf32>
    %212 = vector.extract_strided_slice %211 {offsets = [0, 0], sizes = [16, 8], strides = [1, 1]} : vector<16x96xf32> to vector<16x8xf32>
    %213 = vector.shape_cast %212 : vector<16x8xf32> to vector<2x8x8xf32>
    %214 = vector.extract_strided_slice %211 {offsets = [0, 8], sizes = [16, 8], strides = [1, 1]} : vector<16x96xf32> to vector<16x8xf32>
    %215 = vector.shape_cast %214 : vector<16x8xf32> to vector<2x8x8xf32>
    %216 = vector.extract_strided_slice %211 {offsets = [0, 16], sizes = [16, 8], strides = [1, 1]} : vector<16x96xf32> to vector<16x8xf32>
    %217 = vector.shape_cast %216 : vector<16x8xf32> to vector<2x8x8xf32>
    %218 = vector.extract_strided_slice %211 {offsets = [0, 24], sizes = [16, 8], strides = [1, 1]} : vector<16x96xf32> to vector<16x8xf32>
    %219 = vector.shape_cast %218 : vector<16x8xf32> to vector<2x8x8xf32>
    %220 = tpu.concatenate %213, %215, %217, %219 in 0 : vector<2x8x8xf32>, vector<2x8x8xf32>, vector<2x8x8xf32>, vector<2x8x8xf32> -> vector<8x8x8xf32>
    %221 = arith.truncf %220 : vector<8x8x8xf32> to vector<8x8x8xbf16>
    %222 = vector.extract_strided_slice %211 {offsets = [0, 32], sizes = [16, 8], strides = [1, 1]} : vector<16x96xf32> to vector<16x8xf32>
    %223 = vector.shape_cast %222 : vector<16x8xf32> to vector<2x8x8xf32>
    %224 = vector.extract_strided_slice %211 {offsets = [0, 40], sizes = [16, 8], strides = [1, 1]} : vector<16x96xf32> to vector<16x8xf32>
    %225 = vector.shape_cast %224 : vector<16x8xf32> to vector<2x8x8xf32>
    %226 = vector.extract_strided_slice %211 {offsets = [0, 48], sizes = [16, 8], strides = [1, 1]} : vector<16x96xf32> to vector<16x8xf32>
    %227 = vector.shape_cast %226 : vector<16x8xf32> to vector<2x8x8xf32>
    %228 = vector.extract_strided_slice %211 {offsets = [0, 56], sizes = [16, 8], strides = [1, 1]} : vector<16x96xf32> to vector<16x8xf32>
    %229 = vector.shape_cast %228 : vector<16x8xf32> to vector<2x8x8xf32>
    %230 = tpu.concatenate %223, %225, %227, %229 in 0 : vector<2x8x8xf32>, vector<2x8x8xf32>, vector<2x8x8xf32>, vector<2x8x8xf32> -> vector<8x8x8xf32>
    %231 = arith.truncf %230 : vector<8x8x8xf32> to vector<8x8x8xbf16>
    %232 = vector.extract_strided_slice %211 {offsets = [0, 64], sizes = [16, 8], strides = [1, 1]} : vector<16x96xf32> to vector<16x8xf32>
    %233 = vector.shape_cast %232 : vector<16x8xf32> to vector<2x8x8xf32>
    %234 = vector.extract_strided_slice %211 {offsets = [0, 72], sizes = [16, 8], strides = [1, 1]} : vector<16x96xf32> to vector<16x8xf32>
    %235 = vector.shape_cast %234 : vector<16x8xf32> to vector<2x8x8xf32>
    %236 = vector.extract_strided_slice %211 {offsets = [0, 80], sizes = [16, 8], strides = [1, 1]} : vector<16x96xf32> to vector<16x8xf32>
    %237 = vector.shape_cast %236 : vector<16x8xf32> to vector<2x8x8xf32>
    %238 = vector.extract_strided_slice %211 {offsets = [0, 88], sizes = [16, 8], strides = [1, 1]} : vector<16x96xf32> to vector<16x8xf32>
    %239 = vector.shape_cast %238 : vector<16x8xf32> to vector<2x8x8xf32>
    %240 = tpu.concatenate %233, %235, %237, %239 in 0 : vector<2x8x8xf32>, vector<2x8x8xf32>, vector<2x8x8xf32>, vector<2x8x8xf32> -> vector<8x8x8xf32>
    %241 = arith.truncf %240 : vector<8x8x8xf32> to vector<8x8x8xbf16>
    %cst_64 = arith.constant dense<0.000000e+00> : vector<8x8x8xf32>
    %242 = tpu.matmul %221, %231, %cst_64 {dimension_numbers = #tpu.dot_dimension_numbers<[2], [2], [1], [1], [0, 0, 0, 1, 1, 1], [0], [0]>} : vector<8x8x8xbf16>, vector<8x8x8xbf16>, vector<8x8x8xf32> -> vector<8x8x8xf32>
    %cst_65 = arith.constant dense<0xFF800000> : vector<8x8xf32>
    %243 = vector.multi_reduction <maximumf>, %242, %cst_65 [2] : vector<8x8x8xf32> to vector<8x8xf32>
    %244 = vector.shape_cast %243 : vector<8x8xf32> to vector<8x8x1xf32>
    %245 = vector.broadcast %244 : vector<8x8x1xf32> to vector<8x8x8xf32>
    %246 = arith.subf %242, %245 : vector<8x8x8xf32>
    %247 = math.exp %246 : vector<8x8x8xf32>
    %cst_66 = arith.constant dense<0.000000e+00> : vector<8x8xf32>
    %248 = vector.multi_reduction <add>, %247, %cst_66 [2] : vector<8x8x8xf32> to vector<8x8xf32>
    %249 = vector.shape_cast %248 : vector<8x8xf32> to vector<8x8x1xf32>
    %250 = tpu.reciprocal %249 {approx = true} : vector<8x8x1xf32> -> vector<8x8x1xf32>
    %251 = vector.broadcast %250 : vector<8x8x1xf32> to vector<8x8x8xf32>
    %252 = arith.mulf %247, %251 : vector<8x8x8xf32>
    %253 = arith.truncf %252 : vector<8x8x8xf32> to vector<8x8x8xbf16>
    %cst_67 = arith.constant dense<0.000000e+00> : vector<8x8x8xf32>
    %254 = tpu.matmul %253, %241, %cst_67 {dimension_numbers = #tpu.dot_dimension_numbers<[2], [1], [1], [2], [0, 0, 0, 1, 1, 2], [0], [0]>} : vector<8x8x8xbf16>, vector<8x8x8xbf16>, vector<8x8x8xf32> -> vector<8x8x8xf32>
    %255 = vector.extract_strided_slice %254 {offsets = [0, 0, 0], sizes = [2, 8, 8], strides = [1, 1, 1]} : vector<8x8x8xf32> to vector<2x8x8xf32>
    %256 = vector.shape_cast %255 : vector<2x8x8xf32> to vector<16x8xf32>
    %257 = vector.extract_strided_slice %254 {offsets = [2, 0, 0], sizes = [2, 8, 8], strides = [1, 1, 1]} : vector<8x8x8xf32> to vector<2x8x8xf32>
    %258 = vector.shape_cast %257 : vector<2x8x8xf32> to vector<16x8xf32>
    %259 = vector.extract_strided_slice %254 {offsets = [4, 0, 0], sizes = [2, 8, 8], strides = [1, 1, 1]} : vector<8x8x8xf32> to vector<2x8x8xf32>
    %260 = vector.shape_cast %259 : vector<2x8x8xf32> to vector<16x8xf32>
    %261 = vector.extract_strided_slice %254 {offsets = [6, 0, 0], sizes = [2, 8, 8], strides = [1, 1, 1]} : vector<8x8x8xf32> to vector<2x8x8xf32>
    %262 = vector.shape_cast %261 : vector<2x8x8xf32> to vector<16x8xf32>
    %263 = tpu.concatenate %256, %258, %260, %262 in 1 : vector<16x8xf32>, vector<16x8xf32>, vector<16x8xf32>, vector<16x8xf32> -> vector<16x32xf32>
    %264 = arith.truncf %263 : vector<16x32xf32> to vector<16x32xbf16>
    %cst_68 = arith.constant dense<0.000000e+00> : vector<16x32xf32>
    %265 = tpu.matmul %264, %160, %cst_68 {dimension_numbers = #tpu.dot_dimension_numbers<[1], [0], [0], [1], [0, 0, 1, 1], [], []>} : vector<16x32xbf16>, vector<32x32xbf16>, vector<16x32xf32> -> vector<16x32xf32>
    %266 = arith.addf %156, %265 : vector<16x32xf32>
    %267 = vector.shape_cast %176 : vector<32xf32> to vector<1x32xf32>
    %268 = vector.broadcast %267 : vector<1x32xf32> to vector<16x32xf32>
    %269 = arith.addf %266, %268 : vector<16x32xf32>
    %cst_69 = arith.constant dense<0.000000e+00> : vector<16xf32>
    %270 = vector.multi_reduction <add>, %269, %cst_69 [1] : vector<16x32xf32> to vector<16xf32>
    %271 = vector.shape_cast %270 : vector<16xf32> to vector<16x1xf32>
    %cst_70 = arith.constant 3.200000e+01 : f32
    %272 = vector.broadcast %cst_70 : f32 to vector<16x1xf32>
    %273 = arith.divf %271, %272 : vector<16x1xf32>
    %274 = vector.broadcast %273 : vector<16x1xf32> to vector<16x32xf32>
    %275 = arith.subf %269, %274 : vector<16x32xf32>
    %276 = arith.mulf %275, %275 : vector<16x32xf32>
    %cst_71 = arith.constant dense<0.000000e+00> : vector<16xf32>
    %277 = vector.multi_reduction <add>, %276, %cst_71 [1] : vector<16x32xf32> to vector<16xf32>
    %278 = vector.shape_cast %277 : vector<16xf32> to vector<16x1xf32>
    %cst_72 = arith.constant 3.200000e+01 : f32
    %279 = vector.broadcast %cst_72 : f32 to vector<16x1xf32>
    %280 = arith.divf %278, %279 : vector<16x1xf32>
    %281 = vector.broadcast %273 : vector<16x1xf32> to vector<16x32xf32>
    %282 = arith.subf %269, %281 : vector<16x32xf32>
    %cst_73 = arith.constant 9.99999974E-6 : f32
    %283 = vector.broadcast %cst_73 : f32 to vector<16x1xf32>
    %284 = arith.addf %280, %283 : vector<16x1xf32>
    %285 = math.rsqrt %284 : vector<16x1xf32>
    %286 = vector.broadcast %285 : vector<16x1xf32> to vector<16x32xf32>
    %287 = arith.mulf %282, %286 : vector<16x32xf32>
    %288 = vector.shape_cast %178 : vector<32xf32> to vector<1x32xf32>
    %289 = vector.broadcast %288 : vector<1x32xf32> to vector<16x32xf32>
    %290 = arith.mulf %287, %289 : vector<16x32xf32>
    %291 = vector.shape_cast %180 : vector<32xf32> to vector<1x32xf32>
    %292 = vector.broadcast %291 : vector<1x32xf32> to vector<16x32xf32>
    %293 = arith.addf %290, %292 : vector<16x32xf32>
    %294 = arith.truncf %293 : vector<16x32xf32> to vector<16x32xbf16>
    %cst_74 = arith.constant dense<0.000000e+00> : vector<16x128xf32>
    %295 = tpu.matmul %294, %162, %cst_74 {dimension_numbers = #tpu.dot_dimension_numbers<[1], [0], [0], [1], [0, 0, 1, 1], [], []>} : vector<16x32xbf16>, vector<32x128xbf16>, vector<16x128xf32> -> vector<16x128xf32>
    %296 = vector.shape_cast %170 : vector<128xf32> to vector<1x128xf32>
    %297 = vector.broadcast %296 : vector<1x128xf32> to vector<16x128xf32>
    %298 = arith.addf %295, %297 : vector<16x128xf32>
    %cst_75 = arith.constant 5.000000e-01 : f32
    %299 = vector.broadcast %cst_75 : f32 to vector<16x128xf32>
    %300 = arith.mulf %299, %298 : vector<16x128xf32>
    %cst_76 = arith.constant 0.707106769 : f32
    %301 = vector.broadcast %cst_76 : f32 to vector<16x128xf32>
    %302 = arith.mulf %298, %301 : vector<16x128xf32>
    %303 = math.erf %302 : vector<16x128xf32>
    %cst_77 = arith.constant 1.000000e+00 : f32
    %304 = vector.broadcast %cst_77 : f32 to vector<16x128xf32>
    %305 = arith.addf %304, %303 : vector<16x128xf32>
    %306 = arith.mulf %300, %305 : vector<16x128xf32>
    %307 = arith.truncf %306 : vector<16x128xf32> to vector<16x128xbf16>
    %cst_78 = arith.constant dense<0.000000e+00> : vector<16x32xf32>
    %308 = tpu.matmul %307, %164, %cst_78 {dimension_numbers = #tpu.dot_dimension_numbers<[1], [0], [0], [1], [0, 0, 1, 1], [], []>} : vector<16x128xbf16>, vector<128x32xbf16>, vector<16x32xf32> -> vector<16x32xf32>
    %309 = vector.shape_cast %182 : vector<32xf32> to vector<1x32xf32>
    %310 = vector.broadcast %309 : vector<1x32xf32> to vector<16x32xf32>
    %311 = arith.addf %308, %310 : vector<16x32xf32>
    %312 = arith.addf %269, %311 : vector<16x32xf32>
    %c2 = arith.constant 2 : index
    %c0_79 = arith.constant 0 : index
    %c0_80 = arith.constant 0 : index
    %313 = vector.load %arg2[%c2, %c0_79, %c0_80] : memref<4x32x96xbf16, #tpu.memory_space<vmem>>, vector<1x32x96xbf16>
    %314 = vector.shape_cast %313 : vector<1x32x96xbf16> to vector<32x96xbf16>
    %c2_81 = arith.constant 2 : index
    %c0_82 = arith.constant 0 : index
    %c0_83 = arith.constant 0 : index
    %315 = vector.load %arg3[%c2_81, %c0_82, %c0_83] : memref<4x32x32xbf16, #tpu.memory_space<vmem>>, vector<1x32x32xbf16>
    %316 = vector.shape_cast %315 : vector<1x32x32xbf16> to vector<32x32xbf16>
    %c2_84 = arith.constant 2 : index
    %c0_85 = arith.constant 0 : index
    %c0_86 = arith.constant 0 : index
    %317 = vector.load %arg4[%c2_84, %c0_85, %c0_86] : memref<4x32x128xbf16, #tpu.memory_space<vmem>>, vector<1x32x128xbf16>
    %318 = vector.shape_cast %317 : vector<1x32x128xbf16> to vector<32x128xbf16>
    %c2_87 = arith.constant 2 : index
    %c0_88 = arith.constant 0 : index
    %c0_89 = arith.constant 0 : index
    %319 = vector.load %arg5[%c2_87, %c0_88, %c0_89] : memref<4x128x32xbf16, #tpu.memory_space<vmem>>, vector<1x128x32xbf16>
    %320 = vector.shape_cast %319 : vector<1x128x32xbf16> to vector<128x32xbf16>
    %c2_90 = arith.constant 2 : index
    %c0_91 = arith.constant 0 : index
    %c0_92 = arith.constant 0 : index
    %321 = vector.load %arg6[%c2_90, %c0_91, %c0_92] : memref<4x6x32xf32, #tpu.memory_space<vmem>>, vector<1x6x32xf32>
    %322 = vector.shape_cast %321 : vector<1x6x32xf32> to vector<6x32xf32>
    %c2_93 = arith.constant 2 : index
    %c0_94 = arith.constant 0 : index
    %323 = vector.load %arg7[%c2_93, %c0_94] : memref<4x96xf32, #tpu.memory_space<vmem>>, vector<1x96xf32>
    %324 = vector.shape_cast %323 : vector<1x96xf32> to vector<96xf32>
    %c2_95 = arith.constant 2 : index
    %c0_96 = arith.constant 0 : index
    %325 = vector.load %arg8[%c2_95, %c0_96] : memref<4x128xf32, #tpu.memory_space<vmem>>, vector<1x128xf32>
    %326 = vector.shape_cast %325 : vector<1x128xf32> to vector<128xf32>
    %327 = vector.extract_strided_slice %322 {offsets = [0, 0], sizes = [1, 32], strides = [1, 1]} : vector<6x32xf32> to vector<1x32xf32>
    %328 = vector.shape_cast %327 : vector<1x32xf32> to vector<32xf32>
    %329 = vector.extract_strided_slice %322 {offsets = [1, 0], sizes = [1, 32], strides = [1, 1]} : vector<6x32xf32> to vector<1x32xf32>
    %330 = vector.shape_cast %329 : vector<1x32xf32> to vector<32xf32>
    %331 = vector.extract_strided_slice %322 {offsets = [2, 0], sizes = [1, 32], strides = [1, 1]} : vector<6x32xf32> to vector<1x32xf32>
    %332 = vector.shape_cast %331 : vector<1x32xf32> to vector<32xf32>
    %333 = vector.extract_strided_slice %322 {offsets = [3, 0], sizes = [1, 32], strides = [1, 1]} : vector<6x32xf32> to vector<1x32xf32>
    %334 = vector.shape_cast %333 : vector<1x32xf32> to vector<32xf32>
    %335 = vector.extract_strided_slice %322 {offsets = [4, 0], sizes = [1, 32], strides = [1, 1]} : vector<6x32xf32> to vector<1x32xf32>
    %336 = vector.shape_cast %335 : vector<1x32xf32> to vector<32xf32>
    %337 = vector.extract_strided_slice %322 {offsets = [5, 0], sizes = [1, 32], strides = [1, 1]} : vector<6x32xf32> to vector<1x32xf32>
    %338 = vector.shape_cast %337 : vector<1x32xf32> to vector<32xf32>
    %cst_97 = arith.constant dense<0.000000e+00> : vector<16xf32>
    %339 = vector.multi_reduction <add>, %312, %cst_97 [1] : vector<16x32xf32> to vector<16xf32>
    %340 = vector.shape_cast %339 : vector<16xf32> to vector<16x1xf32>
    %cst_98 = arith.constant 3.200000e+01 : f32
    %341 = vector.broadcast %cst_98 : f32 to vector<16x1xf32>
    %342 = arith.divf %340, %341 : vector<16x1xf32>
    %343 = vector.broadcast %342 : vector<16x1xf32> to vector<16x32xf32>
    %344 = arith.subf %312, %343 : vector<16x32xf32>
    %345 = arith.mulf %344, %344 : vector<16x32xf32>
    %cst_99 = arith.constant dense<0.000000e+00> : vector<16xf32>
    %346 = vector.multi_reduction <add>, %345, %cst_99 [1] : vector<16x32xf32> to vector<16xf32>
    %347 = vector.shape_cast %346 : vector<16xf32> to vector<16x1xf32>
    %cst_100 = arith.constant 3.200000e+01 : f32
    %348 = vector.broadcast %cst_100 : f32 to vector<16x1xf32>
    %349 = arith.divf %347, %348 : vector<16x1xf32>
    %350 = vector.broadcast %342 : vector<16x1xf32> to vector<16x32xf32>
    %351 = arith.subf %312, %350 : vector<16x32xf32>
    %cst_101 = arith.constant 9.99999974E-6 : f32
    %352 = vector.broadcast %cst_101 : f32 to vector<16x1xf32>
    %353 = arith.addf %349, %352 : vector<16x1xf32>
    %354 = math.rsqrt %353 : vector<16x1xf32>
    %355 = vector.broadcast %354 : vector<16x1xf32> to vector<16x32xf32>
    %356 = arith.mulf %351, %355 : vector<16x32xf32>
    %357 = vector.shape_cast %328 : vector<32xf32> to vector<1x32xf32>
    %358 = vector.broadcast %357 : vector<1x32xf32> to vector<16x32xf32>
    %359 = arith.mulf %356, %358 : vector<16x32xf32>
    %360 = vector.shape_cast %330 : vector<32xf32> to vector<1x32xf32>
    %361 = vector.broadcast %360 : vector<1x32xf32> to vector<16x32xf32>
    %362 = arith.addf %359, %361 : vector<16x32xf32>
    %363 = arith.truncf %362 : vector<16x32xf32> to vector<16x32xbf16>
    %cst_102 = arith.constant dense<0.000000e+00> : vector<16x96xf32>
    %364 = tpu.matmul %363, %314, %cst_102 {dimension_numbers = #tpu.dot_dimension_numbers<[1], [0], [0], [1], [0, 0, 1, 1], [], []>} : vector<16x32xbf16>, vector<32x96xbf16>, vector<16x96xf32> -> vector<16x96xf32>
    %365 = vector.shape_cast %324 : vector<96xf32> to vector<1x96xf32>
    %366 = vector.broadcast %365 : vector<1x96xf32> to vector<16x96xf32>
    %367 = arith.addf %364, %366 : vector<16x96xf32>
    %368 = vector.extract_strided_slice %367 {offsets = [0, 0], sizes = [16, 8], strides = [1, 1]} : vector<16x96xf32> to vector<16x8xf32>
    %369 = vector.shape_cast %368 : vector<16x8xf32> to vector<2x8x8xf32>
    %370 = vector.extract_strided_slice %367 {offsets = [0, 8], sizes = [16, 8], strides = [1, 1]} : vector<16x96xf32> to vector<16x8xf32>
    %371 = vector.shape_cast %370 : vector<16x8xf32> to vector<2x8x8xf32>
    %372 = vector.extract_strided_slice %367 {offsets = [0, 16], sizes = [16, 8], strides = [1, 1]} : vector<16x96xf32> to vector<16x8xf32>
    %373 = vector.shape_cast %372 : vector<16x8xf32> to vector<2x8x8xf32>
    %374 = vector.extract_strided_slice %367 {offsets = [0, 24], sizes = [16, 8], strides = [1, 1]} : vector<16x96xf32> to vector<16x8xf32>
    %375 = vector.shape_cast %374 : vector<16x8xf32> to vector<2x8x8xf32>
    %376 = tpu.concatenate %369, %371, %373, %375 in 0 : vector<2x8x8xf32>, vector<2x8x8xf32>, vector<2x8x8xf32>, vector<2x8x8xf32> -> vector<8x8x8xf32>
    %377 = arith.truncf %376 : vector<8x8x8xf32> to vector<8x8x8xbf16>
    %378 = vector.extract_strided_slice %367 {offsets = [0, 32], sizes = [16, 8], strides = [1, 1]} : vector<16x96xf32> to vector<16x8xf32>
    %379 = vector.shape_cast %378 : vector<16x8xf32> to vector<2x8x8xf32>
    %380 = vector.extract_strided_slice %367 {offsets = [0, 40], sizes = [16, 8], strides = [1, 1]} : vector<16x96xf32> to vector<16x8xf32>
    %381 = vector.shape_cast %380 : vector<16x8xf32> to vector<2x8x8xf32>
    %382 = vector.extract_strided_slice %367 {offsets = [0, 48], sizes = [16, 8], strides = [1, 1]} : vector<16x96xf32> to vector<16x8xf32>
    %383 = vector.shape_cast %382 : vector<16x8xf32> to vector<2x8x8xf32>
    %384 = vector.extract_strided_slice %367 {offsets = [0, 56], sizes = [16, 8], strides = [1, 1]} : vector<16x96xf32> to vector<16x8xf32>
    %385 = vector.shape_cast %384 : vector<16x8xf32> to vector<2x8x8xf32>
    %386 = tpu.concatenate %379, %381, %383, %385 in 0 : vector<2x8x8xf32>, vector<2x8x8xf32>, vector<2x8x8xf32>, vector<2x8x8xf32> -> vector<8x8x8xf32>
    %387 = arith.truncf %386 : vector<8x8x8xf32> to vector<8x8x8xbf16>
    %388 = vector.extract_strided_slice %367 {offsets = [0, 64], sizes = [16, 8], strides = [1, 1]} : vector<16x96xf32> to vector<16x8xf32>
    %389 = vector.shape_cast %388 : vector<16x8xf32> to vector<2x8x8xf32>
    %390 = vector.extract_strided_slice %367 {offsets = [0, 72], sizes = [16, 8], strides = [1, 1]} : vector<16x96xf32> to vector<16x8xf32>
    %391 = vector.shape_cast %390 : vector<16x8xf32> to vector<2x8x8xf32>
    %392 = vector.extract_strided_slice %367 {offsets = [0, 80], sizes = [16, 8], strides = [1, 1]} : vector<16x96xf32> to vector<16x8xf32>
    %393 = vector.shape_cast %392 : vector<16x8xf32> to vector<2x8x8xf32>
    %394 = vector.extract_strided_slice %367 {offsets = [0, 88], sizes = [16, 8], strides = [1, 1]} : vector<16x96xf32> to vector<16x8xf32>
    %395 = vector.shape_cast %394 : vector<16x8xf32> to vector<2x8x8xf32>
    %396 = tpu.concatenate %389, %391, %393, %395 in 0 : vector<2x8x8xf32>, vector<2x8x8xf32>, vector<2x8x8xf32>, vector<2x8x8xf32> -> vector<8x8x8xf32>
    %397 = arith.truncf %396 : vector<8x8x8xf32> to vector<8x8x8xbf16>
    %cst_103 = arith.constant dense<0.000000e+00> : vector<8x8x8xf32>
    %398 = tpu.matmul %377, %387, %cst_103 {dimension_numbers = #tpu.dot_dimension_numbers<[2], [2], [1], [1], [0, 0, 0, 1, 1, 1], [0], [0]>} : vector<8x8x8xbf16>, vector<8x8x8xbf16>, vector<8x8x8xf32> -> vector<8x8x8xf32>
    %cst_104 = arith.constant dense<0xFF800000> : vector<8x8xf32>
    %399 = vector.multi_reduction <maximumf>, %398, %cst_104 [2] : vector<8x8x8xf32> to vector<8x8xf32>
    %400 = vector.shape_cast %399 : vector<8x8xf32> to vector<8x8x1xf32>
    %401 = vector.broadcast %400 : vector<8x8x1xf32> to vector<8x8x8xf32>
    %402 = arith.subf %398, %401 : vector<8x8x8xf32>
    %403 = math.exp %402 : vector<8x8x8xf32>
    %cst_105 = arith.constant dense<0.000000e+00> : vector<8x8xf32>
    %404 = vector.multi_reduction <add>, %403, %cst_105 [2] : vector<8x8x8xf32> to vector<8x8xf32>
    %405 = vector.shape_cast %404 : vector<8x8xf32> to vector<8x8x1xf32>
    %406 = tpu.reciprocal %405 {approx = true} : vector<8x8x1xf32> -> vector<8x8x1xf32>
    %407 = vector.broadcast %406 : vector<8x8x1xf32> to vector<8x8x8xf32>
    %408 = arith.mulf %403, %407 : vector<8x8x8xf32>
    %409 = arith.truncf %408 : vector<8x8x8xf32> to vector<8x8x8xbf16>
    %cst_106 = arith.constant dense<0.000000e+00> : vector<8x8x8xf32>
    %410 = tpu.matmul %409, %397, %cst_106 {dimension_numbers = #tpu.dot_dimension_numbers<[2], [1], [1], [2], [0, 0, 0, 1, 1, 2], [0], [0]>} : vector<8x8x8xbf16>, vector<8x8x8xbf16>, vector<8x8x8xf32> -> vector<8x8x8xf32>
    %411 = vector.extract_strided_slice %410 {offsets = [0, 0, 0], sizes = [2, 8, 8], strides = [1, 1, 1]} : vector<8x8x8xf32> to vector<2x8x8xf32>
    %412 = vector.shape_cast %411 : vector<2x8x8xf32> to vector<16x8xf32>
    %413 = vector.extract_strided_slice %410 {offsets = [2, 0, 0], sizes = [2, 8, 8], strides = [1, 1, 1]} : vector<8x8x8xf32> to vector<2x8x8xf32>
    %414 = vector.shape_cast %413 : vector<2x8x8xf32> to vector<16x8xf32>
    %415 = vector.extract_strided_slice %410 {offsets = [4, 0, 0], sizes = [2, 8, 8], strides = [1, 1, 1]} : vector<8x8x8xf32> to vector<2x8x8xf32>
    %416 = vector.shape_cast %415 : vector<2x8x8xf32> to vector<16x8xf32>
    %417 = vector.extract_strided_slice %410 {offsets = [6, 0, 0], sizes = [2, 8, 8], strides = [1, 1, 1]} : vector<8x8x8xf32> to vector<2x8x8xf32>
    %418 = vector.shape_cast %417 : vector<2x8x8xf32> to vector<16x8xf32>
    %419 = tpu.concatenate %412, %414, %416, %418 in 1 : vector<16x8xf32>, vector<16x8xf32>, vector<16x8xf32>, vector<16x8xf32> -> vector<16x32xf32>
    %420 = arith.truncf %419 : vector<16x32xf32> to vector<16x32xbf16>
    %cst_107 = arith.constant dense<0.000000e+00> : vector<16x32xf32>
    %421 = tpu.matmul %420, %316, %cst_107 {dimension_numbers = #tpu.dot_dimension_numbers<[1], [0], [0], [1], [0, 0, 1, 1], [], []>} : vector<16x32xbf16>, vector<32x32xbf16>, vector<16x32xf32> -> vector<16x32xf32>
    %422 = arith.addf %312, %421 : vector<16x32xf32>
    %423 = vector.shape_cast %332 : vector<32xf32> to vector<1x32xf32>
    %424 = vector.broadcast %423 : vector<1x32xf32> to vector<16x32xf32>
    %425 = arith.addf %422, %424 : vector<16x32xf32>
    %cst_108 = arith.constant dense<0.000000e+00> : vector<16xf32>
    %426 = vector.multi_reduction <add>, %425, %cst_108 [1] : vector<16x32xf32> to vector<16xf32>
    %427 = vector.shape_cast %426 : vector<16xf32> to vector<16x1xf32>
    %cst_109 = arith.constant 3.200000e+01 : f32
    %428 = vector.broadcast %cst_109 : f32 to vector<16x1xf32>
    %429 = arith.divf %427, %428 : vector<16x1xf32>
    %430 = vector.broadcast %429 : vector<16x1xf32> to vector<16x32xf32>
    %431 = arith.subf %425, %430 : vector<16x32xf32>
    %432 = arith.mulf %431, %431 : vector<16x32xf32>
    %cst_110 = arith.constant dense<0.000000e+00> : vector<16xf32>
    %433 = vector.multi_reduction <add>, %432, %cst_110 [1] : vector<16x32xf32> to vector<16xf32>
    %434 = vector.shape_cast %433 : vector<16xf32> to vector<16x1xf32>
    %cst_111 = arith.constant 3.200000e+01 : f32
    %435 = vector.broadcast %cst_111 : f32 to vector<16x1xf32>
    %436 = arith.divf %434, %435 : vector<16x1xf32>
    %437 = vector.broadcast %429 : vector<16x1xf32> to vector<16x32xf32>
    %438 = arith.subf %425, %437 : vector<16x32xf32>
    %cst_112 = arith.constant 9.99999974E-6 : f32
    %439 = vector.broadcast %cst_112 : f32 to vector<16x1xf32>
    %440 = arith.addf %436, %439 : vector<16x1xf32>
    %441 = math.rsqrt %440 : vector<16x1xf32>
    %442 = vector.broadcast %441 : vector<16x1xf32> to vector<16x32xf32>
    %443 = arith.mulf %438, %442 : vector<16x32xf32>
    %444 = vector.shape_cast %334 : vector<32xf32> to vector<1x32xf32>
    %445 = vector.broadcast %444 : vector<1x32xf32> to vector<16x32xf32>
    %446 = arith.mulf %443, %445 : vector<16x32xf32>
    %447 = vector.shape_cast %336 : vector<32xf32> to vector<1x32xf32>
    %448 = vector.broadcast %447 : vector<1x32xf32> to vector<16x32xf32>
    %449 = arith.addf %446, %448 : vector<16x32xf32>
    %450 = arith.truncf %449 : vector<16x32xf32> to vector<16x32xbf16>
    %cst_113 = arith.constant dense<0.000000e+00> : vector<16x128xf32>
    %451 = tpu.matmul %450, %318, %cst_113 {dimension_numbers = #tpu.dot_dimension_numbers<[1], [0], [0], [1], [0, 0, 1, 1], [], []>} : vector<16x32xbf16>, vector<32x128xbf16>, vector<16x128xf32> -> vector<16x128xf32>
    %452 = vector.shape_cast %326 : vector<128xf32> to vector<1x128xf32>
    %453 = vector.broadcast %452 : vector<1x128xf32> to vector<16x128xf32>
    %454 = arith.addf %451, %453 : vector<16x128xf32>
    %cst_114 = arith.constant 5.000000e-01 : f32
    %455 = vector.broadcast %cst_114 : f32 to vector<16x128xf32>
    %456 = arith.mulf %455, %454 : vector<16x128xf32>
    %cst_115 = arith.constant 0.707106769 : f32
    %457 = vector.broadcast %cst_115 : f32 to vector<16x128xf32>
    %458 = arith.mulf %454, %457 : vector<16x128xf32>
    %459 = math.erf %458 : vector<16x128xf32>
    %cst_116 = arith.constant 1.000000e+00 : f32
    %460 = vector.broadcast %cst_116 : f32 to vector<16x128xf32>
    %461 = arith.addf %460, %459 : vector<16x128xf32>
    %462 = arith.mulf %456, %461 : vector<16x128xf32>
    %463 = arith.truncf %462 : vector<16x128xf32> to vector<16x128xbf16>
    %cst_117 = arith.constant dense<0.000000e+00> : vector<16x32xf32>
    %464 = tpu.matmul %463, %320, %cst_117 {dimension_numbers = #tpu.dot_dimension_numbers<[1], [0], [0], [1], [0, 0, 1, 1], [], []>} : vector<16x128xbf16>, vector<128x32xbf16>, vector<16x32xf32> -> vector<16x32xf32>
    %465 = vector.shape_cast %338 : vector<32xf32> to vector<1x32xf32>
    %466 = vector.broadcast %465 : vector<1x32xf32> to vector<16x32xf32>
    %467 = arith.addf %464, %466 : vector<16x32xf32>
    %468 = arith.addf %425, %467 : vector<16x32xf32>
    %c3 = arith.constant 3 : index
    %c0_118 = arith.constant 0 : index
    %c0_119 = arith.constant 0 : index
    %469 = vector.load %arg2[%c3, %c0_118, %c0_119] : memref<4x32x96xbf16, #tpu.memory_space<vmem>>, vector<1x32x96xbf16>
    %470 = vector.shape_cast %469 : vector<1x32x96xbf16> to vector<32x96xbf16>
    %c3_120 = arith.constant 3 : index
    %c0_121 = arith.constant 0 : index
    %c0_122 = arith.constant 0 : index
    %471 = vector.load %arg3[%c3_120, %c0_121, %c0_122] : memref<4x32x32xbf16, #tpu.memory_space<vmem>>, vector<1x32x32xbf16>
    %472 = vector.shape_cast %471 : vector<1x32x32xbf16> to vector<32x32xbf16>
    %c3_123 = arith.constant 3 : index
    %c0_124 = arith.constant 0 : index
    %c0_125 = arith.constant 0 : index
    %473 = vector.load %arg4[%c3_123, %c0_124, %c0_125] : memref<4x32x128xbf16, #tpu.memory_space<vmem>>, vector<1x32x128xbf16>
    %474 = vector.shape_cast %473 : vector<1x32x128xbf16> to vector<32x128xbf16>
    %c3_126 = arith.constant 3 : index
    %c0_127 = arith.constant 0 : index
    %c0_128 = arith.constant 0 : index
    %475 = vector.load %arg5[%c3_126, %c0_127, %c0_128] : memref<4x128x32xbf16, #tpu.memory_space<vmem>>, vector<1x128x32xbf16>
    %476 = vector.shape_cast %475 : vector<1x128x32xbf16> to vector<128x32xbf16>
    %c3_129 = arith.constant 3 : index
    %c0_130 = arith.constant 0 : index
    %c0_131 = arith.constant 0 : index
    %477 = vector.load %arg6[%c3_129, %c0_130, %c0_131] : memref<4x6x32xf32, #tpu.memory_space<vmem>>, vector<1x6x32xf32>
    %478 = vector.shape_cast %477 : vector<1x6x32xf32> to vector<6x32xf32>
    %c3_132 = arith.constant 3 : index
    %c0_133 = arith.constant 0 : index
    %479 = vector.load %arg7[%c3_132, %c0_133] : memref<4x96xf32, #tpu.memory_space<vmem>>, vector<1x96xf32>
    %480 = vector.shape_cast %479 : vector<1x96xf32> to vector<96xf32>
    %c3_134 = arith.constant 3 : index
    %c0_135 = arith.constant 0 : index
    %481 = vector.load %arg8[%c3_134, %c0_135] : memref<4x128xf32, #tpu.memory_space<vmem>>, vector<1x128xf32>
    %482 = vector.shape_cast %481 : vector<1x128xf32> to vector<128xf32>
    %483 = vector.extract_strided_slice %478 {offsets = [0, 0], sizes = [1, 32], strides = [1, 1]} : vector<6x32xf32> to vector<1x32xf32>
    %484 = vector.shape_cast %483 : vector<1x32xf32> to vector<32xf32>
    %485 = vector.extract_strided_slice %478 {offsets = [1, 0], sizes = [1, 32], strides = [1, 1]} : vector<6x32xf32> to vector<1x32xf32>
    %486 = vector.shape_cast %485 : vector<1x32xf32> to vector<32xf32>
    %487 = vector.extract_strided_slice %478 {offsets = [2, 0], sizes = [1, 32], strides = [1, 1]} : vector<6x32xf32> to vector<1x32xf32>
    %488 = vector.shape_cast %487 : vector<1x32xf32> to vector<32xf32>
    %489 = vector.extract_strided_slice %478 {offsets = [3, 0], sizes = [1, 32], strides = [1, 1]} : vector<6x32xf32> to vector<1x32xf32>
    %490 = vector.shape_cast %489 : vector<1x32xf32> to vector<32xf32>
    %491 = vector.extract_strided_slice %478 {offsets = [4, 0], sizes = [1, 32], strides = [1, 1]} : vector<6x32xf32> to vector<1x32xf32>
    %492 = vector.shape_cast %491 : vector<1x32xf32> to vector<32xf32>
    %493 = vector.extract_strided_slice %478 {offsets = [5, 0], sizes = [1, 32], strides = [1, 1]} : vector<6x32xf32> to vector<1x32xf32>
    %494 = vector.shape_cast %493 : vector<1x32xf32> to vector<32xf32>
    %cst_136 = arith.constant dense<0.000000e+00> : vector<16xf32>
    %495 = vector.multi_reduction <add>, %468, %cst_136 [1] : vector<16x32xf32> to vector<16xf32>
    %496 = vector.shape_cast %495 : vector<16xf32> to vector<16x1xf32>
    %cst_137 = arith.constant 3.200000e+01 : f32
    %497 = vector.broadcast %cst_137 : f32 to vector<16x1xf32>
    %498 = arith.divf %496, %497 : vector<16x1xf32>
    %499 = vector.broadcast %498 : vector<16x1xf32> to vector<16x32xf32>
    %500 = arith.subf %468, %499 : vector<16x32xf32>
    %501 = arith.mulf %500, %500 : vector<16x32xf32>
    %cst_138 = arith.constant dense<0.000000e+00> : vector<16xf32>
    %502 = vector.multi_reduction <add>, %501, %cst_138 [1] : vector<16x32xf32> to vector<16xf32>
    %503 = vector.shape_cast %502 : vector<16xf32> to vector<16x1xf32>
    %cst_139 = arith.constant 3.200000e+01 : f32
    %504 = vector.broadcast %cst_139 : f32 to vector<16x1xf32>
    %505 = arith.divf %503, %504 : vector<16x1xf32>
    %506 = vector.broadcast %498 : vector<16x1xf32> to vector<16x32xf32>
    %507 = arith.subf %468, %506 : vector<16x32xf32>
    %cst_140 = arith.constant 9.99999974E-6 : f32
    %508 = vector.broadcast %cst_140 : f32 to vector<16x1xf32>
    %509 = arith.addf %505, %508 : vector<16x1xf32>
    %510 = math.rsqrt %509 : vector<16x1xf32>
    %511 = vector.broadcast %510 : vector<16x1xf32> to vector<16x32xf32>
    %512 = arith.mulf %507, %511 : vector<16x32xf32>
    %513 = vector.shape_cast %484 : vector<32xf32> to vector<1x32xf32>
    %514 = vector.broadcast %513 : vector<1x32xf32> to vector<16x32xf32>
    %515 = arith.mulf %512, %514 : vector<16x32xf32>
    %516 = vector.shape_cast %486 : vector<32xf32> to vector<1x32xf32>
    %517 = vector.broadcast %516 : vector<1x32xf32> to vector<16x32xf32>
    %518 = arith.addf %515, %517 : vector<16x32xf32>
    %519 = arith.truncf %518 : vector<16x32xf32> to vector<16x32xbf16>
    %cst_141 = arith.constant dense<0.000000e+00> : vector<16x96xf32>
    %520 = tpu.matmul %519, %470, %cst_141 {dimension_numbers = #tpu.dot_dimension_numbers<[1], [0], [0], [1], [0, 0, 1, 1], [], []>} : vector<16x32xbf16>, vector<32x96xbf16>, vector<16x96xf32> -> vector<16x96xf32>
    %521 = vector.shape_cast %480 : vector<96xf32> to vector<1x96xf32>
    %522 = vector.broadcast %521 : vector<1x96xf32> to vector<16x96xf32>
    %523 = arith.addf %520, %522 : vector<16x96xf32>
    %524 = vector.extract_strided_slice %523 {offsets = [0, 0], sizes = [16, 8], strides = [1, 1]} : vector<16x96xf32> to vector<16x8xf32>
    %525 = vector.shape_cast %524 : vector<16x8xf32> to vector<2x8x8xf32>
    %526 = vector.extract_strided_slice %523 {offsets = [0, 8], sizes = [16, 8], strides = [1, 1]} : vector<16x96xf32> to vector<16x8xf32>
    %527 = vector.shape_cast %526 : vector<16x8xf32> to vector<2x8x8xf32>
    %528 = vector.extract_strided_slice %523 {offsets = [0, 16], sizes = [16, 8], strides = [1, 1]} : vector<16x96xf32> to vector<16x8xf32>
    %529 = vector.shape_cast %528 : vector<16x8xf32> to vector<2x8x8xf32>
    %530 = vector.extract_strided_slice %523 {offsets = [0, 24], sizes = [16, 8], strides = [1, 1]} : vector<16x96xf32> to vector<16x8xf32>
    %531 = vector.shape_cast %530 : vector<16x8xf32> to vector<2x8x8xf32>
    %532 = tpu.concatenate %525, %527, %529, %531 in 0 : vector<2x8x8xf32>, vector<2x8x8xf32>, vector<2x8x8xf32>, vector<2x8x8xf32> -> vector<8x8x8xf32>
    %533 = arith.truncf %532 : vector<8x8x8xf32> to vector<8x8x8xbf16>
    %534 = vector.extract_strided_slice %523 {offsets = [0, 32], sizes = [16, 8], strides = [1, 1]} : vector<16x96xf32> to vector<16x8xf32>
    %535 = vector.shape_cast %534 : vector<16x8xf32> to vector<2x8x8xf32>
    %536 = vector.extract_strided_slice %523 {offsets = [0, 40], sizes = [16, 8], strides = [1, 1]} : vector<16x96xf32> to vector<16x8xf32>
    %537 = vector.shape_cast %536 : vector<16x8xf32> to vector<2x8x8xf32>
    %538 = vector.extract_strided_slice %523 {offsets = [0, 48], sizes = [16, 8], strides = [1, 1]} : vector<16x96xf32> to vector<16x8xf32>
    %539 = vector.shape_cast %538 : vector<16x8xf32> to vector<2x8x8xf32>
    %540 = vector.extract_strided_slice %523 {offsets = [0, 56], sizes = [16, 8], strides = [1, 1]} : vector<16x96xf32> to vector<16x8xf32>
    %541 = vector.shape_cast %540 : vector<16x8xf32> to vector<2x8x8xf32>
    %542 = tpu.concatenate %535, %537, %539, %541 in 0 : vector<2x8x8xf32>, vector<2x8x8xf32>, vector<2x8x8xf32>, vector<2x8x8xf32> -> vector<8x8x8xf32>
    %543 = arith.truncf %542 : vector<8x8x8xf32> to vector<8x8x8xbf16>
    %544 = vector.extract_strided_slice %523 {offsets = [0, 64], sizes = [16, 8], strides = [1, 1]} : vector<16x96xf32> to vector<16x8xf32>
    %545 = vector.shape_cast %544 : vector<16x8xf32> to vector<2x8x8xf32>
    %546 = vector.extract_strided_slice %523 {offsets = [0, 72], sizes = [16, 8], strides = [1, 1]} : vector<16x96xf32> to vector<16x8xf32>
    %547 = vector.shape_cast %546 : vector<16x8xf32> to vector<2x8x8xf32>
    %548 = vector.extract_strided_slice %523 {offsets = [0, 80], sizes = [16, 8], strides = [1, 1]} : vector<16x96xf32> to vector<16x8xf32>
    %549 = vector.shape_cast %548 : vector<16x8xf32> to vector<2x8x8xf32>
    %550 = vector.extract_strided_slice %523 {offsets = [0, 88], sizes = [16, 8], strides = [1, 1]} : vector<16x96xf32> to vector<16x8xf32>
    %551 = vector.shape_cast %550 : vector<16x8xf32> to vector<2x8x8xf32>
    %552 = tpu.concatenate %545, %547, %549, %551 in 0 : vector<2x8x8xf32>, vector<2x8x8xf32>, vector<2x8x8xf32>, vector<2x8x8xf32> -> vector<8x8x8xf32>
    %553 = arith.truncf %552 : vector<8x8x8xf32> to vector<8x8x8xbf16>
    %cst_142 = arith.constant dense<0.000000e+00> : vector<8x8x8xf32>
    %554 = tpu.matmul %533, %543, %cst_142 {dimension_numbers = #tpu.dot_dimension_numbers<[2], [2], [1], [1], [0, 0, 0, 1, 1, 1], [0], [0]>} : vector<8x8x8xbf16>, vector<8x8x8xbf16>, vector<8x8x8xf32> -> vector<8x8x8xf32>
    %cst_143 = arith.constant dense<0xFF800000> : vector<8x8xf32>
    %555 = vector.multi_reduction <maximumf>, %554, %cst_143 [2] : vector<8x8x8xf32> to vector<8x8xf32>
    %556 = vector.shape_cast %555 : vector<8x8xf32> to vector<8x8x1xf32>
    %557 = vector.broadcast %556 : vector<8x8x1xf32> to vector<8x8x8xf32>
    %558 = arith.subf %554, %557 : vector<8x8x8xf32>
    %559 = math.exp %558 : vector<8x8x8xf32>
    %cst_144 = arith.constant dense<0.000000e+00> : vector<8x8xf32>
    %560 = vector.multi_reduction <add>, %559, %cst_144 [2] : vector<8x8x8xf32> to vector<8x8xf32>
    %561 = vector.shape_cast %560 : vector<8x8xf32> to vector<8x8x1xf32>
    %562 = tpu.reciprocal %561 {approx = true} : vector<8x8x1xf32> -> vector<8x8x1xf32>
    %563 = vector.broadcast %562 : vector<8x8x1xf32> to vector<8x8x8xf32>
    %564 = arith.mulf %559, %563 : vector<8x8x8xf32>
    %565 = arith.truncf %564 : vector<8x8x8xf32> to vector<8x8x8xbf16>
    %cst_145 = arith.constant dense<0.000000e+00> : vector<8x8x8xf32>
    %566 = tpu.matmul %565, %553, %cst_145 {dimension_numbers = #tpu.dot_dimension_numbers<[2], [1], [1], [2], [0, 0, 0, 1, 1, 2], [0], [0]>} : vector<8x8x8xbf16>, vector<8x8x8xbf16>, vector<8x8x8xf32> -> vector<8x8x8xf32>
    %567 = vector.extract_strided_slice %566 {offsets = [0, 0, 0], sizes = [2, 8, 8], strides = [1, 1, 1]} : vector<8x8x8xf32> to vector<2x8x8xf32>
    %568 = vector.shape_cast %567 : vector<2x8x8xf32> to vector<16x8xf32>
    %569 = vector.extract_strided_slice %566 {offsets = [2, 0, 0], sizes = [2, 8, 8], strides = [1, 1, 1]} : vector<8x8x8xf32> to vector<2x8x8xf32>
    %570 = vector.shape_cast %569 : vector<2x8x8xf32> to vector<16x8xf32>
    %571 = vector.extract_strided_slice %566 {offsets = [4, 0, 0], sizes = [2, 8, 8], strides = [1, 1, 1]} : vector<8x8x8xf32> to vector<2x8x8xf32>
    %572 = vector.shape_cast %571 : vector<2x8x8xf32> to vector<16x8xf32>
    %573 = vector.extract_strided_slice %566 {offsets = [6, 0, 0], sizes = [2, 8, 8], strides = [1, 1, 1]} : vector<8x8x8xf32> to vector<2x8x8xf32>
    %574 = vector.shape_cast %573 : vector<2x8x8xf32> to vector<16x8xf32>
    %575 = tpu.concatenate %568, %570, %572, %574 in 1 : vector<16x8xf32>, vector<16x8xf32>, vector<16x8xf32>, vector<16x8xf32> -> vector<16x32xf32>
    %576 = arith.truncf %575 : vector<16x32xf32> to vector<16x32xbf16>
    %cst_146 = arith.constant dense<0.000000e+00> : vector<16x32xf32>
    %577 = tpu.matmul %576, %472, %cst_146 {dimension_numbers = #tpu.dot_dimension_numbers<[1], [0], [0], [1], [0, 0, 1, 1], [], []>} : vector<16x32xbf16>, vector<32x32xbf16>, vector<16x32xf32> -> vector<16x32xf32>
    %578 = arith.addf %468, %577 : vector<16x32xf32>
    %579 = vector.shape_cast %488 : vector<32xf32> to vector<1x32xf32>
    %580 = vector.broadcast %579 : vector<1x32xf32> to vector<16x32xf32>
    %581 = arith.addf %578, %580 : vector<16x32xf32>
    %cst_147 = arith.constant dense<0.000000e+00> : vector<16xf32>
    %582 = vector.multi_reduction <add>, %581, %cst_147 [1] : vector<16x32xf32> to vector<16xf32>
    %583 = vector.shape_cast %582 : vector<16xf32> to vector<16x1xf32>
    %cst_148 = arith.constant 3.200000e+01 : f32
    %584 = vector.broadcast %cst_148 : f32 to vector<16x1xf32>
    %585 = arith.divf %583, %584 : vector<16x1xf32>
    %586 = vector.broadcast %585 : vector<16x1xf32> to vector<16x32xf32>
    %587 = arith.subf %581, %586 : vector<16x32xf32>
    %588 = arith.mulf %587, %587 : vector<16x32xf32>
    %cst_149 = arith.constant dense<0.000000e+00> : vector<16xf32>
    %589 = vector.multi_reduction <add>, %588, %cst_149 [1] : vector<16x32xf32> to vector<16xf32>
    %590 = vector.shape_cast %589 : vector<16xf32> to vector<16x1xf32>
    %cst_150 = arith.constant 3.200000e+01 : f32
    %591 = vector.broadcast %cst_150 : f32 to vector<16x1xf32>
    %592 = arith.divf %590, %591 : vector<16x1xf32>
    %593 = vector.broadcast %585 : vector<16x1xf32> to vector<16x32xf32>
    %594 = arith.subf %581, %593 : vector<16x32xf32>
    %cst_151 = arith.constant 9.99999974E-6 : f32
    %595 = vector.broadcast %cst_151 : f32 to vector<16x1xf32>
    %596 = arith.addf %592, %595 : vector<16x1xf32>
    %597 = math.rsqrt %596 : vector<16x1xf32>
    %598 = vector.broadcast %597 : vector<16x1xf32> to vector<16x32xf32>
    %599 = arith.mulf %594, %598 : vector<16x32xf32>
    %600 = vector.shape_cast %490 : vector<32xf32> to vector<1x32xf32>
    %601 = vector.broadcast %600 : vector<1x32xf32> to vector<16x32xf32>
    %602 = arith.mulf %599, %601 : vector<16x32xf32>
    %603 = vector.shape_cast %492 : vector<32xf32> to vector<1x32xf32>
    %604 = vector.broadcast %603 : vector<1x32xf32> to vector<16x32xf32>
    %605 = arith.addf %602, %604 : vector<16x32xf32>
    %606 = arith.truncf %605 : vector<16x32xf32> to vector<16x32xbf16>
    %cst_152 = arith.constant dense<0.000000e+00> : vector<16x128xf32>
    %607 = tpu.matmul %606, %474, %cst_152 {dimension_numbers = #tpu.dot_dimension_numbers<[1], [0], [0], [1], [0, 0, 1, 1], [], []>} : vector<16x32xbf16>, vector<32x128xbf16>, vector<16x128xf32> -> vector<16x128xf32>
    %608 = vector.shape_cast %482 : vector<128xf32> to vector<1x128xf32>
    %609 = vector.broadcast %608 : vector<1x128xf32> to vector<16x128xf32>
    %610 = arith.addf %607, %609 : vector<16x128xf32>
    %cst_153 = arith.constant 5.000000e-01 : f32
    %611 = vector.broadcast %cst_153 : f32 to vector<16x128xf32>
    %612 = arith.mulf %611, %610 : vector<16x128xf32>
    %cst_154 = arith.constant 0.707106769 : f32
    %613 = vector.broadcast %cst_154 : f32 to vector<16x128xf32>
    %614 = arith.mulf %610, %613 : vector<16x128xf32>
    %615 = math.erf %614 : vector<16x128xf32>
    %cst_155 = arith.constant 1.000000e+00 : f32
    %616 = vector.broadcast %cst_155 : f32 to vector<16x128xf32>
    %617 = arith.addf %616, %615 : vector<16x128xf32>
    %618 = arith.mulf %612, %617 : vector<16x128xf32>
    %619 = arith.truncf %618 : vector<16x128xf32> to vector<16x128xbf16>
    %cst_156 = arith.constant dense<0.000000e+00> : vector<16x32xf32>
    %620 = tpu.matmul %619, %476, %cst_156 {dimension_numbers = #tpu.dot_dimension_numbers<[1], [0], [0], [1], [0, 0, 1, 1], [], []>} : vector<16x128xbf16>, vector<128x32xbf16>, vector<16x32xf32> -> vector<16x32xf32>
    %621 = vector.shape_cast %494 : vector<32xf32> to vector<1x32xf32>
    %622 = vector.broadcast %621 : vector<1x32xf32> to vector<16x32xf32>
    %623 = arith.addf %620, %622 : vector<16x32xf32>
    %624 = arith.addf %581, %623 : vector<16x32xf32>
    %c0_157 = arith.constant 0 : index
    %c0_158 = arith.constant 0 : index
    %625 = vector.load %arg9[%c0_157, %c0_158] : memref<16x32xf32, #tpu.memory_space<vmem>>, vector<16x32xf32>
    tpu.vector_store %arg9[%c0_157, %c0_158], %624 {strides = array<i32>} : memref<16x32xf32, #tpu.memory_space<vmem>>, vector<16x32xf32>,
    return
  }
  func.func @transform_0(%arg0: i32) -> (i32, i32) {
    %c0_i32 = arith.constant 0 : i32
    %c0_i32_0 = arith.constant 0 : i32
    %c0_i32_1 = arith.constant 0 : i32
    return %c0_i32, %c0_i32_0 : i32, i32
  }
  func.func @transform_1(%arg0: i32) -> (i32, i32, i32) {
    %c0_i32 = arith.constant 0 : i32
    %c0_i32_0 = arith.constant 0 : i32
    %c0_i32_1 = arith.constant 0 : i32
    %c0_i32_2 = arith.constant 0 : i32
    return %c0_i32, %c0_i32_0, %c0_i32_1 : i32, i32, i32
  }
  func.func @transform_2(%arg0: i32) -> (i32, i32, i32) {
    %c0_i32 = arith.constant 0 : i32
    %c0_i32_0 = arith.constant 0 : i32
    %c0_i32_1 = arith.constant 0 : i32
    %c0_i32_2 = arith.constant 0 : i32
    return %c0_i32, %c0_i32_0, %c0_i32_1 : i32, i32, i32
  }
  func.func @transform_3(%arg0: i32) -> (i32, i32, i32) {
    %c0_i32 = arith.constant 0 : i32
    %c0_i32_0 = arith.constant 0 : i32
    %c0_i32_1 = arith.constant 0 : i32
    %c0_i32_2 = arith.constant 0 : i32
    return %c0_i32, %c0_i32_0, %c0_i32_1 : i32, i32, i32
  }
  func.func @transform_4(%arg0: i32) -> (i32, i32, i32) {
    %c0_i32 = arith.constant 0 : i32
    %c0_i32_0 = arith.constant 0 : i32
    %c0_i32_1 = arith.constant 0 : i32
    %c0_i32_2 = arith.constant 0 : i32
    return %c0_i32, %c0_i32_0, %c0_i32_1 : i32, i32, i32
  }
  func.func @transform_5(%arg0: i32) -> (i32, i32, i32) {
    %c0_i32 = arith.constant 0 : i32
    %c0_i32_0 = arith.constant 0 : i32
    %c0_i32_1 = arith.constant 0 : i32
    %c0_i32_2 = arith.constant 0 : i32
    return %c0_i32, %c0_i32_0, %c0_i32_1 : i32, i32, i32
  }
  func.func @transform_6(%arg0: i32) -> (i32, i32) {
    %c0_i32 = arith.constant 0 : i32
    %c0_i32_0 = arith.constant 0 : i32
    %c0_i32_1 = arith.constant 0 : i32
    return %c0_i32, %c0_i32_0 : i32, i32
  }
  func.func @transform_7(%arg0: i32) -> (i32, i32) {
    %c0_i32 = arith.constant 0 : i32
    %c0_i32_0 = arith.constant 0 : i32
    %c0_i32_1 = arith.constant 0 : i32
    return %c0_i32, %c0_i32_0 : i32, i32
  }
  func.func @transform_8(%arg0: i32) -> (i32, i32) {
    %c0_i32 = arith.constant 0 : i32
    %c0_i32_0 = arith.constant 0 : i32
    %c0_i32_1 = arith.constant 0 : i32
    return %c0_i32, %c0_i32_0 : i32, i32
  }
}

</mosaic_0001>

<llo_original>
// kernel: bert_forward_pallas.1
$region0: #{bert_forward_pallas.1}
  #allocation0 [shape = 'u32[]', space=smem, size = 0x4, offset = 0x4, fixed_abs, tag = 'smem constant byte address 0x4 - core index']
  #allocation1 [shape = 'u32[144,128]{1,0:T(1,128)}', space=vmem, size = 0x12000, scoped, tag = 'internal scratch']
  %s0 = inlined_call_operand.vmem [shape: f32[16,32], index: 0, kind: input, shape index: {}]
  %s1 = inlined_call_operand.vmem [shape: bf16[4,32,96], index: 1, kind: input, shape index: {}]
  %s2 = inlined_call_operand.vmem [shape: bf16[4,32,32], index: 2, kind: input, shape index: {}]
  %s3 = inlined_call_operand.vmem [shape: bf16[4,32,128], index: 3, kind: input, shape index: {}]
  %s4 = inlined_call_operand.vmem [shape: bf16[4,128,32], index: 4, kind: input, shape index: {}]
  %s5 = inlined_call_operand.vmem [shape: f32[4,6,32], index: 5, kind: input, shape index: {}]
  %s6 = inlined_call_operand.vmem [shape: f32[4,96], index: 6, kind: input, shape index: {}]
  %s7 = inlined_call_operand.vmem [shape: f32[4,128], index: 7, kind: input, shape index: {}]
  %s8 = inlined_call_operand.hbm [shape: f32[16,32], index: 8, kind: output, shape index: {}]
  %s9 = sld [smem:[#allocation0]]
  $region42: #{bert_forward_pallas.1} parent=0
    _
  %s11 = ssub.s32 1, %s9
  %s12 = scalar_select 0, %s11, %s9
  $region1: #{bert_forward_pallas.1} parent=0
    #allocation2 [shape = 'u8[8192]{0}', space=vmem, size = 0x2000, scoped, tag = 'output window, operand 0, single buffered']
    #allocation3 [shape = 's32[1]{0}', space=sflag, size = 0x4, scoped, tag = 'scoped memory for bert_forward_pallas.1']
    %13 = vsyncpa [#allocation3], 0
    // Predicated region
    $region2: #{bert_forward_pallas.1} parent=1 // pred_check
      _
    $region3: #{bert_forward_pallas.1} parent=1 // pred_check_branch
      %15 = sbr.rel (0) target = $region5
    $region4: #{bert_forward_pallas.1} parent=1 // pred_region
      _
    $region5: #{bert_forward_pallas.1} parent=1 // pred_fallthru
      _
    // Predicated region
    $region6: #{bert_forward_pallas.1} parent=1 // pred_check
      _
    $region7: #{bert_forward_pallas.1} parent=1 // pred_check_branch
      %17 = sbr.rel (0) target = $region9
    $region8: #{bert_forward_pallas.1} parent=1 // pred_region
      _
    $region9: #{bert_forward_pallas.1} parent=1 // pred_fallthru
      _
    // Predicated region
    $region10: #{bert_forward_pallas.1} parent=1 // pred_check
      _
    $region11: #{bert_forward_pallas.1} parent=1 // pred_check_branch
      %19 = sbr.rel (0) target = $region13
    $region12: #{bert_forward_pallas.1} parent=1 // pred_region
      _
    $region13: #{bert_forward_pallas.1} parent=1 // pred_fallthru
      _
    // Predicated region
    $region14: #{bert_forward_pallas.1} parent=1 // pred_check
      _
    $region15: #{bert_forward_pallas.1} parent=1 // pred_check_branch
      %21 = sbr.rel (0) target = $region17
    $region16: #{bert_forward_pallas.1} parent=1 // pred_region
      _
    $region17: #{bert_forward_pallas.1} parent=1 // pred_fallthru
      _
    // Predicated region
    $region18: #{bert_forward_pallas.1} parent=1 // pred_check
      _
    $region19: #{bert_forward_pallas.1} parent=1 // pred_check_branch
      %23 = sbr.rel (0) target = $region21
    $region20: #{bert_forward_pallas.1} parent=1 // pred_region
      _
    $region21: #{bert_forward_pallas.1} parent=1 // pred_fallthru
      _
    // Predicated region
    $region22: #{bert_forward_pallas.1} parent=1 // pred_check
      _
    $region23: #{bert_forward_pallas.1} parent=1 // pred_check_branch
      %25 = sbr.rel (0) target = $region25
    $region24: #{bert_forward_pallas.1} parent=1 // pred_region
      _
    $region25: #{bert_forward_pallas.1} parent=1 // pred_fallthru
      _
    // Predicated region
    $region26: #{bert_forward_pallas.1} parent=1 // pred_check
      _
    $region27: #{bert_forward_pallas.1} parent=1 // pred_check_branch
      %27 = sbr.rel (0) target = $region29
    $region28: #{bert_forward_pallas.1} parent=1 // pred_region
      _
    $region29: #{bert_forward_pallas.1} parent=1 // pred_fallthru
      _
    // Predicated region
    $region30: #{bert_forward_pallas.1} parent=1 // pred_check
      _
    $region31: #{bert_forward_pallas.1} parent=1 // pred_check_branch
      %29 = sbr.rel (0) target = $region33
    $region32: #{bert_forward_pallas.1} parent=1 // pred_region
      _
    $region33: #{bert_forward_pallas.1} parent=1 // pred_fallthru
      _
    %v31 = vld [vmem:[%s0] sm:$0xff]
    %v32 = vld [vmem:[%s0 + $0x8] sm:$0xff]
    %v33 = vld [vmem:[%s1] sm:$0xf]
    %v34 = vld [vmem:[%s1 + $0x4] sm:$0xf]
    %v35 = vld [vmem:[%s1 + $0x8] sm:$0xf]
    %v36 = vld [vmem:[%s1 + $0xc] sm:$0xf]
    %v37 = vld [vmem:[%s2] sm:$0xf]
    %v38 = vld [vmem:[%s2 + $0x4] sm:$0xf]
    %v39 = vld [vmem:[%s2 + $0x8] sm:$0xf]
    %v40 = vld [vmem:[%s2 + $0xc] sm:$0xf]
    %v41 = vld [vmem:[%s3] sm:$0xf]
    %v42 = vld [vmem:[%s3 + $0x4] sm:$0xf]
    %v43 = vld [vmem:[%s3 + $0x8] sm:$0xf]
    %v44 = vld [vmem:[%s3 + $0xc] sm:$0xf]
    %v45 = vld [vmem:[%s4] sm:$0xf]
    %v46 = vld [vmem:[%s4 + $0x4] sm:$0xf]
    %v47 = vld [vmem:[%s4 + $0x8] sm:$0xf]
    %v48 = vld [vmem:[%s4 + $0xc] sm:$0xf]
    %v49 = vld [vmem:[%s4 + $0x10] sm:$0xf]
    %v50 = vld [vmem:[%s4 + $0x14] sm:$0xf]
    %v51 = vld [vmem:[%s4 + $0x18] sm:$0xf]
    %v52 = vld [vmem:[%s4 + $0x1c] sm:$0xf]
    %v53 = vld [vmem:[%s4 + $0x20] sm:$0xf]
    %v54 = vld [vmem:[%s4 + $0x24] sm:$0xf]
    %v55 = vld [vmem:[%s4 + $0x28] sm:$0xf]
    %v56 = vld [vmem:[%s4 + $0x2c] sm:$0xf]
    %v57 = vld [vmem:[%s4 + $0x30] sm:$0xf]
    %v58 = vld [vmem:[%s4 + $0x34] sm:$0xf]
    %v59 = vld [vmem:[%s4 + $0x38] sm:$0xf]
    %v60 = vld [vmem:[%s4 + $0x3c] sm:$0xf]
    %v61 = vld [vmem:[%s5] sm:$0x3f]
    %v62 = vld [vmem:[%s6] sm:$0x1]
    %v63 = vld [vmem:[%s7] sm:$0x1]
    %vm64 = vcmask 261120
    %v65 = vsel %vm64, %v31, 0.0
    %66 = vadd.xlane.f32.xlu0 %v65
    %v67 = vpop.xlane.xlu0 %66
    %v68 = vsel %vm64, %v32, 0.0
    %69 = vadd.xlane.f32.xlu0 %v68
    %v70 = vpop.xlane.xlu0 %69
    %v71 = vrcp.pop 32.0
    %v72 = vmul.f32 %v67, %v71
    %v73 = vmul.f32 %v70, %v71
    %v74 = vsub.f32 %v31, %v72
    %v75 = vsub.f32 %v32, %v73
    %v76 = vmul.f32 %v74, %v74
    %v77 = vmul.f32 %v75, %v75
    %v78 = vsel %vm64, %v76, 0.0
    %79 = vadd.xlane.f32.xlu0 %v78
    %v80 = vpop.xlane.xlu0 %79
    %v81 = vsel %vm64, %v77, 0.0
    %82 = vadd.xlane.f32.xlu0 %v81
    %v83 = vpop.xlane.xlu0 %82
    %v84 = vmul.f32 %v80, %v71
    %v85 = vmul.f32 %v83, %v71
    %v86 = vadd.f32 %v84, 1e-05
    %v87 = vadd.f32 %v85, 1e-05
    %v88 = vrsqrt.pop %v86
    %v89 = vrsqrt.pop %v87
    %v90 = vmul.f32 %v74, %v88
    %v91 = vmul.f32 %v75, %v89
    %v92 = vlaneseq
    %v93 = vshrl.u32 %v92, 7
    %v94 = vsub.s32 0, %v93
    %v95 = vrot.slane %v61, %v94
    %v96 = vmul.f32 %v90, %v95
    %v97 = vmul.f32 %v91, %v95
    %v98 = vlaneseq
    %v99 = vshrl.u32 %v98, 7
    %v100 = vsub.s32 1, %v99
    %v101 = vrot.slane %v61, %v100
    %v102 = vadd.f32 %v96, %v101
    %v103 = vadd.f32 %v97, %v101
    %v104 = vpack.c.bf16 %v103, %v102
    %v105 = vlaneseq
    %v106 = vshrl.u32 %v105, 7
    %v107 = vsub.s32 0, %v106
    %v108 = vrot.slane %v62, %v107
    %v113 = vunpack.c.l.b16 %v33
    %v114 = vunpack.c.l.b16 %v34
    %v115 = vunpack.c.l.b16 %v35
    %v116 = vunpack.c.l.b16 %v36
    %v117 = vpack.c.b16 %v114, %v113
    %v118 = vpack.c.b16 %v116, %v115
    %v122 = vsel %vm64, %v104, 0
    %124 = vmatprep.subr.bf16.mxu0 0
    %125 = vmatpush1.bf16.msra.mxu0 0
    %126 = vmatprep.subr.bf16.mxu0 0
    %127 = vmatpush1.bf16.msra.mxu0 0
    %128 = vmatprep.subr.bf16.mxu0 0
    %129 = vmatpush1.bf16.msra.mxu0 0
    %130 = vmatprep.subr.bf16.mxu0 0
    %131 = vmatpush1.bf16.msra.mxu0 0
    %132 = vmatprep.subr.bf16.mxu0 0
    %133 = vmatpush1.bf16.msra.mxu0 0
    %134 = vmatprep.subr.bf16.mxu0 0
    %135 = vmatpush1.bf16.msra.mxu0 0
    %136 = vmatprep.subr.bf16.mxu0 0
    %137 = vmatpush1.bf16.msra.mxu0 %v118
    %138 = vmatprep.subr.bf16.mxu0 0
    %139 = vmatpush1.bf16.msra.mxu0 %v117
    %140 = vmatprep.subr.bf16.mxu0 0
    %141 = vmatpush2.bf16.msra.mxu0 0
    %142 = vmatprep.subr.bf16.mxu0 0
    %143 = vmatpush2.bf16.msra.mxu0 0
    %144 = vmatprep.subr.bf16.mxu0 0
    %145 = vmatpush2.bf16.msra.mxu0 0
    %146 = vmatprep.subr.bf16.mxu0 0
    %147 = vmatpush2.bf16.msra.mxu0 0
    %148 = vmatprep.subr.bf16.mxu0 0
    %149 = vmatpush2.bf16.msra.mxu0 0
    %150 = vmatprep.subr.bf16.mxu0 0
    %151 = vmatpush2.bf16.msra.mxu0 0
    %152 = vmatprep.subr.bf16.mxu0 0
    %153 = vmatpush2.bf16.msra.mxu0 0
    %154 = vmatprep.subr.bf16.mxu0 0
    %155 = vmatpush2.bf16.msra.mxu0 0
    %156 = vmatprep.mubr.bf16.mxu0 0
    %157 = vmatmul.mubr.bf16.gmra.mxu0 %v122
    %v158 = vpop.f32.mrf.mxu0
    %v159 = vadd.f32 %v108, %v158
    %v160 = vpop.f32.mrf.mxu0
    %v161 = vpop.f32.mrf.mxu0
    %v162 = vadd.f32 %v108, %v161
    %v163 = vpop.f32.mrf.mxu0
    %164 = vdwg.mxu0
    %167 = vrot.lane.b32.xlu0 %v159, 120
    %v168 = vpop.permute.xlu0 %167
    %169 = vrot.lane.b32.xlu0 %v162, 120
    %v170 = vpop.permute.xlu0 %169
    %173 = vrot.lane.b32.xlu0 %v159, 112
    %v174 = vpop.permute.xlu0 %173
    %175 = vrot.lane.b32.xlu0 %v162, 112
    %v176 = vpop.permute.xlu0 %175
    %179 = vrot.lane.b32.xlu0 %v159, 104
    %v180 = vpop.permute.xlu0 %179
    %181 = vrot.lane.b32.xlu0 %v162, 104
    %v182 = vpop.permute.xlu0 %181
    %v185 = vpack.c.bf16 %v159, %v159
    %v186 = vpack.c.bf16 %v162, %v162
    %v187 = vpack.c.bf16 %v168, %v168
    %v188 = vpack.c.bf16 %v170, %v170
    %v189 = vpack.c.bf16 %v174, %v174
    %v190 = vpack.c.bf16 %v176, %v176
    %v191 = vpack.c.bf16 %v180, %v180
    %v192 = vpack.c.bf16 %v182, %v182
    %194 = vrot.lane.b32.xlu0 %v185, 96
    %v195 = vpop.permute.xlu0 %194
    %vm196 = vcmask 64512
    %v198 = vsel %vm196, %v185, 0
    %v201 = vsel %vm196, %v195, 0
    %203 = vmatprep.subr.bf16.mxu0 0
    %204 = vmatpush1.bf16.xpose.msra.mxu0 0
    %205 = vmatprep.subr.bf16.mxu0 0
    %206 = vmatpush1.bf16.xpose.msra.mxu0 0
    %207 = vmatprep.subr.bf16.mxu0 0
    %208 = vmatpush1.bf16.xpose.msra.mxu0 0
    %209 = vmatprep.subr.bf16.mxu0 0
    %210 = vmatpush1.bf16.xpose.msra.mxu0 0
    %211 = vmatprep.subr.bf16.mxu0 0
    %212 = vmatpush1.bf16.xpose.msra.mxu0 0
    %213 = vmatprep.subr.bf16.mxu0 0
    %214 = vmatpush1.bf16.xpose.msra.mxu0 0
    %215 = vmatprep.subr.bf16.mxu0 0
    %216 = vmatpush1.bf16.xpose.msra.mxu0 0
    %217 = vmatprep.subr.bf16.mxu0 0
    %218 = vmatpush1.bf16.xpose.msra.mxu0 %v201
    %219 = vmatprep.subr.bf16.mxu0 0
    %220 = vmatpush2.bf16.xpose.msra.mxu0 0
    %221 = vmatprep.subr.bf16.mxu0 0
    %222 = vmatpush2.bf16.xpose.msra.mxu0 0
    %223 = vmatprep.subr.bf16.mxu0 0
    %224 = vmatpush2.bf16.xpose.msra.mxu0 0
    %225 = vmatprep.subr.bf16.mxu0 0
    %226 = vmatpush2.bf16.xpose.msra.mxu0 0
    %227 = vmatprep.subr.bf16.mxu0 0
    %228 = vmatpush2.bf16.xpose.msra.mxu0 0
    %229 = vmatprep.subr.bf16.mxu0 0
    %230 = vmatpush2.bf16.xpose.msra.mxu0 0
    %231 = vmatprep.subr.bf16.mxu0 0
    %232 = vmatpush2.bf16.xpose.msra.mxu0 0
    %233 = vmatprep.subr.bf16.mxu0 0
    %234 = vmatpush2.bf16.xpose.msra.mxu0 0
    %235 = vmatprep.mubr.bf16.mxu0 0
    %236 = vmatmul.mubr.bf16.gmra.mxu0 %v198
    %v237 = vpop.f32.mrf.mxu0
    %v238 = vadd.f32 0.0, %v237
    %v239 = vpop.f32.mrf.mxu0
    %v240 = vpop.f32.mrf.mxu0
    %v241 = vpop.f32.mrf.mxu0
    %242 = vdwg.mxu0
    %244 = vrot.lane.b32.xlu0 %v186, 96
    %v245 = vpop.permute.xlu0 %244
    %v247 = vsel %vm196, %v186, 0
    %v250 = vsel %vm196, %v245, 0
    %252 = vmatprep.subr.bf16.mxu0 0
    %253 = vmatpush1.bf16.xpose.msra.mxu0 0
    %254 = vmatprep.subr.bf16.mxu0 0
    %255 = vmatpush1.bf16.xpose.msra.mxu0 0
    %256 = vmatprep.subr.bf16.mxu0 0
    %257 = vmatpush1.bf16.xpose.msra.mxu0 0
    %258 = vmatprep.subr.bf16.mxu0 0
    %259 = vmatpush1.bf16.xpose.msra.mxu0 0
    %260 = vmatprep.subr.bf16.mxu0 0
    %261 = vmatpush1.bf16.xpose.msra.mxu0 0
    %262 = vmatprep.subr.bf16.mxu0 0
    %263 = vmatpush1.bf16.xpose.msra.mxu0 0
    %264 = vmatprep.subr.bf16.mxu0 0
    %265 = vmatpush1.bf16.xpose.msra.mxu0 0
    %266 = vmatprep.subr.bf16.mxu0 0
    %267 = vmatpush1.bf16.xpose.msra.mxu0 %v250
    %268 = vmatprep.subr.bf16.mxu0 0
    %269 = vmatpush2.bf16.xpose.msra.mxu0 0
    %270 = vmatprep.subr.bf16.mxu0 0
    %271 = vmatpush2.bf16.xpose.msra.mxu0 0
    %272 = vmatprep.subr.bf16.mxu0 0
    %273 = vmatpush2.bf16.xpose.msra.mxu0 0
    %274 = vmatprep.subr.bf16.mxu0 0
    %275 = vmatpush2.bf16.xpose.msra.mxu0 0
    %276 = vmatprep.subr.bf16.mxu0 0
    %277 = vmatpush2.bf16.xpose.msra.mxu0 0
    %278 = vmatprep.subr.bf16.mxu0 0
    %279 = vmatpush2.bf16.xpose.msra.mxu0 0
    %280 = vmatprep.subr.bf16.mxu0 0
    %281 = vmatpush2.bf16.xpose.msra.mxu0 0
    %282 = vmatprep.subr.bf16.mxu0 0
    %283 = vmatpush2.bf16.xpose.msra.mxu0 0
    %284 = vmatprep.mubr.bf16.mxu0 0
    %285 = vmatmul.mubr.bf16.gmra.mxu0 %v247
    %v286 = vpop.f32.mrf.mxu0
    %v287 = vadd.f32 0.0, %v286
    %v288 = vpop.f32.mrf.mxu0
    %v289 = vpop.f32.mrf.mxu0
    %v290 = vpop.f32.mrf.mxu0
    %291 = vdwg.mxu0
    %293 = vrot.lane.b32.xlu0 %v187, 96
    %v294 = vpop.permute.xlu0 %293
    %v296 = vsel %vm196, %v187, 0
    %v299 = vsel %vm196, %v294, 0
    %301 = vmatprep.subr.bf16.mxu0 0
    %302 = vmatpush1.bf16.xpose.msra.mxu0 0
    %303 = vmatprep.subr.bf16.mxu0 0
    %304 = vmatpush1.bf16.xpose.msra.mxu0 0
    %305 = vmatprep.subr.bf16.mxu0 0
    %306 = vmatpush1.bf16.xpose.msra.mxu0 0
    %307 = vmatprep.subr.bf16.mxu0 0
    %308 = vmatpush1.bf16.xpose.msra.mxu0 0
    %309 = vmatprep.subr.bf16.mxu0 0
    %310 = vmatpush1.bf16.xpose.msra.mxu0 0
    %311 = vmatprep.subr.bf16.mxu0 0
    %312 = vmatpush1.bf16.xpose.msra.mxu0 0
    %313 = vmatprep.subr.bf16.mxu0 0
    %314 = vmatpush1.bf16.xpose.msra.mxu0 0
    %315 = vmatprep.subr.bf16.mxu0 0
    %316 = vmatpush1.bf16.xpose.msra.mxu0 %v299
    %317 = vmatprep.subr.bf16.mxu0 0
    %318 = vmatpush2.bf16.xpose.msra.mxu0 0
    %319 = vmatprep.subr.bf16.mxu0 0
    %320 = vmatpush2.bf16.xpose.msra.mxu0 0
    %321 = vmatprep.subr.bf16.mxu0 0
    %322 = vmatpush2.bf16.xpose.msra.mxu0 0
    %323 = vmatprep.subr.bf16.mxu0 0
    %324 = vmatpush2.bf16.xpose.msra.mxu0 0
    %325 = vmatprep.subr.bf16.mxu0 0
    %326 = vmatpush2.bf16.xpose.msra.mxu0 0
    %327 = vmatprep.subr.bf16.mxu0 0
    %328 = vmatpush2.bf16.xpose.msra.mxu0 0
    %329 = vmatprep.subr.bf16.mxu0 0
    %330 = vmatpush2.bf16.xpose.msra.mxu0 0
    %331 = vmatprep.subr.bf16.mxu0 0
    %332 = vmatpush2.bf16.xpose.msra.mxu0 0
    %333 = vmatprep.mubr.bf16.mxu0 0
    %334 = vmatmul.mubr.bf16.gmra.mxu0 %v296
    %v335 = vpop.f32.mrf.mxu0
    %v336 = vadd.f32 0.0, %v335
    %v337 = vpop.f32.mrf.mxu0
    %v338 = vpop.f32.mrf.mxu0
    %v339 = vpop.f32.mrf.mxu0
    %340 = vdwg.mxu0
    %342 = vrot.lane.b32.xlu0 %v188, 96
    %v343 = vpop.permute.xlu0 %342
    %v345 = vsel %vm196, %v188, 0
    %v348 = vsel %vm196, %v343, 0
    %350 = vmatprep.subr.bf16.mxu0 0
    %351 = vmatpush1.bf16.xpose.msra.mxu0 0
    %352 = vmatprep.subr.bf16.mxu0 0
    %353 = vmatpush1.bf16.xpose.msra.mxu0 0
    %354 = vmatprep.subr.bf16.mxu0 0
    %355 = vmatpush1.bf16.xpose.msra.mxu0 0
    %356 = vmatprep.subr.bf16.mxu0 0
    %357 = vmatpush1.bf16.xpose.msra.mxu0 0
    %358 = vmatprep.subr.bf16.mxu0 0
    %359 = vmatpush1.bf16.xpose.msra.mxu0 0
    %360 = vmatprep.subr.bf16.mxu0 0
    %361 = vmatpush1.bf16.xpose.msra.mxu0 0
    %362 = vmatprep.subr.bf16.mxu0 0
    %363 = vmatpush1.bf16.xpose.msra.mxu0 0
    %364 = vmatprep.subr.bf16.mxu0 0
    %365 = vmatpush1.bf16.xpose.msra.mxu0 %v348
    %366 = vmatprep.subr.bf16.mxu0 0
    %367 = vmatpush2.bf16.xpose.msra.mxu0 0
    %368 = vmatprep.subr.bf16.mxu0 0
    %369 = vmatpush2.bf16.xpose.msra.mxu0 0
    %370 = vmatprep.subr.bf16.mxu0 0
    %371 = vmatpush2.bf16.xpose.msra.mxu0 0
    %372 = vmatprep.subr.bf16.mxu0 0
    %373 = vmatpush2.bf16.xpose.msra.mxu0 0
    %374 = vmatprep.subr.bf16.mxu0 0
    %375 = vmatpush2.bf16.xpose.msra.mxu0 0
    %376 = vmatprep.subr.bf16.mxu0 0
    %377 = vmatpush2.bf16.xpose.msra.mxu0 0
    %378 = vmatprep.subr.bf16.mxu0 0
    %379 = vmatpush2.bf16.xpose.msra.mxu0 0
    %380 = vmatprep.subr.bf16.mxu0 0
    %381 = vmatpush2.bf16.xpose.msra.mxu0 0
    %382 = vmatprep.mubr.bf16.mxu0 0
    %383 = vmatmul.mubr.bf16.gmra.mxu0 %v345
    %v384 = vpop.f32.mrf.mxu0
    %v385 = vadd.f32 0.0, %v384
    %v386 = vpop.f32.mrf.mxu0
    %v387 = vpop.f32.mrf.mxu0
    %v388 = vpop.f32.mrf.mxu0
    %389 = vdwg.mxu0
    %391 = vrot.lane.b32.xlu0 %v189, 96
    %v392 = vpop.permute.xlu0 %391
    %v394 = vsel %vm196, %v189, 0
    %v397 = vsel %vm196, %v392, 0
    %399 = vmatprep.subr.bf16.mxu0 0
    %400 = vmatpush1.bf16.xpose.msra.mxu0 0
    %401 = vmatprep.subr.bf16.mxu0 0
    %402 = vmatpush1.bf16.xpose.msra.mxu0 0
    %403 = vmatprep.subr.bf16.mxu0 0
    %404 = vmatpush1.bf16.xpose.msra.mxu0 0
    %405 = vmatprep.subr.bf16.mxu0 0
    %406 = vmatpush1.bf16.xpose.msra.mxu0 0
    %407 = vmatprep.subr.bf16.mxu0 0
    %408 = vmatpush1.bf16.xpose.msra.mxu0 0
    %409 = vmatprep.subr.bf16.mxu0 0
    %410 = vmatpush1.bf16.xpose.msra.mxu0 0
    %411 = vmatprep.subr.bf16.mxu0 0
    %412 = vmatpush1.bf16.xpose.msra.mxu0 0
    %413 = vmatprep.subr.bf16.mxu0 0
    %414 = vmatpush1.bf16.xpose.msra.mxu0 %v397
    %415 = vmatprep.subr.bf16.mxu0 0
    %416 = vmatpush2.bf16.xpose.msra.mxu0 0
    %417 = vmatprep.subr.bf16.mxu0 0
    %418 = vmatpush2.bf16.xpose.msra.mxu0 0
    %419 = vmatprep.subr.bf16.mxu0 0
    %420 = vmatpush2.bf16.xpose.msra.mxu0 0
    %421 = vmatprep.subr.bf16.mxu0 0
    %422 = vmatpush2.bf16.xpose.msra.mxu0 0
    %423 = vmatprep.subr.bf16.mxu0 0
    %424 = vmatpush2.bf16.xpose.msra.mxu0 0
    %425 = vmatprep.subr.bf16.mxu0 0
    %426 = vmatpush2.bf16.xpose.msra.mxu0 0
    %427 = vmatprep.subr.bf16.mxu0 0
    %428 = vmatpush2.bf16.xpose.msra.mxu0 0
    %429 = vmatprep.subr.bf16.mxu0 0
    %430 = vmatpush2.bf16.xpose.msra.mxu0 0
    %431 = vmatprep.mubr.bf16.mxu0 0
    %432 = vmatmul.mubr.bf16.gmra.mxu0 %v394
    %v433 = vpop.f32.mrf.mxu0
    %v434 = vadd.f32 0.0, %v433
    %v435 = vpop.f32.mrf.mxu0
    %v436 = vpop.f32.mrf.mxu0
    %v437 = vpop.f32.mrf.mxu0
    %438 = vdwg.mxu0
    %440 = vrot.lane.b32.xlu0 %v190, 96
    %v441 = vpop.permute.xlu0 %440
    %v443 = vsel %vm196, %v190, 0
    %v446 = vsel %vm196, %v441, 0
    %448 = vmatprep.subr.bf16.mxu0 0
    %449 = vmatpush1.bf16.xpose.msra.mxu0 0
    %450 = vmatprep.subr.bf16.mxu0 0
    %451 = vmatpush1.bf16.xpose.msra.mxu0 0
    %452 = vmatprep.subr.bf16.mxu0 0
    %453 = vmatpush1.bf16.xpose.msra.mxu0 0
    %454 = vmatprep.subr.bf16.mxu0 0
    %455 = vmatpush1.bf16.xpose.msra.mxu0 0
    %456 = vmatprep.subr.bf16.mxu0 0
    %457 = vmatpush1.bf16.xpose.msra.mxu0 0
    %458 = vmatprep.subr.bf16.mxu0 0
    %459 = vmatpush1.bf16.xpose.msra.mxu0 0
    %460 = vmatprep.subr.bf16.mxu0 0
    %461 = vmatpush1.bf16.xpose.msra.mxu0 0
    %462 = vmatprep.subr.bf16.mxu0 0
    %463 = vmatpush1.bf16.xpose.msra.mxu0 %v446
    %464 = vmatprep.subr.bf16.mxu0 0
    %465 = vmatpush2.bf16.xpose.msra.mxu0 0
    %466 = vmatprep.subr.bf16.mxu0 0
    %467 = vmatpush2.bf16.xpose.msra.mxu0 0
    %468 = vmatprep.subr.bf16.mxu0 0
    %469 = vmatpush2.bf16.xpose.msra.mxu0 0
    %470 = vmatprep.subr.bf16.mxu0 0
    %471 = vmatpush2.bf16.xpose.msra.mxu0 0
    %472 = vmatprep.subr.bf16.mxu0 0
    %473 = vmatpush2.bf16.xpose.msra.mxu0 0
    %474 = vmatprep.subr.bf16.mxu0 0
    %475 = vmatpush2.bf16.xpose.msra.mxu0 0
    %476 = vmatprep.subr.bf16.mxu0 0
    %477 = vmatpush2.bf16.xpose.msra.mxu0 0
    %478 = vmatprep.subr.bf16.mxu0 0
    %479 = vmatpush2.bf16.xpose.msra.mxu0 0
    %480 = vmatprep.mubr.bf16.mxu0 0
    %481 = vmatmul.mubr.bf16.gmra.mxu0 %v443
    %v482 = vpop.f32.mrf.mxu0
    %v483 = vadd.f32 0.0, %v482
    %v484 = vpop.f32.mrf.mxu0
    %v485 = vpop.f32.mrf.mxu0
    %v486 = vpop.f32.mrf.mxu0
    %487 = vdwg.mxu0
    %489 = vrot.lane.b32.xlu0 %v191, 96
    %v490 = vpop.permute.xlu0 %489
    %v492 = vsel %vm196, %v191, 0
    %v495 = vsel %vm196, %v490, 0
    %497 = vmatprep.subr.bf16.mxu0 0
    %498 = vmatpush1.bf16.xpose.msra.mxu0 0
    %499 = vmatprep.subr.bf16.mxu0 0
    %500 = vmatpush1.bf16.xpose.msra.mxu0 0
    %501 = vmatprep.subr.bf16.mxu0 0
    %502 = vmatpush1.bf16.xpose.msra.mxu0 0
    %503 = vmatprep.subr.bf16.mxu0 0
    %504 = vmatpush1.bf16.xpose.msra.mxu0 0
    %505 = vmatprep.subr.bf16.mxu0 0
    %506 = vmatpush1.bf16.xpose.msra.mxu0 0
    %507 = vmatprep.subr.bf16.mxu0 0
    %508 = vmatpush1.bf16.xpose.msra.mxu0 0
    %509 = vmatprep.subr.bf16.mxu0 0
    %510 = vmatpush1.bf16.xpose.msra.mxu0 0
    %511 = vmatprep.subr.bf16.mxu0 0
    %512 = vmatpush1.bf16.xpose.msra.mxu0 %v495
    %513 = vmatprep.subr.bf16.mxu0 0
    %514 = vmatpush2.bf16.xpose.msra.mxu0 0
    %515 = vmatprep.subr.bf16.mxu0 0
    %516 = vmatpush2.bf16.xpose.msra.mxu0 0
    %517 = vmatprep.subr.bf16.mxu0 0
    %518 = vmatpush2.bf16.xpose.msra.mxu0 0
    %519 = vmatprep.subr.bf16.mxu0 0
    %520 = vmatpush2.bf16.xpose.msra.mxu0 0
    %521 = vmatprep.subr.bf16.mxu0 0
    %522 = vmatpush2.bf16.xpose.msra.mxu0 0
    %523 = vmatprep.subr.bf16.mxu0 0
    %524 = vmatpush2.bf16.xpose.msra.mxu0 0
    %525 = vmatprep.subr.bf16.mxu0 0
    %526 = vmatpush2.bf16.xpose.msra.mxu0 0
    %527 = vmatprep.subr.bf16.mxu0 0
    %528 = vmatpush2.bf16.xpose.msra.mxu0 0
    %529 = vmatprep.mubr.bf16.mxu0 0
    %530 = vmatmul.mubr.bf16.gmra.mxu0 %v492
    %v531 = vpop.f32.mrf.mxu0
    %v532 = vadd.f32 0.0, %v531
    %v533 = vpop.f32.mrf.mxu0
    %v534 = vpop.f32.mrf.mxu0
    %v535 = vpop.f32.mrf.mxu0
    %536 = vdwg.mxu0
    %538 = vrot.lane.b32.xlu0 %v192, 96
    %v539 = vpop.permute.xlu0 %538
    %v541 = vsel %vm196, %v192, 0
    %v544 = vsel %vm196, %v539, 0
    %546 = vmatprep.subr.bf16.mxu0 0
    %547 = vmatpush1.bf16.xpose.msra.mxu0 0
    %548 = vmatprep.subr.bf16.mxu0 0
    %549 = vmatpush1.bf16.xpose.msra.mxu0 0
    %550 = vmatprep.subr.bf16.mxu0 0
    %551 = vmatpush1.bf16.xpose.msra.mxu0 0
    %552 = vmatprep.subr.bf16.mxu0 0
    %553 = vmatpush1.bf16.xpose.msra.mxu0 0
    %554 = vmatprep.subr.bf16.mxu0 0
    %555 = vmatpush1.bf16.xpose.msra.mxu0 0
    %556 = vmatprep.subr.bf16.mxu0 0
    %557 = vmatpush1.bf16.xpose.msra.mxu0 0
    %558 = vmatprep.subr.bf16.mxu0 0
    %559 = vmatpush1.bf16.xpose.msra.mxu0 0
    %560 = vmatprep.subr.bf16.mxu0 0
    %561 = vmatpush1.bf16.xpose.msra.mxu0 %v544
    %562 = vmatprep.subr.bf16.mxu0 0
    %563 = vmatpush2.bf16.xpose.msra.mxu0 0
    %564 = vmatprep.subr.bf16.mxu0 0
    %565 = vmatpush2.bf16.xpose.msra.mxu0 0
    %566 = vmatprep.subr.bf16.mxu0 0
    %567 = vmatpush2.bf16.xpose.msra.mxu0 0
    %568 = vmatprep.subr.bf16.mxu0 0
    %569 = vmatpush2.bf16.xpose.msra.mxu0 0
    %570 = vmatprep.subr.bf16.mxu0 0
    %571 = vmatpush2.bf16.xpose.msra.mxu0 0
    %572 = vmatprep.subr.bf16.mxu0 0
    %573 = vmatpush2.bf16.xpose.msra.mxu0 0
    %574 = vmatprep.subr.bf16.mxu0 0
    %575 = vmatpush2.bf16.xpose.msra.mxu0 0
    %576 = vmatprep.subr.bf16.mxu0 0
    %577 = vmatpush2.bf16.xpose.msra.mxu0 0
    %578 = vmatprep.mubr.bf16.mxu0 0
    %579 = vmatmul.mubr.bf16.gmra.mxu0 %v541
    %v580 = vpop.f32.mrf.mxu0
    %v581 = vadd.f32 0.0, %v580
    %v582 = vpop.f32.mrf.mxu0
    %v583 = vpop.f32.mrf.mxu0
    %v584 = vpop.f32.mrf.mxu0
    %585 = vdwg.mxu0
    %v586 = vsel %vm196, %v238, -inf
    %587 = vmax.xlane.f32.xlu0 %v586
    %v588 = vpop.xlane.xlu0 %587
    %v589 = vsel %vm196, %v287, -inf
    %590 = vmax.xlane.f32.xlu0 %v589
    %v591 = vpop.xlane.xlu0 %590
    %v592 = vsel %vm196, %v336, -inf
    %593 = vmax.xlane.f32.xlu0 %v592
    %v594 = vpop.xlane.xlu0 %593
    %v595 = vsel %vm196, %v385, -inf
    %596 = vmax.xlane.f32.xlu0 %v595
    %v597 = vpop.xlane.xlu0 %596
    %v598 = vsel %vm196, %v434, -inf
    %599 = vmax.xlane.f32.xlu0 %v598
    %v600 = vpop.xlane.xlu0 %599
    %v601 = vsel %vm196, %v483, -inf
    %602 = vmax.xlane.f32.xlu0 %v601
    %v603 = vpop.xlane.xlu0 %602
    %v604 = vsel %vm196, %v532, -inf
    %605 = vmax.xlane.f32.xlu0 %v604
    %v606 = vpop.xlane.xlu0 %605
    %v607 = vsel %vm196, %v581, -inf
    %608 = vmax.xlane.f32.xlu0 %v607
    %v609 = vpop.xlane.xlu0 %608
    %v610 = vsub.f32 %v238, %v588
    %v611 = vsub.f32 %v287, %v591
    %v612 = vsub.f32 %v336, %v594
    %v613 = vsub.f32 %v385, %v597
    %v614 = vsub.f32 %v434, %v600
    %v615 = vsub.f32 %v483, %v603
    %v616 = vsub.f32 %v532, %v606
    %v617 = vsub.f32 %v581, %v609
    %v618 = vmul.f32 %v610, 1.442695
    %v619 = vpow.pop %v618
    %v620 = vmul.f32 %v611, 1.442695
    %v621 = vpow.pop %v620
    %v622 = vmul.f32 %v612, 1.442695
    %v623 = vpow.pop %v622
    %v624 = vmul.f32 %v613, 1.442695
    %v625 = vpow.pop %v624
    %v626 = vmul.f32 %v614, 1.442695
    %v627 = vpow.pop %v626
    %v628 = vmul.f32 %v615, 1.442695
    %v629 = vpow.pop %v628
    %v630 = vmul.f32 %v616, 1.442695
    %v631 = vpow.pop %v630
    %v632 = vmul.f32 %v617, 1.442695
    %v633 = vpow.pop %v632
    %v634 = vsel %vm196, %v619, 0.0
    %635 = vadd.xlane.f32.xlu0 %v634
    %v636 = vpop.xlane.xlu0 %635
    %v637 = vsel %vm196, %v621, 0.0
    %638 = vadd.xlane.f32.xlu0 %v637
    %v639 = vpop.xlane.xlu0 %638
    %v640 = vsel %vm196, %v623, 0.0
    %641 = vadd.xlane.f32.xlu0 %v640
    %v642 = vpop.xlane.xlu0 %641
    %v643 = vsel %vm196, %v625, 0.0
    %644 = vadd.xlane.f32.xlu0 %v643
    %v645 = vpop.xlane.xlu0 %644
    %v646 = vsel %vm196, %v627, 0.0
    %647 = vadd.xlane.f32.xlu0 %v646
    %v648 = vpop.xlane.xlu0 %647
    %v649 = vsel %vm196, %v629, 0.0
    %650 = vadd.xlane.f32.xlu0 %v649
    %v651 = vpop.xlane.xlu0 %650
    %v652 = vsel %vm196, %v631, 0.0
    %653 = vadd.xlane.f32.xlu0 %v652
    %v654 = vpop.xlane.xlu0 %653
    %v655 = vsel %vm196, %v633, 0.0
    %656 = vadd.xlane.f32.xlu0 %v655
    %v657 = vpop.xlane.xlu0 %656
    %v658 = vrcp.pop %v636
    %v659 = vrcp.pop %v639
    %v660 = vrcp.pop %v642
    %v661 = vrcp.pop %v645
    %v662 = vrcp.pop %v648
    %v663 = vrcp.pop %v651
    %v664 = vrcp.pop %v654
    %v665 = vrcp.pop %v657
    %v666 = vmul.f32 %v619, %v658
    %v667 = vmul.f32 %v621, %v659
    %v668 = vmul.f32 %v623, %v660
    %v669 = vmul.f32 %v625, %v661
    %v670 = vmul.f32 %v627, %v662
    %v671 = vmul.f32 %v629, %v663
    %v672 = vmul.f32 %v631, %v664
    %v673 = vmul.f32 %v633, %v665
    %v674 = vpack.c.bf16 %v666, %v666
    %v675 = vpack.c.bf16 %v667, %v667
    %v676 = vpack.c.bf16 %v668, %v668
    %v677 = vpack.c.bf16 %v669, %v669
    %v678 = vpack.c.bf16 %v670, %v670
    %v679 = vpack.c.bf16 %v671, %v671
    %v680 = vpack.c.bf16 %v672, %v672
    %v681 = vpack.c.bf16 %v673, %v673
    %682 = vrot.lane.b32.xlu0 %v185, 64
    %v683 = vpop.permute.xlu0 %682
    %v685 = vsel %vm196, %v674, 0
    %vm687 = vcmask 1043456
    %v689 = vsel %vm687, %v683, 0
    %691 = vmatprep.subr.bf16.mxu0 0
    %692 = vmatpush1.bf16.msra.mxu0 0
    %693 = vmatprep.subr.bf16.mxu0 0
    %694 = vmatpush1.bf16.msra.mxu0 0
    %695 = vmatprep.subr.bf16.mxu0 0
    %696 = vmatpush1.bf16.msra.mxu0 0
    %697 = vmatprep.subr.bf16.mxu0 0
    %698 = vmatpush1.bf16.msra.mxu0 0
    %699 = vmatprep.subr.bf16.mxu0 0
    %700 = vmatpush1.bf16.msra.mxu0 0
    %701 = vmatprep.subr.bf16.mxu0 0
    %702 = vmatpush1.bf16.msra.mxu0 0
    %703 = vmatprep.subr.bf16.mxu0 0
    %704 = vmatpush1.bf16.msra.mxu0 0
    %705 = vmatprep.subr.bf16.mxu0 0
    %706 = vmatpush1.bf16.msra.mxu0 %v689
    %707 = vmatprep.subr.bf16.mxu0 0
    %708 = vmatpush2.bf16.msra.mxu0 0
    %709 = vmatprep.subr.bf16.mxu0 0
    %710 = vmatpush2.bf16.msra.mxu0 0
    %711 = vmatprep.subr.bf16.mxu0 0
    %712 = vmatpush2.bf16.msra.mxu0 0
    %713 = vmatprep.subr.bf16.mxu0 0
    %714 = vmatpush2.bf16.msra.mxu0 0
    %715 = vmatprep.subr.bf16.mxu0 0
    %716 = vmatpush2.bf16.msra.mxu0 0
    %717 = vmatprep.subr.bf16.mxu0 0
    %718 = vmatpush2.bf16.msra.mxu0 0
    %719 = vmatprep.subr.bf16.mxu0 0
    %720 = vmatpush2.bf16.msra.mxu0 0
    %721 = vmatprep.subr.bf16.mxu0 0
    %722 = vmatpush2.bf16.msra.mxu0 0
    %723 = vmatprep.mubr.bf16.mxu0 0
    %724 = vmatmul.mubr.bf16.gmra.mxu0 %v685
    %v725 = vpop.f32.mrf.mxu0
    %v726 = vadd.f32 0.0, %v725
    %v727 = vpop.f32.mrf.mxu0
    %v728 = vpop.f32.mrf.mxu0
    %v729 = vpop.f32.mrf.mxu0
    %730 = vdwg.mxu0
    %731 = vrot.lane.b32.xlu0 %v186, 64
    %v732 = vpop.permute.xlu0 %731
    %v734 = vsel %vm196, %v675, 0
    %v737 = vsel %vm687, %v732, 0
    %739 = vmatprep.subr.bf16.mxu0 0
    %740 = vmatpush1.bf16.msra.mxu0 0
    %741 = vmatprep.subr.bf16.mxu0 0
    %742 = vmatpush1.bf16.msra.mxu0 0
    %743 = vmatprep.subr.bf16.mxu0 0
    %744 = vmatpush1.bf16.msra.mxu0 0
    %745 = vmatprep.subr.bf16.mxu0 0
    %746 = vmatpush1.bf16.msra.mxu0 0
    %747 = vmatprep.subr.bf16.mxu0 0
    %748 = vmatpush1.bf16.msra.mxu0 0
    %749 = vmatprep.subr.bf16.mxu0 0
    %750 = vmatpush1.bf16.msra.mxu0 0
    %751 = vmatprep.subr.bf16.mxu0 0
    %752 = vmatpush1.bf16.msra.mxu0 0
    %753 = vmatprep.subr.bf16.mxu0 0
    %754 = vmatpush1.bf16.msra.mxu0 %v737
    %755 = vmatprep.subr.bf16.mxu0 0
    %756 = vmatpush2.bf16.msra.mxu0 0
    %757 = vmatprep.subr.bf16.mxu0 0
    %758 = vmatpush2.bf16.msra.mxu0 0
    %759 = vmatprep.subr.bf16.mxu0 0
    %760 = vmatpush2.bf16.msra.mxu0 0
    %761 = vmatprep.subr.bf16.mxu0 0
    %762 = vmatpush2.bf16.msra.mxu0 0
    %763 = vmatprep.subr.bf16.mxu0 0
    %764 = vmatpush2.bf16.msra.mxu0 0
    %765 = vmatprep.subr.bf16.mxu0 0
    %766 = vmatpush2.bf16.msra.mxu0 0
    %767 = vmatprep.subr.bf16.mxu0 0
    %768 = vmatpush2.bf16.msra.mxu0 0
    %769 = vmatprep.subr.bf16.mxu0 0
    %770 = vmatpush2.bf16.msra.mxu0 0
    %771 = vmatprep.mubr.bf16.mxu0 0
    %772 = vmatmul.mubr.bf16.gmra.mxu0 %v734
    %v773 = vpop.f32.mrf.mxu0
    %v774 = vadd.f32 0.0, %v773
    %v775 = vpop.f32.mrf.mxu0
    %v776 = vpop.f32.mrf.mxu0
    %v777 = vpop.f32.mrf.mxu0
    %778 = vdwg.mxu0
    %779 = vrot.lane.b32.xlu0 %v187, 64
    %v780 = vpop.permute.xlu0 %779
    %v782 = vsel %vm196, %v676, 0
    %v785 = vsel %vm687, %v780, 0
    %787 = vmatprep.subr.bf16.mxu0 0
    %788 = vmatpush1.bf16.msra.mxu0 0
    %789 = vmatprep.subr.bf16.mxu0 0
    %790 = vmatpush1.bf16.msra.mxu0 0
    %791 = vmatprep.subr.bf16.mxu0 0
    %792 = vmatpush1.bf16.msra.mxu0 0
    %793 = vmatprep.subr.bf16.mxu0 0
    %794 = vmatpush1.bf16.msra.mxu0 0
    %795 = vmatprep.subr.bf16.mxu0 0
    %796 = vmatpush1.bf16.msra.mxu0 0
    %797 = vmatprep.subr.bf16.mxu0 0
    %798 = vmatpush1.bf16.msra.mxu0 0
    %799 = vmatprep.subr.bf16.mxu0 0
    %800 = vmatpush1.bf16.msra.mxu0 0
    %801 = vmatprep.subr.bf16.mxu0 0
    %802 = vmatpush1.bf16.msra.mxu0 %v785
    %803 = vmatprep.subr.bf16.mxu0 0
    %804 = vmatpush2.bf16.msra.mxu0 0
    %805 = vmatprep.subr.bf16.mxu0 0
    %806 = vmatpush2.bf16.msra.mxu0 0
    %807 = vmatprep.subr.bf16.mxu0 0
    %808 = vmatpush2.bf16.msra.mxu0 0
    %809 = vmatprep.subr.bf16.mxu0 0
    %810 = vmatpush2.bf16.msra.mxu0 0
    %811 = vmatprep.subr.bf16.mxu0 0
    %812 = vmatpush2.bf16.msra.mxu0 0
    %813 = vmatprep.subr.bf16.mxu0 0
    %814 = vmatpush2.bf16.msra.mxu0 0
    %815 = vmatprep.subr.bf16.mxu0 0
    %816 = vmatpush2.bf16.msra.mxu0 0
    %817 = vmatprep.subr.bf16.mxu0 0
    %818 = vmatpush2.bf16.msra.mxu0 0
    %819 = vmatprep.mubr.bf16.mxu0 0
    %820 = vmatmul.mubr.bf16.gmra.mxu0 %v782
    %v821 = vpop.f32.mrf.mxu0
    %v822 = vadd.f32 0.0, %v821
    %v823 = vpop.f32.mrf.mxu0
    %v824 = vpop.f32.mrf.mxu0
    %v825 = vpop.f32.mrf.mxu0
    %826 = vdwg.mxu0
    %827 = vrot.lane.b32.xlu0 %v188, 64
    %v828 = vpop.permute.xlu0 %827
    %v830 = vsel %vm196, %v677, 0
    %v833 = vsel %vm687, %v828, 0
    %835 = vmatprep.subr.bf16.mxu0 0
    %836 = vmatpush1.bf16.msra.mxu0 0
    %837 = vmatprep.subr.bf16.mxu0 0
    %838 = vmatpush1.bf16.msra.mxu0 0
    %839 = vmatprep.subr.bf16.mxu0 0
    %840 = vmatpush1.bf16.msra.mxu0 0
    %841 = vmatprep.subr.bf16.mxu0 0
    %842 = vmatpush1.bf16.msra.mxu0 0
    %843 = vmatprep.subr.bf16.mxu0 0
    %844 = vmatpush1.bf16.msra.mxu0 0
    %845 = vmatprep.subr.bf16.mxu0 0
    %846 = vmatpush1.bf16.msra.mxu0 0
    %847 = vmatprep.subr.bf16.mxu0 0
    %848 = vmatpush1.bf16.msra.mxu0 0
    %849 = vmatprep.subr.bf16.mxu0 0
    %850 = vmatpush1.bf16.msra.mxu0 %v833
    %851 = vmatprep.subr.bf16.mxu0 0
    %852 = vmatpush2.bf16.msra.mxu0 0
    %853 = vmatprep.subr.bf16.mxu0 0
    %854 = vmatpush2.bf16.msra.mxu0 0
    %855 = vmatprep.subr.bf16.mxu0 0
    %856 = vmatpush2.bf16.msra.mxu0 0
    %857 = vmatprep.subr.bf16.mxu0 0
    %858 = vmatpush2.bf16.msra.mxu0 0
    %859 = vmatprep.subr.bf16.mxu0 0
    %860 = vmatpush2.bf16.msra.mxu0 0
    %861 = vmatprep.subr.bf16.mxu0 0
    %862 = vmatpush2.bf16.msra.mxu0 0
    %863 = vmatprep.subr.bf16.mxu0 0
    %864 = vmatpush2.bf16.msra.mxu0 0
    %865 = vmatprep.subr.bf16.mxu0 0
    %866 = vmatpush2.bf16.msra.mxu0 0
    %867 = vmatprep.mubr.bf16.mxu0 0
    %868 = vmatmul.mubr.bf16.gmra.mxu0 %v830
    %v869 = vpop.f32.mrf.mxu0
    %v870 = vadd.f32 0.0, %v869
    %v871 = vpop.f32.mrf.mxu0
    %v872 = vpop.f32.mrf.mxu0
    %v873 = vpop.f32.mrf.mxu0
    %874 = vdwg.mxu0
    %875 = vrot.lane.b32.xlu0 %v189, 64
    %v876 = vpop.permute.xlu0 %875
    %v878 = vsel %vm196, %v678, 0
    %v881 = vsel %vm687, %v876, 0
    %883 = vmatprep.subr.bf16.mxu0 0
    %884 = vmatpush1.bf16.msra.mxu0 0
    %885 = vmatprep.subr.bf16.mxu0 0
    %886 = vmatpush1.bf16.msra.mxu0 0
    %887 = vmatprep.subr.bf16.mxu0 0
    %888 = vmatpush1.bf16.msra.mxu0 0
    %889 = vmatprep.subr.bf16.mxu0 0
    %890 = vmatpush1.bf16.msra.mxu0 0
    %891 = vmatprep.subr.bf16.mxu0 0
    %892 = vmatpush1.bf16.msra.mxu0 0
    %893 = vmatprep.subr.bf16.mxu0 0
    %894 = vmatpush1.bf16.msra.mxu0 0
    %895 = vmatprep.subr.bf16.mxu0 0
    %896 = vmatpush1.bf16.msra.mxu0 0
    %897 = vmatprep.subr.bf16.mxu0 0
    %898 = vmatpush1.bf16.msra.mxu0 %v881
    %899 = vmatprep.subr.bf16.mxu0 0
    %900 = vmatpush2.bf16.msra.mxu0 0
    %901 = vmatprep.subr.bf16.mxu0 0
    %902 = vmatpush2.bf16.msra.mxu0 0
    %903 = vmatprep.subr.bf16.mxu0 0
    %904 = vmatpush2.bf16.msra.mxu0 0
    %905 = vmatprep.subr.bf16.mxu0 0
    %906 = vmatpush2.bf16.msra.mxu0 0
    %907 = vmatprep.subr.bf16.mxu0 0
    %908 = vmatpush2.bf16.msra.mxu0 0
    %909 = vmatprep.subr.bf16.mxu0 0
    %910 = vmatpush2.bf16.msra.mxu0 0
    %911 = vmatprep.subr.bf16.mxu0 0
    %912 = vmatpush2.bf16.msra.mxu0 0
    %913 = vmatprep.subr.bf16.mxu0 0
    %914 = vmatpush2.bf16.msra.mxu0 0
    %915 = vmatprep.mubr.bf16.mxu0 0
    %916 = vmatmul.mubr.bf16.gmra.mxu0 %v878
    %v917 = vpop.f32.mrf.mxu0
    %v918 = vadd.f32 0.0, %v917
    %v919 = vpop.f32.mrf.mxu0
    %v920 = vpop.f32.mrf.mxu0
    %v921 = vpop.f32.mrf.mxu0
    %922 = vdwg.mxu0
    %923 = vrot.lane.b32.xlu0 %v190, 64
    %v924 = vpop.permute.xlu0 %923
    %v926 = vsel %vm196, %v679, 0
    %v929 = vsel %vm687, %v924, 0
    %931 = vmatprep.subr.bf16.mxu0 0
    %932 = vmatpush1.bf16.msra.mxu0 0
    %933 = vmatprep.subr.bf16.mxu0 0
    %934 = vmatpush1.bf16.msra.mxu0 0
    %935 = vmatprep.subr.bf16.mxu0 0
    %936 = vmatpush1.bf16.msra.mxu0 0
    %937 = vmatprep.subr.bf16.mxu0 0
    %938 = vmatpush1.bf16.msra.mxu0 0
    %939 = vmatprep.subr.bf16.mxu0 0
    %940 = vmatpush1.bf16.msra.mxu0 0
    %941 = vmatprep.subr.bf16.mxu0 0
    %942 = vmatpush1.bf16.msra.mxu0 0
    %943 = vmatprep.subr.bf16.mxu0 0
    %944 = vmatpush1.bf16.msra.mxu0 0
    %945 = vmatprep.subr.bf16.mxu0 0
    %946 = vmatpush1.bf16.msra.mxu0 %v929
    %947 = vmatprep.subr.bf16.mxu0 0
    %948 = vmatpush2.bf16.msra.mxu0 0
    %949 = vmatprep.subr.bf16.mxu0 0
    %950 = vmatpush2.bf16.msra.mxu0 0
    %951 = vmatprep.subr.bf16.mxu0 0
    %952 = vmatpush2.bf16.msra.mxu0 0
    %953 = vmatprep.subr.bf16.mxu0 0
    %954 = vmatpush2.bf16.msra.mxu0 0
    %955 = vmatprep.subr.bf16.mxu0 0
    %956 = vmatpush2.bf16.msra.mxu0 0
    %957 = vmatprep.subr.bf16.mxu0 0
    %958 = vmatpush2.bf16.msra.mxu0 0
    %959 = vmatprep.subr.bf16.mxu0 0
    %960 = vmatpush2.bf16.msra.mxu0 0
    %961 = vmatprep.subr.bf16.mxu0 0
    %962 = vmatpush2.bf16.msra.mxu0 0
    %963 = vmatprep.mubr.bf16.mxu0 0
    %964 = vmatmul.mubr.bf16.gmra.mxu0 %v926
    %v965 = vpop.f32.mrf.mxu0
    %v966 = vadd.f32 0.0, %v965
    %v967 = vpop.f32.mrf.mxu0
    %v968 = vpop.f32.mrf.mxu0
    %v969 = vpop.f32.mrf.mxu0
    %970 = vdwg.mxu0
    %971 = vrot.lane.b32.xlu0 %v191, 64
    %v972 = vpop.permute.xlu0 %971
    %v974 = vsel %vm196, %v680, 0
    %v977 = vsel %vm687, %v972, 0
    %979 = vmatprep.subr.bf16.mxu0 0
    %980 = vmatpush1.bf16.msra.mxu0 0
    %981 = vmatprep.subr.bf16.mxu0 0
    %982 = vmatpush1.bf16.msra.mxu0 0
    %983 = vmatprep.subr.bf16.mxu0 0
    %984 = vmatpush1.bf16.msra.mxu0 0
    %985 = vmatprep.subr.bf16.mxu0 0
    %986 = vmatpush1.bf16.msra.mxu0 0
    %987 = vmatprep.subr.bf16.mxu0 0
    %988 = vmatpush1.bf16.msra.mxu0 0
    %989 = vmatprep.subr.bf16.mxu0 0
    %990 = vmatpush1.bf16.msra.mxu0 0
    %991 = vmatprep.subr.bf16.mxu0 0
    %992 = vmatpush1.bf16.msra.mxu0 0
    %993 = vmatprep.subr.bf16.mxu0 0
    %994 = vmatpush1.bf16.msra.mxu0 %v977
    %995 = vmatprep.subr.bf16.mxu0 0
    %996 = vmatpush2.bf16.msra.mxu0 0
    %997 = vmatprep.subr.bf16.mxu0 0
    %998 = vmatpush2.bf16.msra.mxu0 0
    %999 = vmatprep.subr.bf16.mxu0 0
    %1000 = vmatpush2.bf16.msra.mxu0 0
    %1001 = vmatprep.subr.bf16.mxu0 0
    %1002 = vmatpush2.bf16.msra.mxu0 0
    %1003 = vmatprep.subr.bf16.mxu0 0
    %1004 = vmatpush2.bf16.msra.mxu0 0
    %1005 = vmatprep.subr.bf16.mxu0 0
    %1006 = vmatpush2.bf16.msra.mxu0 0
    %1007 = vmatprep.subr.bf16.mxu0 0
    %1008 = vmatpush2.bf16.msra.mxu0 0
    %1009 = vmatprep.subr.bf16.mxu0 0
    %1010 = vmatpush2.bf16.msra.mxu0 0
    %1011 = vmatprep.mubr.bf16.mxu0 0
    %1012 = vmatmul.mubr.bf16.gmra.mxu0 %v974
    %v1013 = vpop.f32.mrf.mxu0
    %v1014 = vadd.f32 0.0, %v1013
    %v1015 = vpop.f32.mrf.mxu0
    %v1016 = vpop.f32.mrf.mxu0
    %v1017 = vpop.f32.mrf.mxu0
    %1018 = vdwg.mxu0
    %1019 = vrot.lane.b32.xlu0 %v192, 64
    %v1020 = vpop.permute.xlu0 %1019
    %v1022 = vsel %vm196, %v681, 0
    %v1025 = vsel %vm687, %v1020, 0
    %1027 = vmatprep.subr.bf16.mxu0 0
    %1028 = vmatpush1.bf16.msra.mxu0 0
    %1029 = vmatprep.subr.bf16.mxu0 0
    %1030 = vmatpush1.bf16.msra.mxu0 0
    %1031 = vmatprep.subr.bf16.mxu0 0
    %1032 = vmatpush1.bf16.msra.mxu0 0
    %1033 = vmatprep.subr.bf16.mxu0 0
    %1034 = vmatpush1.bf16.msra.mxu0 0
    %1035 = vmatprep.subr.bf16.mxu0 0
    %1036 = vmatpush1.bf16.msra.mxu0 0
    %1037 = vmatprep.subr.bf16.mxu0 0
    %1038 = vmatpush1.bf16.msra.mxu0 0
    %1039 = vmatprep.subr.bf16.mxu0 0
    %1040 = vmatpush1.bf16.msra.mxu0 0
    %1041 = vmatprep.subr.bf16.mxu0 0
    %1042 = vmatpush1.bf16.msra.mxu0 %v1025
    %1043 = vmatprep.subr.bf16.mxu0 0
    %1044 = vmatpush2.bf16.msra.mxu0 0
    %1045 = vmatprep.subr.bf16.mxu0 0
    %1046 = vmatpush2.bf16.msra.mxu0 0
    %1047 = vmatprep.subr.bf16.mxu0 0
    %1048 = vmatpush2.bf16.msra.mxu0 0
    %1049 = vmatprep.subr.bf16.mxu0 0
    %1050 = vmatpush2.bf16.msra.mxu0 0
    %1051 = vmatprep.subr.bf16.mxu0 0
    %1052 = vmatpush2.bf16.msra.mxu0 0
    %1053 = vmatprep.subr.bf16.mxu0 0
    %1054 = vmatpush2.bf16.msra.mxu0 0
    %1055 = vmatprep.subr.bf16.mxu0 0
    %1056 = vmatpush2.bf16.msra.mxu0 0
    %1057 = vmatprep.subr.bf16.mxu0 0
    %1058 = vmatpush2.bf16.msra.mxu0 0
    %1059 = vmatprep.mubr.bf16.mxu0 0
    %1060 = vmatmul.mubr.bf16.gmra.mxu0 %v1022
    %v1061 = vpop.f32.mrf.mxu0
    %v1062 = vadd.f32 0.0, %v1061
    %v1063 = vpop.f32.mrf.mxu0
    %v1064 = vpop.f32.mrf.mxu0
    %v1065 = vpop.f32.mrf.mxu0
    %1066 = vdwg.mxu0
    %1069 = vrot.lane.b32.xlu0 %v822, 8
    %v1070 = vpop.permute.xlu0 %1069
    %1071 = vrot.lane.b32.xlu0 %v870, 8
    %v1072 = vpop.permute.xlu0 %1071
    %1077 = vrot.lane.b32.xlu0 %v918, 16
    %v1078 = vpop.permute.xlu0 %1077
    %1079 = vrot.lane.b32.xlu0 %v966, 16
    %v1080 = vpop.permute.xlu0 %1079
    %1085 = vrot.lane.b32.xlu0 %v1014, 24
    %v1086 = vpop.permute.xlu0 %1085
    %1087 = vrot.lane.b32.xlu0 %v1062, 24
    %v1088 = vpop.permute.xlu0 %1087
    %v1091 = vsel %vm196, %v726, %v1070
    %v1092 = vsel %vm196, %v774, %v1072
    %vm1093 = vcmask 130048
    %v1094 = vsel %vm1093, %v1091, %v1078
    %v1095 = vsel %vm1093, %v1092, %v1080
    %vm1096 = vcmask 195584
    %v1097 = vsel %vm1096, %v1094, %v1086
    %v1098 = vsel %vm1096, %v1095, %v1088
    %v1099 = vpack.c.bf16 %v1098, %v1097
    %v1104 = vunpack.c.l.b16 %v37
    %v1105 = vunpack.c.l.b16 %v38
    %v1106 = vunpack.c.l.b16 %v39
    %v1107 = vunpack.c.l.b16 %v40
    %v1108 = vpack.c.b16 %v1105, %v1104
    %v1109 = vpack.c.b16 %v1107, %v1106
    %v1113 = vsel %vm64, %v1099, 0
    %1115 = vmatprep.subr.bf16.mxu0 0
    %1116 = vmatpush1.bf16.msra.mxu0 0
    %1117 = vmatprep.subr.bf16.mxu0 0
    %1118 = vmatpush1.bf16.msra.mxu0 0
    %1119 = vmatprep.subr.bf16.mxu0 0
    %1120 = vmatpush1.bf16.msra.mxu0 0
    %1121 = vmatprep.subr.bf16.mxu0 0
    %1122 = vmatpush1.bf16.msra.mxu0 0
    %1123 = vmatprep.subr.bf16.mxu0 0
    %1124 = vmatpush1.bf16.msra.mxu0 0
    %1125 = vmatprep.subr.bf16.mxu0 0
    %1126 = vmatpush1.bf16.msra.mxu0 0
    %1127 = vmatprep.subr.bf16.mxu0 0
    %1128 = vmatpush1.bf16.msra.mxu0 %v1109
    %1129 = vmatprep.subr.bf16.mxu0 0
    %1130 = vmatpush1.bf16.msra.mxu0 %v1108
    %1131 = vmatprep.subr.bf16.mxu0 0
    %1132 = vmatpush2.bf16.msra.mxu0 0
    %1133 = vmatprep.subr.bf16.mxu0 0
    %1134 = vmatpush2.bf16.msra.mxu0 0
    %1135 = vmatprep.subr.bf16.mxu0 0
    %1136 = vmatpush2.bf16.msra.mxu0 0
    %1137 = vmatprep.subr.bf16.mxu0 0
    %1138 = vmatpush2.bf16.msra.mxu0 0
    %1139 = vmatprep.subr.bf16.mxu0 0
    %1140 = vmatpush2.bf16.msra.mxu0 0
    %1141 = vmatprep.subr.bf16.mxu0 0
    %1142 = vmatpush2.bf16.msra.mxu0 0
    %1143 = vmatprep.subr.bf16.mxu0 0
    %1144 = vmatpush2.bf16.msra.mxu0 0
    %1145 = vmatprep.subr.bf16.mxu0 0
    %1146 = vmatpush2.bf16.msra.mxu0 0
    %1147 = vmatprep.mubr.bf16.mxu0 0
    %1148 = vmatmul.mubr.bf16.gmra.mxu0 %v1113
    %v1149 = vpop.f32.mrf.mxu0
    %v1150 = vadd.f32 0.0, %v1149
    %v1151 = vpop.f32.mrf.mxu0
    %v1152 = vpop.f32.mrf.mxu0
    %v1153 = vadd.f32 0.0, %v1152
    %v1154 = vpop.f32.mrf.mxu0
    %1155 = vdwg.mxu0
    %v1156 = vadd.f32 %v31, %v1150
    %v1157 = vadd.f32 %v32, %v1153
    %v1158 = vlaneseq
    %v1159 = vshrl.u32 %v1158, 7
    %v1160 = vsub.s32 2, %v1159
    %v1161 = vrot.slane %v61, %v1160
    %v1162 = vadd.f32 %v1156, %v1161
    %v1163 = vadd.f32 %v1157, %v1161
    %v1164 = vsel %vm64, %v1162, 0.0
    %1165 = vadd.xlane.f32.xlu0 %v1164
    %v1166 = vpop.xlane.xlu0 %1165
    %v1167 = vsel %vm64, %v1163, 0.0
    %1168 = vadd.xlane.f32.xlu0 %v1167
    %v1169 = vpop.xlane.xlu0 %1168
    %v1170 = vmul.f32 %v1166, %v71
    %v1171 = vmul.f32 %v1169, %v71
    %v1172 = vsub.f32 %v1162, %v1170
    %v1173 = vsub.f32 %v1163, %v1171
    %v1174 = vmul.f32 %v1172, %v1172
    %v1175 = vmul.f32 %v1173, %v1173
    %v1176 = vsel %vm64, %v1174, 0.0
    %1177 = vadd.xlane.f32.xlu0 %v1176
    %v1178 = vpop.xlane.xlu0 %1177
    %v1179 = vsel %vm64, %v1175, 0.0
    %1180 = vadd.xlane.f32.xlu0 %v1179
    %v1181 = vpop.xlane.xlu0 %1180
    %v1182 = vmul.f32 %v1178, %v71
    %v1183 = vmul.f32 %v1181, %v71
    %v1184 = vadd.f32 %v1182, 1e-05
    %v1185 = vadd.f32 %v1183, 1e-05
    %v1186 = vrsqrt.pop %v1184
    %v1187 = vrsqrt.pop %v1185
    %v1188 = vmul.f32 %v1172, %v1186
    %v1189 = vmul.f32 %v1173, %v1187
    %v1190 = vlaneseq
    %v1191 = vshrl.u32 %v1190, 7
    %v1192 = vsub.s32 3, %v1191
    %v1193 = vrot.slane %v61, %v1192
    %v1194 = vmul.f32 %v1188, %v1193
    %v1195 = vmul.f32 %v1189, %v1193
    %v1196 = vlaneseq
    %v1197 = vshrl.u32 %v1196, 7
    %v1198 = vsub.s32 4, %v1197
    %v1199 = vrot.slane %v61, %v1198
    %v1200 = vadd.f32 %v1194, %v1199
    %v1201 = vadd.f32 %v1195, %v1199
    %v1202 = vpack.c.bf16 %v1201, %v1200
    %v1203 = vlaneseq
    %v1204 = vshrl.u32 %v1203, 7
    %v1205 = vsub.s32 0, %v1204
    %v1206 = vrot.slane %v63, %v1205
    %v1211 = vunpack.c.l.b16 %v41
    %v1212 = vunpack.c.l.b16 %v42
    %v1213 = vunpack.c.l.b16 %v43
    %v1214 = vunpack.c.l.b16 %v44
    %v1215 = vpack.c.b16 %v1212, %v1211
    %v1216 = vpack.c.b16 %v1214, %v1213
    %v1220 = vsel %vm64, %v1202, 0
    %1222 = vmatprep.subr.bf16.mxu0 0
    %1223 = vmatpush1.bf16.msra.mxu0 0
    %1224 = vmatprep.subr.bf16.mxu0 0
    %1225 = vmatpush1.bf16.msra.mxu0 0
    %1226 = vmatprep.subr.bf16.mxu0 0
    %1227 = vmatpush1.bf16.msra.mxu0 0
    %1228 = vmatprep.subr.bf16.mxu0 0
    %1229 = vmatpush1.bf16.msra.mxu0 0
    %1230 = vmatprep.subr.bf16.mxu0 0
    %1231 = vmatpush1.bf16.msra.mxu0 0
    %1232 = vmatprep.subr.bf16.mxu0 0
    %1233 = vmatpush1.bf16.msra.mxu0 0
    %1234 = vmatprep.subr.bf16.mxu0 0
    %1235 = vmatpush1.bf16.msra.mxu0 %v1216
    %1236 = vmatprep.subr.bf16.mxu0 0
    %1237 = vmatpush1.bf16.msra.mxu0 %v1215
    %1238 = vmatprep.subr.bf16.mxu0 0
    %1239 = vmatpush2.bf16.msra.mxu0 0
    %1240 = vmatprep.subr.bf16.mxu0 0
    %1241 = vmatpush2.bf16.msra.mxu0 0
    %1242 = vmatprep.subr.bf16.mxu0 0
    %1243 = vmatpush2.bf16.msra.mxu0 0
    %1244 = vmatprep.subr.bf16.mxu0 0
    %1245 = vmatpush2.bf16.msra.mxu0 0
    %1246 = vmatprep.subr.bf16.mxu0 0
    %1247 = vmatpush2.bf16.msra.mxu0 0
    %1248 = vmatprep.subr.bf16.mxu0 0
    %1249 = vmatpush2.bf16.msra.mxu0 0
    %1250 = vmatprep.subr.bf16.mxu0 0
    %1251 = vmatpush2.bf16.msra.mxu0 0
    %1252 = vmatprep.subr.bf16.mxu0 0
    %1253 = vmatpush2.bf16.msra.mxu0 0
    %1254 = vmatprep.mubr.bf16.mxu0 0
    %1255 = vmatmul.mubr.bf16.gmra.mxu0 %v1220
    %v1256 = vpop.f32.mrf.mxu0
    %v1257 = vadd.f32 %v1206, %v1256
    %v1258 = vpop.f32.mrf.mxu0
    %v1259 = vpop.f32.mrf.mxu0
    %v1260 = vadd.f32 %v1206, %v1259
    %v1261 = vpop.f32.mrf.mxu0
    %1262 = vdwg.mxu0
    %v1263 = vmul.f32 %v1257, 0.5
    %v1264 = vmul.f32 %v1260, 0.5
    %v1265 = vmul.f32 %v1257, 0.70710677
    %v1266 = vmul.f32 %v1260, 0.70710677
    %v1267 = verf.f32.pop %v1265
    %v1268 = verf.f32.pop %v1266
    %v1269 = vadd.f32 %v1267, 1.0
    %v1270 = vadd.f32 %v1268, 1.0
    %v1271 = vmul.f32 %v1263, %v1269
    %v1272 = vmul.f32 %v1264, %v1270
    %v1273 = vpack.c.bf16 %v1272, %v1271
    %v1274 = vlaneseq
    %v1275 = vshrl.u32 %v1274, 7
    %v1276 = vsub.s32 5, %v1275
    %v1277 = vrot.slane %v61, %v1276
    %v1294 = vunpack.c.l.b16 %v45
    %v1295 = vunpack.c.l.b16 %v46
    %v1296 = vunpack.c.l.b16 %v47
    %v1297 = vunpack.c.l.b16 %v48
    %v1298 = vunpack.c.l.b16 %v49
    %v1299 = vunpack.c.l.b16 %v50
    %v1300 = vunpack.c.l.b16 %v51
    %v1301 = vunpack.c.l.b16 %v52
    %v1302 = vunpack.c.l.b16 %v53
    %v1303 = vunpack.c.l.b16 %v54
    %v1304 = vunpack.c.l.b16 %v55
    %v1305 = vunpack.c.l.b16 %v56
    %v1306 = vunpack.c.l.b16 %v57
    %v1307 = vunpack.c.l.b16 %v58
    %v1308 = vunpack.c.l.b16 %v59
    %v1309 = vunpack.c.l.b16 %v60
    %v1310 = vpack.c.b16 %v1295, %v1294
    %v1311 = vpack.c.b16 %v1297, %v1296
    %v1312 = vpack.c.b16 %v1299, %v1298
    %v1313 = vpack.c.b16 %v1301, %v1300
    %v1314 = vpack.c.b16 %v1303, %v1302
    %v1315 = vpack.c.b16 %v1305, %v1304
    %v1316 = vpack.c.b16 %v1307, %v1306
    %v1317 = vpack.c.b16 %v1309, %v1308
    %1326 = vmatprep.subr.bf16.mxu0 0
    %1327 = vmatpush1.bf16.msra.mxu0 %v1317
    %1328 = vmatprep.subr.bf16.mxu0 0
    %1329 = vmatpush1.bf16.msra.mxu0 %v1316
    %1330 = vmatprep.subr.bf16.mxu0 0
    %1331 = vmatpush1.bf16.msra.mxu0 %v1315
    %1332 = vmatprep.subr.bf16.mxu0 0
    %1333 = vmatpush1.bf16.msra.mxu0 %v1314
    %1334 = vmatprep.subr.bf16.mxu0 0
    %1335 = vmatpush1.bf16.msra.mxu0 %v1313
    %1336 = vmatprep.subr.bf16.mxu0 0
    %1337 = vmatpush1.bf16.msra.mxu0 %v1312
    %1338 = vmatprep.subr.bf16.mxu0 0
    %1339 = vmatpush1.bf16.msra.mxu0 %v1311
    %1340 = vmatprep.subr.bf16.mxu0 0
    %1341 = vmatpush1.bf16.msra.mxu0 %v1310
    %1342 = vmatprep.subr.bf16.mxu0 0
    %1343 = vmatpush2.bf16.msra.mxu0 0
    %1344 = vmatprep.subr.bf16.mxu0 0
    %1345 = vmatpush2.bf16.msra.mxu0 0
    %1346 = vmatprep.subr.bf16.mxu0 0
    %1347 = vmatpush2.bf16.msra.mxu0 0
    %1348 = vmatprep.subr.bf16.mxu0 0
    %1349 = vmatpush2.bf16.msra.mxu0 0
    %1350 = vmatprep.subr.bf16.mxu0 0
    %1351 = vmatpush2.bf16.msra.mxu0 0
    %1352 = vmatprep.subr.bf16.mxu0 0
    %1353 = vmatpush2.bf16.msra.mxu0 0
    %1354 = vmatprep.subr.bf16.mxu0 0
    %1355 = vmatpush2.bf16.msra.mxu0 0
    %1356 = vmatprep.subr.bf16.mxu0 0
    %1357 = vmatpush2.bf16.msra.mxu0 0
    %1358 = vmatprep.mubr.bf16.mxu0 0
    %1359 = vmatmul.mubr.bf16.gmra.mxu0 %v1273
    %v1360 = vpop.f32.mrf.mxu0
    %v1361 = vadd.f32 %v1277, %v1360
    %v1362 = vpop.f32.mrf.mxu0
    %v1363 = vpop.f32.mrf.mxu0
    %v1364 = vadd.f32 %v1277, %v1363
    %v1365 = vpop.f32.mrf.mxu0
    %1366 = vdwg.mxu0
    %v1367 = vadd.f32 %v1162, %v1361
    %v1368 = vadd.f32 %v1163, %v1364
    %s1369 = scalar_lea.vmem %s1, 16
    %v1370 = vld [vmem:[%s1369] sm:$0xf]
    %v1371 = vld [vmem:[%s1369 + $0x4] sm:$0xf]
    %v1372 = vld [vmem:[%s1369 + $0x8] sm:$0xf]
    %v1373 = vld [vmem:[%s1369 + $0xc] sm:$0xf]
    %s1374 = scalar_lea.vmem %s2, 16
    %v1375 = vld [vmem:[%s1374] sm:$0xf]
    %v1376 = vld [vmem:[%s1374 + $0x4] sm:$0xf]
    %v1377 = vld [vmem:[%s1374 + $0x8] sm:$0xf]
    %v1378 = vld [vmem:[%s1374 + $0xc] sm:$0xf]
    %s1379 = scalar_lea.vmem %s3, 16
    %v1380 = vld [vmem:[%s1379] sm:$0xf]
    %v1381 = vld [vmem:[%s1379 + $0x4] sm:$0xf]
    %v1382 = vld [vmem:[%s1379 + $0x8] sm:$0xf]
    %v1383 = vld [vmem:[%s1379 + $0xc] sm:$0xf]
    %s1384 = scalar_lea.vmem %s4, 64
    %v1385 = vld [vmem:[%s1384] sm:$0xf]
    %v1386 = vld [vmem:[%s1384 + $0x4] sm:$0xf]
    %v1387 = vld [vmem:[%s1384 + $0x8] sm:$0xf]
    %v1388 = vld [vmem:[%s1384 + $0xc] sm:$0xf]
    %v1389 = vld [vmem:[%s1384 + $0x10] sm:$0xf]
    %v1390 = vld [vmem:[%s1384 + $0x14] sm:$0xf]
    %v1391 = vld [vmem:[%s1384 + $0x18] sm:$0xf]
    %v1392 = vld [vmem:[%s1384 + $0x1c] sm:$0xf]
    %v1393 = vld [vmem:[%s1384 + $0x20] sm:$0xf]
    %v1394 = vld [vmem:[%s1384 + $0x24] sm:$0xf]
    %v1395 = vld [vmem:[%s1384 + $0x28] sm:$0xf]
    %v1396 = vld [vmem:[%s1384 + $0x2c] sm:$0xf]
    %v1397 = vld [vmem:[%s1384 + $0x30] sm:$0xf]
    %v1398 = vld [vmem:[%s1384 + $0x34] sm:$0xf]
    %v1399 = vld [vmem:[%s1384 + $0x38] sm:$0xf]
    %v1400 = vld [vmem:[%s1384 + $0x3c] sm:$0xf]
    %s1401 = scalar_lea.vmem %s5, 8
    %v1402 = vld [vmem:[%s1401] sm:$0x3f]
    %v1403 = vld [vmem:[%s6 + $0x1] sm:$0x1]
    %v1404 = vld [vmem:[%s7 + $0x1] sm:$0x1]
    %v1405 = vsel %vm64, %v1367, 0.0
    %1406 = vadd.xlane.f32.xlu0 %v1405
    %v1407 = vpop.xlane.xlu0 %1406
    %v1408 = vsel %vm64, %v1368, 0.0
    %1409 = vadd.xlane.f32.xlu0 %v1408
    %v1410 = vpop.xlane.xlu0 %1409
    %v1411 = vmul.f32 %v1407, %v71
    %v1412 = vmul.f32 %v1410, %v71
    %v1413 = vsub.f32 %v1367, %v1411
    %v1414 = vsub.f32 %v1368, %v1412
    %v1415 = vmul.f32 %v1413, %v1413
    %v1416 = vmul.f32 %v1414, %v1414
    %v1417 = vsel %vm64, %v1415, 0.0
    %1418 = vadd.xlane.f32.xlu0 %v1417
    %v1419 = vpop.xlane.xlu0 %1418
    %v1420 = vsel %vm64, %v1416, 0.0
    %1421 = vadd.xlane.f32.xlu0 %v1420
    %v1422 = vpop.xlane.xlu0 %1421
    %v1423 = vmul.f32 %v1419, %v71
    %v1424 = vmul.f32 %v1422, %v71
    %v1425 = vadd.f32 %v1423, 1e-05
    %v1426 = vadd.f32 %v1424, 1e-05
    %v1427 = vrsqrt.pop %v1425
    %v1428 = vrsqrt.pop %v1426
    %v1429 = vmul.f32 %v1413, %v1427
    %v1430 = vmul.f32 %v1414, %v1428
    %v1431 = vlaneseq
    %v1432 = vshrl.u32 %v1431, 7
    %v1433 = vsub.s32 0, %v1432
    %v1434 = vrot.slane %v1402, %v1433
    %v1435 = vmul.f32 %v1429, %v1434
    %v1436 = vmul.f32 %v1430, %v1434
    %v1437 = vlaneseq
    %v1438 = vshrl.u32 %v1437, 7
    %v1439 = vsub.s32 1, %v1438
    %v1440 = vrot.slane %v1402, %v1439
    %v1441 = vadd.f32 %v1435, %v1440
    %v1442 = vadd.f32 %v1436, %v1440
    %v1443 = vpack.c.bf16 %v1442, %v1441
    %v1444 = vlaneseq
    %v1445 = vshrl.u32 %v1444, 7
    %v1446 = vsub.s32 0, %v1445
    %v1447 = vrot.slane %v1403, %v1446
    %v1452 = vunpack.c.l.b16 %v1370
    %v1453 = vunpack.c.l.b16 %v1371
    %v1454 = vunpack.c.l.b16 %v1372
    %v1455 = vunpack.c.l.b16 %v1373
    %v1456 = vpack.c.b16 %v1453, %v1452
    %v1457 = vpack.c.b16 %v1455, %v1454
    %v1461 = vsel %vm64, %v1443, 0
    %1463 = vmatprep.subr.bf16.mxu0 0
    %1464 = vmatpush1.bf16.msra.mxu0 0
    %1465 = vmatprep.subr.bf16.mxu0 0
    %1466 = vmatpush1.bf16.msra.mxu0 0
    %1467 = vmatprep.subr.bf16.mxu0 0
    %1468 = vmatpush1.bf16.msra.mxu0 0
    %1469 = vmatprep.subr.bf16.mxu0 0
    %1470 = vmatpush1.bf16.msra.mxu0 0
    %1471 = vmatprep.subr.bf16.mxu0 0
    %1472 = vmatpush1.bf16.msra.mxu0 0
    %1473 = vmatprep.subr.bf16.mxu0 0
    %1474 = vmatpush1.bf16.msra.mxu0 0
    %1475 = vmatprep.subr.bf16.mxu0 0
    %1476 = vmatpush1.bf16.msra.mxu0 %v1457
    %1477 = vmatprep.subr.bf16.mxu0 0
    %1478 = vmatpush1.bf16.msra.mxu0 %v1456
    %1479 = vmatprep.subr.bf16.mxu0 0
    %1480 = vmatpush2.bf16.msra.mxu0 0
    %1481 = vmatprep.subr.bf16.mxu0 0
    %1482 = vmatpush2.bf16.msra.mxu0 0
    %1483 = vmatprep.subr.bf16.mxu0 0
    %1484 = vmatpush2.bf16.msra.mxu0 0
    %1485 = vmatprep.subr.bf16.mxu0 0
    %1486 = vmatpush2.bf16.msra.mxu0 0
    %1487 = vmatprep.subr.bf16.mxu0 0
    %1488 = vmatpush2.bf16.msra.mxu0 0
    %1489 = vmatprep.subr.bf16.mxu0 0
    %1490 = vmatpush2.bf16.msra.mxu0 0
    %1491 = vmatprep.subr.bf16.mxu0 0
    %1492 = vmatpush2.bf16.msra.mxu0 0
    %1493 = vmatprep.subr.bf16.mxu0 0
    %1494 = vmatpush2.bf16.msra.mxu0 0
    %1495 = vmatprep.mubr.bf16.mxu0 0
    %1496 = vmatmul.mubr.bf16.gmra.mxu0 %v1461
    %v1497 = vpop.f32.mrf.mxu0
    %v1498 = vadd.f32 %v1447, %v1497
    %v1499 = vpop.f32.mrf.mxu0
    %v1500 = vpop.f32.mrf.mxu0
    %v1501 = vadd.f32 %v1447, %v1500
    %v1502 = vpop.f32.mrf.mxu0
    %1503 = vdwg.mxu0
    %1506 = vrot.lane.b32.xlu0 %v1498, 120
    %v1507 = vpop.permute.xlu0 %1506
    %1508 = vrot.lane.b32.xlu0 %v1501, 120
    %v1509 = vpop.permute.xlu0 %1508
    %1512 = vrot.lane.b32.xlu0 %v1498, 112
    %v1513 = vpop.permute.xlu0 %1512
    %1514 = vrot.lane.b32.xlu0 %v1501, 112
    %v1515 = vpop.permute.xlu0 %1514
    %1518 = vrot.lane.b32.xlu0 %v1498, 104
    %v1519 = vpop.permute.xlu0 %1518
    %1520 = vrot.lane.b32.xlu0 %v1501, 104
    %v1521 = vpop.permute.xlu0 %1520
    %v1524 = vpack.c.bf16 %v1498, %v1498
    %v1525 = vpack.c.bf16 %v1501, %v1501
    %v1526 = vpack.c.bf16 %v1507, %v1507
    %v1527 = vpack.c.bf16 %v1509, %v1509
    %v1528 = vpack.c.bf16 %v1513, %v1513
    %v1529 = vpack.c.bf16 %v1515, %v1515
    %v1530 = vpack.c.bf16 %v1519, %v1519
    %v1531 = vpack.c.bf16 %v1521, %v1521
    %1533 = vrot.lane.b32.xlu0 %v1524, 96
    %v1534 = vpop.permute.xlu0 %1533
    %v1536 = vsel %vm196, %v1524, 0
    %v1539 = vsel %vm196, %v1534, 0
    %1541 = vmatprep.subr.bf16.mxu0 0
    %1542 = vmatpush1.bf16.xpose.msra.mxu0 0
    %1543 = vmatprep.subr.bf16.mxu0 0
    %1544 = vmatpush1.bf16.xpose.msra.mxu0 0
    %1545 = vmatprep.subr.bf16.mxu0 0
    %1546 = vmatpush1.bf16.xpose.msra.mxu0 0
    %1547 = vmatprep.subr.bf16.mxu0 0
    %1548 = vmatpush1.bf16.xpose.msra.mxu0 0
    %1549 = vmatprep.subr.bf16.mxu0 0
    %1550 = vmatpush1.bf16.xpose.msra.mxu0 0
    %1551 = vmatprep.subr.bf16.mxu0 0
    %1552 = vmatpush1.bf16.xpose.msra.mxu0 0
    %1553 = vmatprep.subr.bf16.mxu0 0
    %1554 = vmatpush1.bf16.xpose.msra.mxu0 0
    %1555 = vmatprep.subr.bf16.mxu0 0
    %1556 = vmatpush1.bf16.xpose.msra.mxu0 %v1539
    %1557 = vmatprep.subr.bf16.mxu0 0
    %1558 = vmatpush2.bf16.xpose.msra.mxu0 0
    %1559 = vmatprep.subr.bf16.mxu0 0
    %1560 = vmatpush2.bf16.xpose.msra.mxu0 0
    %1561 = vmatprep.subr.bf16.mxu0 0
    %1562 = vmatpush2.bf16.xpose.msra.mxu0 0
    %1563 = vmatprep.subr.bf16.mxu0 0
    %1564 = vmatpush2.bf16.xpose.msra.mxu0 0
    %1565 = vmatprep.subr.bf16.mxu0 0
    %1566 = vmatpush2.bf16.xpose.msra.mxu0 0
    %1567 = vmatprep.subr.bf16.mxu0 0
    %1568 = vmatpush2.bf16.xpose.msra.mxu0 0
    %1569 = vmatprep.subr.bf16.mxu0 0
    %1570 = vmatpush2.bf16.xpose.msra.mxu0 0
    %1571 = vmatprep.subr.bf16.mxu0 0
    %1572 = vmatpush2.bf16.xpose.msra.mxu0 0
    %1573 = vmatprep.mubr.bf16.mxu0 0
    %1574 = vmatmul.mubr.bf16.gmra.mxu0 %v1536
    %v1575 = vpop.f32.mrf.mxu0
    %v1576 = vadd.f32 0.0, %v1575
    %v1577 = vpop.f32.mrf.mxu0
    %v1578 = vpop.f32.mrf.mxu0
    %v1579 = vpop.f32.mrf.mxu0
    %1580 = vdwg.mxu0
    %1582 = vrot.lane.b32.xlu0 %v1525, 96
    %v1583 = vpop.permute.xlu0 %1582
    %v1585 = vsel %vm196, %v1525, 0
    %v1588 = vsel %vm196, %v1583, 0
    %1590 = vmatprep.subr.bf16.mxu0 0
    %1591 = vmatpush1.bf16.xpose.msra.mxu0 0
    %1592 = vmatprep.subr.bf16.mxu0 0
    %1593 = vmatpush1.bf16.xpose.msra.mxu0 0
    %1594 = vmatprep.subr.bf16.mxu0 0
    %1595 = vmatpush1.bf16.xpose.msra.mxu0 0
    %1596 = vmatprep.subr.bf16.mxu0 0
    %1597 = vmatpush1.bf16.xpose.msra.mxu0 0
    %1598 = vmatprep.subr.bf16.mxu0 0
    %1599 = vmatpush1.bf16.xpose.msra.mxu0 0
    %1600 = vmatprep.subr.bf16.mxu0 0
    %1601 = vmatpush1.bf16.xpose.msra.mxu0 0
    %1602 = vmatprep.subr.bf16.mxu0 0
    %1603 = vmatpush1.bf16.xpose.msra.mxu0 0
    %1604 = vmatprep.subr.bf16.mxu0 0
    %1605 = vmatpush1.bf16.xpose.msra.mxu0 %v1588
    %1606 = vmatprep.subr.bf16.mxu0 0
    %1607 = vmatpush2.bf16.xpose.msra.mxu0 0
    %1608 = vmatprep.subr.bf16.mxu0 0
    %1609 = vmatpush2.bf16.xpose.msra.mxu0 0
    %1610 = vmatprep.subr.bf16.mxu0 0
    %1611 = vmatpush2.bf16.xpose.msra.mxu0 0
    %1612 = vmatprep.subr.bf16.mxu0 0
    %1613 = vmatpush2.bf16.xpose.msra.mxu0 0
    %1614 = vmatprep.subr.bf16.mxu0 0
    %1615 = vmatpush2.bf16.xpose.msra.mxu0 0
    %1616 = vmatprep.subr.bf16.mxu0 0
    %1617 = vmatpush2.bf16.xpose.msra.mxu0 0
    %1618 = vmatprep.subr.bf16.mxu0 0
    %1619 = vmatpush2.bf16.xpose.msra.mxu0 0
    %1620 = vmatprep.subr.bf16.mxu0 0
    %1621 = vmatpush2.bf16.xpose.msra.mxu0 0
    %1622 = vmatprep.mubr.bf16.mxu0 0
    %1623 = vmatmul.mubr.bf16.gmra.mxu0 %v1585
    %v1624 = vpop.f32.mrf.mxu0
    %v1625 = vadd.f32 0.0, %v1624
    %v1626 = vpop.f32.mrf.mxu0
    %v1627 = vpop.f32.mrf.mxu0
    %v1628 = vpop.f32.mrf.mxu0
    %1629 = vdwg.mxu0
    %1631 = vrot.lane.b32.xlu0 %v1526, 96
    %v1632 = vpop.permute.xlu0 %1631
    %v1634 = vsel %vm196, %v1526, 0
    %v1637 = vsel %vm196, %v1632, 0
    %1639 = vmatprep.subr.bf16.mxu0 0
    %1640 = vmatpush1.bf16.xpose.msra.mxu0 0
    %1641 = vmatprep.subr.bf16.mxu0 0
    %1642 = vmatpush1.bf16.xpose.msra.mxu0 0
    %1643 = vmatprep.subr.bf16.mxu0 0
    %1644 = vmatpush1.bf16.xpose.msra.mxu0 0
    %1645 = vmatprep.subr.bf16.mxu0 0
    %1646 = vmatpush1.bf16.xpose.msra.mxu0 0
    %1647 = vmatprep.subr.bf16.mxu0 0
    %1648 = vmatpush1.bf16.xpose.msra.mxu0 0
    %1649 = vmatprep.subr.bf16.mxu0 0
    %1650 = vmatpush1.bf16.xpose.msra.mxu0 0
    %1651 = vmatprep.subr.bf16.mxu0 0
    %1652 = vmatpush1.bf16.xpose.msra.mxu0 0
    %1653 = vmatprep.subr.bf16.mxu0 0
    %1654 = vmatpush1.bf16.xpose.msra.mxu0 %v1637
    %1655 = vmatprep.subr.bf16.mxu0 0
    %1656 = vmatpush2.bf16.xpose.msra.mxu0 0
    %1657 = vmatprep.subr.bf16.mxu0 0
    %1658 = vmatpush2.bf16.xpose.msra.mxu0 0
    %1659 = vmatprep.subr.bf16.mxu0 0
    %1660 = vmatpush2.bf16.xpose.msra.mxu0 0
    %1661 = vmatprep.subr.bf16.mxu0 0
    %1662 = vmatpush2.bf16.xpose.msra.mxu0 0
    %1663 = vmatprep.subr.bf16.mxu0 0
    %1664 = vmatpush2.bf16.xpose.msra.mxu0 0
    %1665 = vmatprep.subr.bf16.mxu0 0
    %1666 = vmatpush2.bf16.xpose.msra.mxu0 0
    %1667 = vmatprep.subr.bf16.mxu0 0
    %1668 = vmatpush2.bf16.xpose.msra.mxu0 0
    %1669 = vmatprep.subr.bf16.mxu0 0
    %1670 = vmatpush2.bf16.xpose.msra.mxu0 0
    %1671 = vmatprep.mubr.bf16.mxu0 0
    %1672 = vmatmul.mubr.bf16.gmra.mxu0 %v1634
    %v1673 = vpop.f32.mrf.mxu0
    %v1674 = vadd.f32 0.0, %v1673
    %v1675 = vpop.f32.mrf.mxu0
    %v1676 = vpop.f32.mrf.mxu0
    %v1677 = vpop.f32.mrf.mxu0
    %1678 = vdwg.mxu0
    %1680 = vrot.lane.b32.xlu0 %v1527, 96
    %v1681 = vpop.permute.xlu0 %1680
    %v1683 = vsel %vm196, %v1527, 0
    %v1686 = vsel %vm196, %v1681, 0
    %1688 = vmatprep.subr.bf16.mxu0 0
    %1689 = vmatpush1.bf16.xpose.msra.mxu0 0
    %1690 = vmatprep.subr.bf16.mxu0 0
    %1691 = vmatpush1.bf16.xpose.msra.mxu0 0
    %1692 = vmatprep.subr.bf16.mxu0 0
    %1693 = vmatpush1.bf16.xpose.msra.mxu0 0
    %1694 = vmatprep.subr.bf16.mxu0 0
    %1695 = vmatpush1.bf16.xpose.msra.mxu0 0
    %1696 = vmatprep.subr.bf16.mxu0 0
    %1697 = vmatpush1.bf16.xpose.msra.mxu0 0
    %1698 = vmatprep.subr.bf16.mxu0 0
    %1699 = vmatpush1.bf16.xpose.msra.mxu0 0
    %1700 = vmatprep.subr.bf16.mxu0 0
    %1701 = vmatpush1.bf16.xpose.msra.mxu0 0
    %1702 = vmatprep.subr.bf16.mxu0 0
    %1703 = vmatpush1.bf16.xpose.msra.mxu0 %v1686
    %1704 = vmatprep.subr.bf16.mxu0 0
    %1705 = vmatpush2.bf16.xpose.msra.mxu0 0
    %1706 = vmatprep.subr.bf16.mxu0 0
    %1707 = vmatpush2.bf16.xpose.msra.mxu0 0
    %1708 = vmatprep.subr.bf16.mxu0 0
    %1709 = vmatpush2.bf16.xpose.msra.mxu0 0
    %1710 = vmatprep.subr.bf16.mxu0 0
    %1711 = vmatpush2.bf16.xpose.msra.mxu0 0
    %1712 = vmatprep.subr.bf16.mxu0 0
    %1713 = vmatpush2.bf16.xpose.msra.mxu0 0
    %1714 = vmatprep.subr.bf16.mxu0 0
    %1715 = vmatpush2.bf16.xpose.msra.mxu0 0
    %1716 = vmatprep.subr.bf16.mxu0 0
    %1717 = vmatpush2.bf16.xpose.msra.mxu0 0
    %1718 = vmatprep.subr.bf16.mxu0 0
    %1719 = vmatpush2.bf16.xpose.msra.mxu0 0
    %1720 = vmatprep.mubr.bf16.mxu0 0
    %1721 = vmatmul.mubr.bf16.gmra.mxu0 %v1683
    %v1722 = vpop.f32.mrf.mxu0
    %v1723 = vadd.f32 0.0, %v1722
    %v1724 = vpop.f32.mrf.mxu0
    %v1725 = vpop.f32.mrf.mxu0
    %v1726 = vpop.f32.mrf.mxu0
    %1727 = vdwg.mxu0
    %1729 = vrot.lane.b32.xlu0 %v1528, 96
    %v1730 = vpop.permute.xlu0 %1729
    %v1732 = vsel %vm196, %v1528, 0
    %v1735 = vsel %vm196, %v1730, 0
    %1737 = vmatprep.subr.bf16.mxu0 0
    %1738 = vmatpush1.bf16.xpose.msra.mxu0 0
    %1739 = vmatprep.subr.bf16.mxu0 0
    %1740 = vmatpush1.bf16.xpose.msra.mxu0 0
    %1741 = vmatprep.subr.bf16.mxu0 0
    %1742 = vmatpush1.bf16.xpose.msra.mxu0 0
    %1743 = vmatprep.subr.bf16.mxu0 0
    %1744 = vmatpush1.bf16.xpose.msra.mxu0 0
    %1745 = vmatprep.subr.bf16.mxu0 0
    %1746 = vmatpush1.bf16.xpose.msra.mxu0 0
    %1747 = vmatprep.subr.bf16.mxu0 0
    %1748 = vmatpush1.bf16.xpose.msra.mxu0 0
    %1749 = vmatprep.subr.bf16.mxu0 0
    %1750 = vmatpush1.bf16.xpose.msra.mxu0 0
    %1751 = vmatprep.subr.bf16.mxu0 0
    %1752 = vmatpush1.bf16.xpose.msra.mxu0 %v1735
    %1753 = vmatprep.subr.bf16.mxu0 0
    %1754 = vmatpush2.bf16.xpose.msra.mxu0 0
    %1755 = vmatprep.subr.bf16.mxu0 0
    %1756 = vmatpush2.bf16.xpose.msra.mxu0 0
    %1757 = vmatprep.subr.bf16.mxu0 0
    %1758 = vmatpush2.bf16.xpose.msra.mxu0 0
    %1759 = vmatprep.subr.bf16.mxu0 0
    %1760 = vmatpush2.bf16.xpose.msra.mxu0 0
    %1761 = vmatprep.subr.bf16.mxu0 0
    %1762 = vmatpush2.bf16.xpose.msra.mxu0 0
    %1763 = vmatprep.subr.bf16.mxu0 0
    %1764 = vmatpush2.bf16.xpose.msra.mxu0 0
    %1765 = vmatprep.subr.bf16.mxu0 0
    %1766 = vmatpush2.bf16.xpose.msra.mxu0 0
    %1767 = vmatprep.subr.bf16.mxu0 0
    %1768 = vmatpush2.bf16.xpose.msra.mxu0 0
    %1769 = vmatprep.mubr.bf16.mxu0 0
    %1770 = vmatmul.mubr.bf16.gmra.mxu0 %v1732
    %v1771 = vpop.f32.mrf.mxu0
    %v1772 = vadd.f32 0.0, %v1771
    %v1773 = vpop.f32.mrf.mxu0
    %v1774 = vpop.f32.mrf.mxu0
    %v1775 = vpop.f32.mrf.mxu0
    %1776 = vdwg.mxu0
    %1778 = vrot.lane.b32.xlu0 %v1529, 96
    %v1779 = vpop.permute.xlu0 %1778
    %v1781 = vsel %vm196, %v1529, 0
    %v1784 = vsel %vm196, %v1779, 0
    %1786 = vmatprep.subr.bf16.mxu0 0
    %1787 = vmatpush1.bf16.xpose.msra.mxu0 0
    %1788 = vmatprep.subr.bf16.mxu0 0
    %1789 = vmatpush1.bf16.xpose.msra.mxu0 0
    %1790 = vmatprep.subr.bf16.mxu0 0
    %1791 = vmatpush1.bf16.xpose.msra.mxu0 0
    %1792 = vmatprep.subr.bf16.mxu0 0
    %1793 = vmatpush1.bf16.xpose.msra.mxu0 0
    %1794 = vmatprep.subr.bf16.mxu0 0
    %1795 = vmatpush1.bf16.xpose.msra.mxu0 0
    %1796 = vmatprep.subr.bf16.mxu0 0
    %1797 = vmatpush1.bf16.xpose.msra.mxu0 0
    %1798 = vmatprep.subr.bf16.mxu0 0
    %1799 = vmatpush1.bf16.xpose.msra.mxu0 0
    %1800 = vmatprep.subr.bf16.mxu0 0
    %1801 = vmatpush1.bf16.xpose.msra.mxu0 %v1784
    %1802 = vmatprep.subr.bf16.mxu0 0
    %1803 = vmatpush2.bf16.xpose.msra.mxu0 0
    %1804 = vmatprep.subr.bf16.mxu0 0
    %1805 = vmatpush2.bf16.xpose.msra.mxu0 0
    %1806 = vmatprep.subr.bf16.mxu0 0
    %1807 = vmatpush2.bf16.xpose.msra.mxu0 0
    %1808 = vmatprep.subr.bf16.mxu0 0
    %1809 = vmatpush2.bf16.xpose.msra.mxu0 0
    %1810 = vmatprep.subr.bf16.mxu0 0
    %1811 = vmatpush2.bf16.xpose.msra.mxu0 0
    %1812 = vmatprep.subr.bf16.mxu0 0
    %1813 = vmatpush2.bf16.xpose.msra.mxu0 0
    %1814 = vmatprep.subr.bf16.mxu0 0
    %1815 = vmatpush2.bf16.xpose.msra.mxu0 0
    %1816 = vmatprep.subr.bf16.mxu0 0
    %1817 = vmatpush2.bf16.xpose.msra.mxu0 0
    %1818 = vmatprep.mubr.bf16.mxu0 0
    %1819 = vmatmul.mubr.bf16.gmra.mxu0 %v1781
    %v1820 = vpop.f32.mrf.mxu0
    %v1821 = vadd.f32 0.0, %v1820
    %v1822 = vpop.f32.mrf.mxu0
    %v1823 = vpop.f32.mrf.mxu0
    %v1824 = vpop.f32.mrf.mxu0
    %1825 = vdwg.mxu0
    %1827 = vrot.lane.b32.xlu0 %v1530, 96
    %v1828 = vpop.permute.xlu0 %1827
    %v1830 = vsel %vm196, %v1530, 0
    %v1833 = vsel %vm196, %v1828, 0
    %1835 = vmatprep.subr.bf16.mxu0 0
    %1836 = vmatpush1.bf16.xpose.msra.mxu0 0
    %1837 = vmatprep.subr.bf16.mxu0 0
    %1838 = vmatpush1.bf16.xpose.msra.mxu0 0
    %1839 = vmatprep.subr.bf16.mxu0 0
    %1840 = vmatpush1.bf16.xpose.msra.mxu0 0
    %1841 = vmatprep.subr.bf16.mxu0 0
    %1842 = vmatpush1.bf16.xpose.msra.mxu0 0
    %1843 = vmatprep.subr.bf16.mxu0 0
    %1844 = vmatpush1.bf16.xpose.msra.mxu0 0
    %1845 = vmatprep.subr.bf16.mxu0 0
    %1846 = vmatpush1.bf16.xpose.msra.mxu0 0
    %1847 = vmatprep.subr.bf16.mxu0 0
    %1848 = vmatpush1.bf16.xpose.msra.mxu0 0
    %1849 = vmatprep.subr.bf16.mxu0 0
    %1850 = vmatpush1.bf16.xpose.msra.mxu0 %v1833
    %1851 = vmatprep.subr.bf16.mxu0 0
    %1852 = vmatpush2.bf16.xpose.msra.mxu0 0
    %1853 = vmatprep.subr.bf16.mxu0 0
    %1854 = vmatpush2.bf16.xpose.msra.mxu0 0
    %1855 = vmatprep.subr.bf16.mxu0 0
    %1856 = vmatpush2.bf16.xpose.msra.mxu0 0
    %1857 = vmatprep.subr.bf16.mxu0 0
    %1858 = vmatpush2.bf16.xpose.msra.mxu0 0
    %1859 = vmatprep.subr.bf16.mxu0 0
    %1860 = vmatpush2.bf16.xpose.msra.mxu0 0
    %1861 = vmatprep.subr.bf16.mxu0 0
    %1862 = vmatpush2.bf16.xpose.msra.mxu0 0
    %1863 = vmatprep.subr.bf16.mxu0 0
    %1864 = vmatpush2.bf16.xpose.msra.mxu0 0
    %1865 = vmatprep.subr.bf16.mxu0 0
    %1866 = vmatpush2.bf16.xpose.msra.mxu0 0
    %1867 = vmatprep.mubr.bf16.mxu0 0
    %1868 = vmatmul.mubr.bf16.gmra.mxu0 %v1830
    %v1869 = vpop.f32.mrf.mxu0
    %v1870 = vadd.f32 0.0, %v1869
    %v1871 = vpop.f32.mrf.mxu0
    %v1872 = vpop.f32.mrf.mxu0
    %v1873 = vpop.f32.mrf.mxu0
    %1874 = vdwg.mxu0
    %1876 = vrot.lane.b32.xlu0 %v1531, 96
    %v1877 = vpop.permute.xlu0 %1876
    %v1879 = vsel %vm196, %v1531, 0
    %v1882 = vsel %vm196, %v1877, 0
    %1884 = vmatprep.subr.bf16.mxu0 0
    %1885 = vmatpush1.bf16.xpose.msra.mxu0 0
    %1886 = vmatprep.subr.bf16.mxu0 0
    %1887 = vmatpush1.bf16.xpose.msra.mxu0 0
    %1888 = vmatprep.subr.bf16.mxu0 0
    %1889 = vmatpush1.bf16.xpose.msra.mxu0 0
    %1890 = vmatprep.subr.bf16.mxu0 0
    %1891 = vmatpush1.bf16.xpose.msra.mxu0 0
    %1892 = vmatprep.subr.bf16.mxu0 0
    %1893 = vmatpush1.bf16.xpose.msra.mxu0 0
    %1894 = vmatprep.subr.bf16.mxu0 0
    %1895 = vmatpush1.bf16.xpose.msra.mxu0 0
    %1896 = vmatprep.subr.bf16.mxu0 0
    %1897 = vmatpush1.bf16.xpose.msra.mxu0 0
    %1898 = vmatprep.subr.bf16.mxu0 0
    %1899 = vmatpush1.bf16.xpose.msra.mxu0 %v1882
    %1900 = vmatprep.subr.bf16.mxu0 0
    %1901 = vmatpush2.bf16.xpose.msra.mxu0 0
    %1902 = vmatprep.subr.bf16.mxu0 0
    %1903 = vmatpush2.bf16.xpose.msra.mxu0 0
    %1904 = vmatprep.subr.bf16.mxu0 0
    %1905 = vmatpush2.bf16.xpose.msra.mxu0 0
    %1906 = vmatprep.subr.bf16.mxu0 0
    %1907 = vmatpush2.bf16.xpose.msra.mxu0 0
    %1908 = vmatprep.subr.bf16.mxu0 0
    %1909 = vmatpush2.bf16.xpose.msra.mxu0 0
    %1910 = vmatprep.subr.bf16.mxu0 0
    %1911 = vmatpush2.bf16.xpose.msra.mxu0 0
    %1912 = vmatprep.subr.bf16.mxu0 0
    %1913 = vmatpush2.bf16.xpose.msra.mxu0 0
    %1914 = vmatprep.subr.bf16.mxu0 0
    %1915 = vmatpush2.bf16.xpose.msra.mxu0 0
    %1916 = vmatprep.mubr.bf16.mxu0 0
    %1917 = vmatmul.mubr.bf16.gmra.mxu0 %v1879
    %v1918 = vpop.f32.mrf.mxu0
    %v1919 = vadd.f32 0.0, %v1918
    %v1920 = vpop.f32.mrf.mxu0
    %v1921 = vpop.f32.mrf.mxu0
    %v1922 = vpop.f32.mrf.mxu0
    %1923 = vdwg.mxu0
    %v1924 = vsel %vm196, %v1576, -inf
    %1925 = vmax.xlane.f32.xlu0 %v1924
    %v1926 = vpop.xlane.xlu0 %1925
    %v1927 = vsel %vm196, %v1625, -inf
    %1928 = vmax.xlane.f32.xlu0 %v1927
    %v1929 = vpop.xlane.xlu0 %1928
    %v1930 = vsel %vm196, %v1674, -inf
    %1931 = vmax.xlane.f32.xlu0 %v1930
    %v1932 = vpop.xlane.xlu0 %1931
    %v1933 = vsel %vm196, %v1723, -inf
    %1934 = vmax.xlane.f32.xlu0 %v1933
    %v1935 = vpop.xlane.xlu0 %1934
    %v1936 = vsel %vm196, %v1772, -inf
    %1937 = vmax.xlane.f32.xlu0 %v1936
    %v1938 = vpop.xlane.xlu0 %1937
    %v1939 = vsel %vm196, %v1821, -inf
    %1940 = vmax.xlane.f32.xlu0 %v1939
    %v1941 = vpop.xlane.xlu0 %1940
    %v1942 = vsel %vm196, %v1870, -inf
    %1943 = vmax.xlane.f32.xlu0 %v1942
    %v1944 = vpop.xlane.xlu0 %1943
    %v1945 = vsel %vm196, %v1919, -inf
    %1946 = vmax.xlane.f32.xlu0 %v1945
    %v1947 = vpop.xlane.xlu0 %1946
    %v1948 = vsub.f32 %v1576, %v1926
    %v1949 = vsub.f32 %v1625, %v1929
    %v1950 = vsub.f32 %v1674, %v1932
    %v1951 = vsub.f32 %v1723, %v1935
    %v1952 = vsub.f32 %v1772, %v1938
    %v1953 = vsub.f32 %v1821, %v1941
    %v1954 = vsub.f32 %v1870, %v1944
    %v1955 = vsub.f32 %v1919, %v1947
    %v1956 = vmul.f32 %v1948, 1.442695
    %v1957 = vpow.pop %v1956
    %v1958 = vmul.f32 %v1949, 1.442695
    %v1959 = vpow.pop %v1958
    %v1960 = vmul.f32 %v1950, 1.442695
    %v1961 = vpow.pop %v1960
    %v1962 = vmul.f32 %v1951, 1.442695
    %v1963 = vpow.pop %v1962
    %v1964 = vmul.f32 %v1952, 1.442695
    %v1965 = vpow.pop %v1964
    %v1966 = vmul.f32 %v1953, 1.442695
    %v1967 = vpow.pop %v1966
    %v1968 = vmul.f32 %v1954, 1.442695
    %v1969 = vpow.pop %v1968
    %v1970 = vmul.f32 %v1955, 1.442695
    %v1971 = vpow.pop %v1970
    %v1972 = vsel %vm196, %v1957, 0.0
    %1973 = vadd.xlane.f32.xlu0 %v1972
    %v1974 = vpop.xlane.xlu0 %1973
    %v1975 = vsel %vm196, %v1959, 0.0
    %1976 = vadd.xlane.f32.xlu0 %v1975
    %v1977 = vpop.xlane.xlu0 %1976
    %v1978 = vsel %vm196, %v1961, 0.0
    %1979 = vadd.xlane.f32.xlu0 %v1978
    %v1980 = vpop.xlane.xlu0 %1979
    %v1981 = vsel %vm196, %v1963, 0.0
    %1982 = vadd.xlane.f32.xlu0 %v1981
    %v1983 = vpop.xlane.xlu0 %1982
    %v1984 = vsel %vm196, %v1965, 0.0
    %1985 = vadd.xlane.f32.xlu0 %v1984
    %v1986 = vpop.xlane.xlu0 %1985
    %v1987 = vsel %vm196, %v1967, 0.0
    %1988 = vadd.xlane.f32.xlu0 %v1987
    %v1989 = vpop.xlane.xlu0 %1988
    %v1990 = vsel %vm196, %v1969, 0.0
    %1991 = vadd.xlane.f32.xlu0 %v1990
    %v1992 = vpop.xlane.xlu0 %1991
    %v1993 = vsel %vm196, %v1971, 0.0
    %1994 = vadd.xlane.f32.xlu0 %v1993
    %v1995 = vpop.xlane.xlu0 %1994
    %v1996 = vrcp.pop %v1974
    %v1997 = vrcp.pop %v1977
    %v1998 = vrcp.pop %v1980
    %v1999 = vrcp.pop %v1983
    %v2000 = vrcp.pop %v1986
    %v2001 = vrcp.pop %v1989
    %v2002 = vrcp.pop %v1992
    %v2003 = vrcp.pop %v1995
    %v2004 = vmul.f32 %v1957, %v1996
    %v2005 = vmul.f32 %v1959, %v1997
    %v2006 = vmul.f32 %v1961, %v1998
    %v2007 = vmul.f32 %v1963, %v1999
    %v2008 = vmul.f32 %v1965, %v2000
    %v2009 = vmul.f32 %v1967, %v2001
    %v2010 = vmul.f32 %v1969, %v2002
    %v2011 = vmul.f32 %v1971, %v2003
    %v2012 = vpack.c.bf16 %v2004, %v2004
    %v2013 = vpack.c.bf16 %v2005, %v2005
    %v2014 = vpack.c.bf16 %v2006, %v2006
    %v2015 = vpack.c.bf16 %v2007, %v2007
    %v2016 = vpack.c.bf16 %v2008, %v2008
    %v2017 = vpack.c.bf16 %v2009, %v2009
    %v2018 = vpack.c.bf16 %v2010, %v2010
    %v2019 = vpack.c.bf16 %v2011, %v2011
    %2020 = vrot.lane.b32.xlu0 %v1524, 64
    %v2021 = vpop.permute.xlu0 %2020
    %v2023 = vsel %vm196, %v2012, 0
    %v2026 = vsel %vm687, %v2021, 0
    %2028 = vmatprep.subr.bf16.mxu0 0
    %2029 = vmatpush1.bf16.msra.mxu0 0
    %2030 = vmatprep.subr.bf16.mxu0 0
    %2031 = vmatpush1.bf16.msra.mxu0 0
    %2032 = vmatprep.subr.bf16.mxu0 0
    %2033 = vmatpush1.bf16.msra.mxu0 0
    %2034 = vmatprep.subr.bf16.mxu0 0
    %2035 = vmatpush1.bf16.msra.mxu0 0
    %2036 = vmatprep.subr.bf16.mxu0 0
    %2037 = vmatpush1.bf16.msra.mxu0 0
    %2038 = vmatprep.subr.bf16.mxu0 0
    %2039 = vmatpush1.bf16.msra.mxu0 0
    %2040 = vmatprep.subr.bf16.mxu0 0
    %2041 = vmatpush1.bf16.msra.mxu0 0
    %2042 = vmatprep.subr.bf16.mxu0 0
    %2043 = vmatpush1.bf16.msra.mxu0 %v2026
    %2044 = vmatprep.subr.bf16.mxu0 0
    %2045 = vmatpush2.bf16.msra.mxu0 0
    %2046 = vmatprep.subr.bf16.mxu0 0
    %2047 = vmatpush2.bf16.msra.mxu0 0
    %2048 = vmatprep.subr.bf16.mxu0 0
    %2049 = vmatpush2.bf16.msra.mxu0 0
    %2050 = vmatprep.subr.bf16.mxu0 0
    %2051 = vmatpush2.bf16.msra.mxu0 0
    %2052 = vmatprep.subr.bf16.mxu0 0
    %2053 = vmatpush2.bf16.msra.mxu0 0
    %2054 = vmatprep.subr.bf16.mxu0 0
    %2055 = vmatpush2.bf16.msra.mxu0 0
    %2056 = vmatprep.subr.bf16.mxu0 0
    %2057 = vmatpush2.bf16.msra.mxu0 0
    %2058 = vmatprep.subr.bf16.mxu0 0
    %2059 = vmatpush2.bf16.msra.mxu0 0
    %2060 = vmatprep.mubr.bf16.mxu0 0
    %2061 = vmatmul.mubr.bf16.gmra.mxu0 %v2023
    %v2062 = vpop.f32.mrf.mxu0
    %v2063 = vadd.f32 0.0, %v2062
    %v2064 = vpop.f32.mrf.mxu0
    %v2065 = vpop.f32.mrf.mxu0
    %v2066 = vpop.f32.mrf.mxu0
    %2067 = vdwg.mxu0
    %2068 = vrot.lane.b32.xlu0 %v1525, 64
    %v2069 = vpop.permute.xlu0 %2068
    %v2071 = vsel %vm196, %v2013, 0
    %v2074 = vsel %vm687, %v2069, 0
    %2076 = vmatprep.subr.bf16.mxu0 0
    %2077 = vmatpush1.bf16.msra.mxu0 0
    %2078 = vmatprep.subr.bf16.mxu0 0
    %2079 = vmatpush1.bf16.msra.mxu0 0
    %2080 = vmatprep.subr.bf16.mxu0 0
    %2081 = vmatpush1.bf16.msra.mxu0 0
    %2082 = vmatprep.subr.bf16.mxu0 0
    %2083 = vmatpush1.bf16.msra.mxu0 0
    %2084 = vmatprep.subr.bf16.mxu0 0
    %2085 = vmatpush1.bf16.msra.mxu0 0
    %2086 = vmatprep.subr.bf16.mxu0 0
    %2087 = vmatpush1.bf16.msra.mxu0 0
    %2088 = vmatprep.subr.bf16.mxu0 0
    %2089 = vmatpush1.bf16.msra.mxu0 0
    %2090 = vmatprep.subr.bf16.mxu0 0
    %2091 = vmatpush1.bf16.msra.mxu0 %v2074
    %2092 = vmatprep.subr.bf16.mxu0 0
    %2093 = vmatpush2.bf16.msra.mxu0 0
    %2094 = vmatprep.subr.bf16.mxu0 0
    %2095 = vmatpush2.bf16.msra.mxu0 0
    %2096 = vmatprep.subr.bf16.mxu0 0
    %2097 = vmatpush2.bf16.msra.mxu0 0
    %2098 = vmatprep.subr.bf16.mxu0 0
    %2099 = vmatpush2.bf16.msra.mxu0 0
    %2100 = vmatprep.subr.bf16.mxu0 0
    %2101 = vmatpush2.bf16.msra.mxu0 0
    %2102 = vmatprep.subr.bf16.mxu0 0
    %2103 = vmatpush2.bf16.msra.mxu0 0
    %2104 = vmatprep.subr.bf16.mxu0 0
    %2105 = vmatpush2.bf16.msra.mxu0 0
    %2106 = vmatprep.subr.bf16.mxu0 0
    %2107 = vmatpush2.bf16.msra.mxu0 0
    %2108 = vmatprep.mubr.bf16.mxu0 0
    %2109 = vmatmul.mubr.bf16.gmra.mxu0 %v2071
    %v2110 = vpop.f32.mrf.mxu0
    %v2111 = vadd.f32 0.0, %v2110
    %v2112 = vpop.f32.mrf.mxu0
    %v2113 = vpop.f32.mrf.mxu0
    %v2114 = vpop.f32.mrf.mxu0
    %2115 = vdwg.mxu0
    %2116 = vrot.lane.b32.xlu0 %v1526, 64
    %v2117 = vpop.permute.xlu0 %2116
    %v2119 = vsel %vm196, %v2014, 0
    %v2122 = vsel %vm687, %v2117, 0
    %2124 = vmatprep.subr.bf16.mxu0 0
    %2125 = vmatpush1.bf16.msra.mxu0 0
    %2126 = vmatprep.subr.bf16.mxu0 0
    %2127 = vmatpush1.bf16.msra.mxu0 0
    %2128 = vmatprep.subr.bf16.mxu0 0
    %2129 = vmatpush1.bf16.msra.mxu0 0
    %2130 = vmatprep.subr.bf16.mxu0 0
    %2131 = vmatpush1.bf16.msra.mxu0 0
    %2132 = vmatprep.subr.bf16.mxu0 0
    %2133 = vmatpush1.bf16.msra.mxu0 0
    %2134 = vmatprep.subr.bf16.mxu0 0
    %2135 = vmatpush1.bf16.msra.mxu0 0
    %2136 = vmatprep.subr.bf16.mxu0 0
    %2137 = vmatpush1.bf16.msra.mxu0 0
    %2138 = vmatprep.subr.bf16.mxu0 0
    %2139 = vmatpush1.bf16.msra.mxu0 %v2122
    %2140 = vmatprep.subr.bf16.mxu0 0
    %2141 = vmatpush2.bf16.msra.mxu0 0
    %2142 = vmatprep.subr.bf16.mxu0 0
    %2143 = vmatpush2.bf16.msra.mxu0 0
    %2144 = vmatprep.subr.bf16.mxu0 0
    %2145 = vmatpush2.bf16.msra.mxu0 0
    %2146 = vmatprep.subr.bf16.mxu0 0
    %2147 = vmatpush2.bf16.msra.mxu0 0
    %2148 = vmatprep.subr.bf16.mxu0 0
    %2149 = vmatpush2.bf16.msra.mxu0 0
    %2150 = vmatprep.subr.bf16.mxu0 0
    %2151 = vmatpush2.bf16.msra.mxu0 0
    %2152 = vmatprep.subr.bf16.mxu0 0
    %2153 = vmatpush2.bf16.msra.mxu0 0
    %2154 = vmatprep.subr.bf16.mxu0 0
    %2155 = vmatpush2.bf16.msra.mxu0 0
    %2156 = vmatprep.mubr.bf16.mxu0 0
    %2157 = vmatmul.mubr.bf16.gmra.mxu0 %v2119
    %v2158 = vpop.f32.mrf.mxu0
    %v2159 = vadd.f32 0.0, %v2158
    %v2160 = vpop.f32.mrf.mxu0
    %v2161 = vpop.f32.mrf.mxu0
    %v2162 = vpop.f32.mrf.mxu0
    %2163 = vdwg.mxu0
    %2164 = vrot.lane.b32.xlu0 %v1527, 64
    %v2165 = vpop.permute.xlu0 %2164
    %v2167 = vsel %vm196, %v2015, 0
    %v2170 = vsel %vm687, %v2165, 0
    %2172 = vmatprep.subr.bf16.mxu0 0
    %2173 = vmatpush1.bf16.msra.mxu0 0
    %2174 = vmatprep.subr.bf16.mxu0 0
    %2175 = vmatpush1.bf16.msra.mxu0 0
    %2176 = vmatprep.subr.bf16.mxu0 0
    %2177 = vmatpush1.bf16.msra.mxu0 0
    %2178 = vmatprep.subr.bf16.mxu0 0
    %2179 = vmatpush1.bf16.msra.mxu0 0
    %2180 = vmatprep.subr.bf16.mxu0 0
    %2181 = vmatpush1.bf16.msra.mxu0 0
    %2182 = vmatprep.subr.bf16.mxu0 0
    %2183 = vmatpush1.bf16.msra.mxu0 0
    %2184 = vmatprep.subr.bf16.mxu0 0
    %2185 = vmatpush1.bf16.msra.mxu0 0
    %2186 = vmatprep.subr.bf16.mxu0 0
    %2187 = vmatpush1.bf16.msra.mxu0 %v2170
    %2188 = vmatprep.subr.bf16.mxu0 0
    %2189 = vmatpush2.bf16.msra.mxu0 0
    %2190 = vmatprep.subr.bf16.mxu0 0
    %2191 = vmatpush2.bf16.msra.mxu0 0
    %2192 = vmatprep.subr.bf16.mxu0 0
    %2193 = vmatpush2.bf16.msra.mxu0 0
    %2194 = vmatprep.subr.bf16.mxu0 0
    %2195 = vmatpush2.bf16.msra.mxu0 0
    %2196 = vmatprep.subr.bf16.mxu0 0
    %2197 = vmatpush2.bf16.msra.mxu0 0
    %2198 = vmatprep.subr.bf16.mxu0 0
    %2199 = vmatpush2.bf16.msra.mxu0 0
    %2200 = vmatprep.subr.bf16.mxu0 0
    %2201 = vmatpush2.bf16.msra.mxu0 0
    %2202 = vmatprep.subr.bf16.mxu0 0
    %2203 = vmatpush2.bf16.msra.mxu0 0
    %2204 = vmatprep.mubr.bf16.mxu0 0
    %2205 = vmatmul.mubr.bf16.gmra.mxu0 %v2167
    %v2206 = vpop.f32.mrf.mxu0
    %v2207 = vadd.f32 0.0, %v2206
    %v2208 = vpop.f32.mrf.mxu0
    %v2209 = vpop.f32.mrf.mxu0
    %v2210 = vpop.f32.mrf.mxu0
    %2211 = vdwg.mxu0
    %2212 = vrot.lane.b32.xlu0 %v1528, 64
    %v2213 = vpop.permute.xlu0 %2212
    %v2215 = vsel %vm196, %v2016, 0
    %v2218 = vsel %vm687, %v2213, 0
    %2220 = vmatprep.subr.bf16.mxu0 0
    %2221 = vmatpush1.bf16.msra.mxu0 0
    %2222 = vmatprep.subr.bf16.mxu0 0
    %2223 = vmatpush1.bf16.msra.mxu0 0
    %2224 = vmatprep.subr.bf16.mxu0 0
    %2225 = vmatpush1.bf16.msra.mxu0 0
    %2226 = vmatprep.subr.bf16.mxu0 0
    %2227 = vmatpush1.bf16.msra.mxu0 0
    %2228 = vmatprep.subr.bf16.mxu0 0
    %2229 = vmatpush1.bf16.msra.mxu0 0
    %2230 = vmatprep.subr.bf16.mxu0 0
    %2231 = vmatpush1.bf16.msra.mxu0 0
    %2232 = vmatprep.subr.bf16.mxu0 0
    %2233 = vmatpush1.bf16.msra.mxu0 0
    %2234 = vmatprep.subr.bf16.mxu0 0
    %2235 = vmatpush1.bf16.msra.mxu0 %v2218
    %2236 = vmatprep.subr.bf16.mxu0 0
    %2237 = vmatpush2.bf16.msra.mxu0 0
    %2238 = vmatprep.subr.bf16.mxu0 0
    %2239 = vmatpush2.bf16.msra.mxu0 0
    %2240 = vmatprep.subr.bf16.mxu0 0
    %2241 = vmatpush2.bf16.msra.mxu0 0
    %2242 = vmatprep.subr.bf16.mxu0 0
    %2243 = vmatpush2.bf16.msra.mxu0 0
    %2244 = vmatprep.subr.bf16.mxu0 0
    %2245 = vmatpush2.bf16.msra.mxu0 0
    %2246 = vmatprep.subr.bf16.mxu0 0
    %2247 = vmatpush2.bf16.msra.mxu0 0
    %2248 = vmatprep.subr.bf16.mxu0 0
    %2249 = vmatpush2.bf16.msra.mxu0 0
    %2250 = vmatprep.subr.bf16.mxu0 0
    %2251 = vmatpush2.bf16.msra.mxu0 0
    %2252 = vmatprep.mubr.bf16.mxu0 0
    %2253 = vmatmul.mubr.bf16.gmra.mxu0 %v2215
    %v2254 = vpop.f32.mrf.mxu0
    %v2255 = vadd.f32 0.0, %v2254
    %v2256 = vpop.f32.mrf.mxu0
    %v2257 = vpop.f32.mrf.mxu0
    %v2258 = vpop.f32.mrf.mxu0
    %2259 = vdwg.mxu0
    %2260 = vrot.lane.b32.xlu0 %v1529, 64
    %v2261 = vpop.permute.xlu0 %2260
    %v2263 = vsel %vm196, %v2017, 0
    %v2266 = vsel %vm687, %v2261, 0
    %2268 = vmatprep.subr.bf16.mxu0 0
    %2269 = vmatpush1.bf16.msra.mxu0 0
    %2270 = vmatprep.subr.bf16.mxu0 0
    %2271 = vmatpush1.bf16.msra.mxu0 0
    %2272 = vmatprep.subr.bf16.mxu0 0
    %2273 = vmatpush1.bf16.msra.mxu0 0
    %2274 = vmatprep.subr.bf16.mxu0 0
    %2275 = vmatpush1.bf16.msra.mxu0 0
    %2276 = vmatprep.subr.bf16.mxu0 0
    %2277 = vmatpush1.bf16.msra.mxu0 0
    %2278 = vmatprep.subr.bf16.mxu0 0
    %2279 = vmatpush1.bf16.msra.mxu0 0
    %2280 = vmatprep.subr.bf16.mxu0 0
    %2281 = vmatpush1.bf16.msra.mxu0 0
    %2282 = vmatprep.subr.bf16.mxu0 0
    %2283 = vmatpush1.bf16.msra.mxu0 %v2266
    %2284 = vmatprep.subr.bf16.mxu0 0
    %2285 = vmatpush2.bf16.msra.mxu0 0
    %2286 = vmatprep.subr.bf16.mxu0 0
    %2287 = vmatpush2.bf16.msra.mxu0 0
    %2288 = vmatprep.subr.bf16.mxu0 0
    %2289 = vmatpush2.bf16.msra.mxu0 0
    %2290 = vmatprep.subr.bf16.mxu0 0
    %2291 = vmatpush2.bf16.msra.mxu0 0
    %2292 = vmatprep.subr.bf16.mxu0 0
    %2293 = vmatpush2.bf16.msra.mxu0 0
    %2294 = vmatprep.subr.bf16.mxu0 0
    %2295 = vmatpush2.bf16.msra.mxu0 0
    %2296 = vmatprep.subr.bf16.mxu0 0
    %2297 = vmatpush2.bf16.msra.mxu0 0
    %2298 = vmatprep.subr.bf16.mxu0 0
    %2299 = vmatpush2.bf16.msra.mxu0 0
    %2300 = vmatprep.mubr.bf16.mxu0 0
    %2301 = vmatmul.mubr.bf16.gmra.mxu0 %v2263
    %v2302 = vpop.f32.mrf.mxu0
    %v2303 = vadd.f32 0.0, %v2302
    %v2304 = vpop.f32.mrf.mxu0
    %v2305 = vpop.f32.mrf.mxu0
    %v2306 = vpop.f32.mrf.mxu0
    %2307 = vdwg.mxu0
    %2308 = vrot.lane.b32.xlu0 %v1530, 64
    %v2309 = vpop.permute.xlu0 %2308
    %v2311 = vsel %vm196, %v2018, 0
    %v2314 = vsel %vm687, %v2309, 0
    %2316 = vmatprep.subr.bf16.mxu0 0
    %2317 = vmatpush1.bf16.msra.mxu0 0
    %2318 = vmatprep.subr.bf16.mxu0 0
    %2319 = vmatpush1.bf16.msra.mxu0 0
    %2320 = vmatprep.subr.bf16.mxu0 0
    %2321 = vmatpush1.bf16.msra.mxu0 0
    %2322 = vmatprep.subr.bf16.mxu0 0
    %2323 = vmatpush1.bf16.msra.mxu0 0
    %2324 = vmatprep.subr.bf16.mxu0 0
    %2325 = vmatpush1.bf16.msra.mxu0 0
    %2326 = vmatprep.subr.bf16.mxu0 0
    %2327 = vmatpush1.bf16.msra.mxu0 0
    %2328 = vmatprep.subr.bf16.mxu0 0
    %2329 = vmatpush1.bf16.msra.mxu0 0
    %2330 = vmatprep.subr.bf16.mxu0 0
    %2331 = vmatpush1.bf16.msra.mxu0 %v2314
    %2332 = vmatprep.subr.bf16.mxu0 0
    %2333 = vmatpush2.bf16.msra.mxu0 0
    %2334 = vmatprep.subr.bf16.mxu0 0
    %2335 = vmatpush2.bf16.msra.mxu0 0
    %2336 = vmatprep.subr.bf16.mxu0 0
    %2337 = vmatpush2.bf16.msra.mxu0 0
    %2338 = vmatprep.subr.bf16.mxu0 0
    %2339 = vmatpush2.bf16.msra.mxu0 0
    %2340 = vmatprep.subr.bf16.mxu0 0
    %2341 = vmatpush2.bf16.msra.mxu0 0
    %2342 = vmatprep.subr.bf16.mxu0 0
    %2343 = vmatpush2.bf16.msra.mxu0 0
    %2344 = vmatprep.subr.bf16.mxu0 0
    %2345 = vmatpush2.bf16.msra.mxu0 0
    %2346 = vmatprep.subr.bf16.mxu0 0
    %2347 = vmatpush2.bf16.msra.mxu0 0
    %2348 = vmatprep.mubr.bf16.mxu0 0
    %2349 = vmatmul.mubr.bf16.gmra.mxu0 %v2311
    %v2350 = vpop.f32.mrf.mxu0
    %v2351 = vadd.f32 0.0, %v2350
    %v2352 = vpop.f32.mrf.mxu0
    %v2353 = vpop.f32.mrf.mxu0
    %v2354 = vpop.f32.mrf.mxu0
    %2355 = vdwg.mxu0
    %2356 = vrot.lane.b32.xlu0 %v1531, 64
    %v2357 = vpop.permute.xlu0 %2356
    %v2359 = vsel %vm196, %v2019, 0
    %v2362 = vsel %vm687, %v2357, 0
    %2364 = vmatprep.subr.bf16.mxu0 0
    %2365 = vmatpush1.bf16.msra.mxu0 0
    %2366 = vmatprep.subr.bf16.mxu0 0
    %2367 = vmatpush1.bf16.msra.mxu0 0
    %2368 = vmatprep.subr.bf16.mxu0 0
    %2369 = vmatpush1.bf16.msra.mxu0 0
    %2370 = vmatprep.subr.bf16.mxu0 0
    %2371 = vmatpush1.bf16.msra.mxu0 0
    %2372 = vmatprep.subr.bf16.mxu0 0
    %2373 = vmatpush1.bf16.msra.mxu0 0
    %2374 = vmatprep.subr.bf16.mxu0 0
    %2375 = vmatpush1.bf16.msra.mxu0 0
    %2376 = vmatprep.subr.bf16.mxu0 0
    %2377 = vmatpush1.bf16.msra.mxu0 0
    %2378 = vmatprep.subr.bf16.mxu0 0
    %2379 = vmatpush1.bf16.msra.mxu0 %v2362
    %2380 = vmatprep.subr.bf16.mxu0 0
    %2381 = vmatpush2.bf16.msra.mxu0 0
    %2382 = vmatprep.subr.bf16.mxu0 0
    %2383 = vmatpush2.bf16.msra.mxu0 0
    %2384 = vmatprep.subr.bf16.mxu0 0
    %2385 = vmatpush2.bf16.msra.mxu0 0
    %2386 = vmatprep.subr.bf16.mxu0 0
    %2387 = vmatpush2.bf16.msra.mxu0 0
    %2388 = vmatprep.subr.bf16.mxu0 0
    %2389 = vmatpush2.bf16.msra.mxu0 0
    %2390 = vmatprep.subr.bf16.mxu0 0
    %2391 = vmatpush2.bf16.msra.mxu0 0
    %2392 = vmatprep.subr.bf16.mxu0 0
    %2393 = vmatpush2.bf16.msra.mxu0 0
    %2394 = vmatprep.subr.bf16.mxu0 0
    %2395 = vmatpush2.bf16.msra.mxu0 0
    %2396 = vmatprep.mubr.bf16.mxu0 0
    %2397 = vmatmul.mubr.bf16.gmra.mxu0 %v2359
    %v2398 = vpop.f32.mrf.mxu0
    %v2399 = vadd.f32 0.0, %v2398
    %v2400 = vpop.f32.mrf.mxu0
    %v2401 = vpop.f32.mrf.mxu0
    %v2402 = vpop.f32.mrf.mxu0
    %2403 = vdwg.mxu0
    %2406 = vrot.lane.b32.xlu0 %v2159, 8
    %v2407 = vpop.permute.xlu0 %2406
    %2408 = vrot.lane.b32.xlu0 %v2207, 8
    %v2409 = vpop.permute.xlu0 %2408
    %2414 = vrot.lane.b32.xlu0 %v2255, 16
    %v2415 = vpop.permute.xlu0 %2414
    %2416 = vrot.lane.b32.xlu0 %v2303, 16
    %v2417 = vpop.permute.xlu0 %2416
    %2422 = vrot.lane.b32.xlu0 %v2351, 24
    %v2423 = vpop.permute.xlu0 %2422
    %2424 = vrot.lane.b32.xlu0 %v2399, 24
    %v2425 = vpop.permute.xlu0 %2424
    %v2428 = vsel %vm196, %v2063, %v2407
    %v2429 = vsel %vm196, %v2111, %v2409
    %v2430 = vsel %vm1093, %v2428, %v2415
    %v2431 = vsel %vm1093, %v2429, %v2417
    %v2432 = vsel %vm1096, %v2430, %v2423
    %v2433 = vsel %vm1096, %v2431, %v2425
    %v2434 = vpack.c.bf16 %v2433, %v2432
    %v2439 = vunpack.c.l.b16 %v1375
    %v2440 = vunpack.c.l.b16 %v1376
    %v2441 = vunpack.c.l.b16 %v1377
    %v2442 = vunpack.c.l.b16 %v1378
    %v2443 = vpack.c.b16 %v2440, %v2439
    %v2444 = vpack.c.b16 %v2442, %v2441
    %v2448 = vsel %vm64, %v2434, 0
    %2450 = vmatprep.subr.bf16.mxu0 0
    %2451 = vmatpush1.bf16.msra.mxu0 0
    %2452 = vmatprep.subr.bf16.mxu0 0
    %2453 = vmatpush1.bf16.msra.mxu0 0
    %2454 = vmatprep.subr.bf16.mxu0 0
    %2455 = vmatpush1.bf16.msra.mxu0 0
    %2456 = vmatprep.subr.bf16.mxu0 0
    %2457 = vmatpush1.bf16.msra.mxu0 0
    %2458 = vmatprep.subr.bf16.mxu0 0
    %2459 = vmatpush1.bf16.msra.mxu0 0
    %2460 = vmatprep.subr.bf16.mxu0 0
    %2461 = vmatpush1.bf16.msra.mxu0 0
    %2462 = vmatprep.subr.bf16.mxu0 0
    %2463 = vmatpush1.bf16.msra.mxu0 %v2444
    %2464 = vmatprep.subr.bf16.mxu0 0
    %2465 = vmatpush1.bf16.msra.mxu0 %v2443
    %2466 = vmatprep.subr.bf16.mxu0 0
    %2467 = vmatpush2.bf16.msra.mxu0 0
    %2468 = vmatprep.subr.bf16.mxu0 0
    %2469 = vmatpush2.bf16.msra.mxu0 0
    %2470 = vmatprep.subr.bf16.mxu0 0
    %2471 = vmatpush2.bf16.msra.mxu0 0
    %2472 = vmatprep.subr.bf16.mxu0 0
    %2473 = vmatpush2.bf16.msra.mxu0 0
    %2474 = vmatprep.subr.bf16.mxu0 0
    %2475 = vmatpush2.bf16.msra.mxu0 0
    %2476 = vmatprep.subr.bf16.mxu0 0
    %2477 = vmatpush2.bf16.msra.mxu0 0
    %2478 = vmatprep.subr.bf16.mxu0 0
    %2479 = vmatpush2.bf16.msra.mxu0 0
    %2480 = vmatprep.subr.bf16.mxu0 0
    %2481 = vmatpush2.bf16.msra.mxu0 0
    %2482 = vmatprep.mubr.bf16.mxu0 0
    %2483 = vmatmul.mubr.bf16.gmra.mxu0 %v2448
    %v2484 = vpop.f32.mrf.mxu0
    %v2485 = vadd.f32 0.0, %v2484
    %v2486 = vpop.f32.mrf.mxu0
    %v2487 = vpop.f32.mrf.mxu0
    %v2488 = vadd.f32 0.0, %v2487
    %v2489 = vpop.f32.mrf.mxu0
    %2490 = vdwg.mxu0
    %v2491 = vadd.f32 %v1367, %v2485
    %v2492 = vadd.f32 %v1368, %v2488
    %v2493 = vlaneseq
    %v2494 = vshrl.u32 %v2493, 7
    %v2495 = vsub.s32 2, %v2494
    %v2496 = vrot.slane %v1402, %v2495
    %v2497 = vadd.f32 %v2491, %v2496
    %v2498 = vadd.f32 %v2492, %v2496
    %v2499 = vsel %vm64, %v2497, 0.0
    %2500 = vadd.xlane.f32.xlu0 %v2499
    %v2501 = vpop.xlane.xlu0 %2500
    %v2502 = vsel %vm64, %v2498, 0.0
    %2503 = vadd.xlane.f32.xlu0 %v2502
    %v2504 = vpop.xlane.xlu0 %2503
    %v2505 = vmul.f32 %v2501, %v71
    %v2506 = vmul.f32 %v2504, %v71
    %v2507 = vsub.f32 %v2497, %v2505
    %v2508 = vsub.f32 %v2498, %v2506
    %v2509 = vmul.f32 %v2507, %v2507
    %v2510 = vmul.f32 %v2508, %v2508
    %v2511 = vsel %vm64, %v2509, 0.0
    %2512 = vadd.xlane.f32.xlu0 %v2511
    %v2513 = vpop.xlane.xlu0 %2512
    %v2514 = vsel %vm64, %v2510, 0.0
    %2515 = vadd.xlane.f32.xlu0 %v2514
    %v2516 = vpop.xlane.xlu0 %2515
    %v2517 = vmul.f32 %v2513, %v71
    %v2518 = vmul.f32 %v2516, %v71
    %v2519 = vadd.f32 %v2517, 1e-05
    %v2520 = vadd.f32 %v2518, 1e-05
    %v2521 = vrsqrt.pop %v2519
    %v2522 = vrsqrt.pop %v2520
    %v2523 = vmul.f32 %v2507, %v2521
    %v2524 = vmul.f32 %v2508, %v2522
    %v2525 = vlaneseq
    %v2526 = vshrl.u32 %v2525, 7
    %v2527 = vsub.s32 3, %v2526
    %v2528 = vrot.slane %v1402, %v2527
    %v2529 = vmul.f32 %v2523, %v2528
    %v2530 = vmul.f32 %v2524, %v2528
    %v2531 = vlaneseq
    %v2532 = vshrl.u32 %v2531, 7
    %v2533 = vsub.s32 4, %v2532
    %v2534 = vrot.slane %v1402, %v2533
    %v2535 = vadd.f32 %v2529, %v2534
    %v2536 = vadd.f32 %v2530, %v2534
    %v2537 = vpack.c.bf16 %v2536, %v2535
    %v2538 = vlaneseq
    %v2539 = vshrl.u32 %v2538, 7
    %v2540 = vsub.s32 0, %v2539
    %v2541 = vrot.slane %v1404, %v2540
    %v2546 = vunpack.c.l.b16 %v1380
    %v2547 = vunpack.c.l.b16 %v1381
    %v2548 = vunpack.c.l.b16 %v1382
    %v2549 = vunpack.c.l.b16 %v1383
    %v2550 = vpack.c.b16 %v2547, %v2546
    %v2551 = vpack.c.b16 %v2549, %v2548
    %v2555 = vsel %vm64, %v2537, 0
    %2557 = vmatprep.subr.bf16.mxu0 0
    %2558 = vmatpush1.bf16.msra.mxu0 0
    %2559 = vmatprep.subr.bf16.mxu0 0
    %2560 = vmatpush1.bf16.msra.mxu0 0
    %2561 = vmatprep.subr.bf16.mxu0 0
    %2562 = vmatpush1.bf16.msra.mxu0 0
    %2563 = vmatprep.subr.bf16.mxu0 0
    %2564 = vmatpush1.bf16.msra.mxu0 0
    %2565 = vmatprep.subr.bf16.mxu0 0
    %2566 = vmatpush1.bf16.msra.mxu0 0
    %2567 = vmatprep.subr.bf16.mxu0 0
    %2568 = vmatpush1.bf16.msra.mxu0 0
    %2569 = vmatprep.subr.bf16.mxu0 0
    %2570 = vmatpush1.bf16.msra.mxu0 %v2551
    %2571 = vmatprep.subr.bf16.mxu0 0
    %2572 = vmatpush1.bf16.msra.mxu0 %v2550
    %2573 = vmatprep.subr.bf16.mxu0 0
    %2574 = vmatpush2.bf16.msra.mxu0 0
    %2575 = vmatprep.subr.bf16.mxu0 0
    %2576 = vmatpush2.bf16.msra.mxu0 0
    %2577 = vmatprep.subr.bf16.mxu0 0
    %2578 = vmatpush2.bf16.msra.mxu0 0
    %2579 = vmatprep.subr.bf16.mxu0 0
    %2580 = vmatpush2.bf16.msra.mxu0 0
    %2581 = vmatprep.subr.bf16.mxu0 0
    %2582 = vmatpush2.bf16.msra.mxu0 0
    %2583 = vmatprep.subr.bf16.mxu0 0
    %2584 = vmatpush2.bf16.msra.mxu0 0
    %2585 = vmatprep.subr.bf16.mxu0 0
    %2586 = vmatpush2.bf16.msra.mxu0 0
    %2587 = vmatprep.subr.bf16.mxu0 0
    %2588 = vmatpush2.bf16.msra.mxu0 0
    %2589 = vmatprep.mubr.bf16.mxu0 0
    %2590 = vmatmul.mubr.bf16.gmra.mxu0 %v2555
    %v2591 = vpop.f32.mrf.mxu0
    %v2592 = vadd.f32 %v2541, %v2591
    %v2593 = vpop.f32.mrf.mxu0
    %v2594 = vpop.f32.mrf.mxu0
    %v2595 = vadd.f32 %v2541, %v2594
    %v2596 = vpop.f32.mrf.mxu0
    %2597 = vdwg.mxu0
    %v2598 = vmul.f32 %v2592, 0.5
    %v2599 = vmul.f32 %v2595, 0.5
    %v2600 = vmul.f32 %v2592, 0.70710677
    %v2601 = vmul.f32 %v2595, 0.70710677
    %v2602 = verf.f32.pop %v2600
    %v2603 = verf.f32.pop %v2601
    %v2604 = vadd.f32 %v2602, 1.0
    %v2605 = vadd.f32 %v2603, 1.0
    %v2606 = vmul.f32 %v2598, %v2604
    %v2607 = vmul.f32 %v2599, %v2605
    %v2608 = vpack.c.bf16 %v2607, %v2606
    %v2609 = vlaneseq
    %v2610 = vshrl.u32 %v2609, 7
    %v2611 = vsub.s32 5, %v2610
    %v2612 = vrot.slane %v1402, %v2611
    %v2629 = vunpack.c.l.b16 %v1385
    %v2630 = vunpack.c.l.b16 %v1386
    %v2631 = vunpack.c.l.b16 %v1387
    %v2632 = vunpack.c.l.b16 %v1388
    %v2633 = vunpack.c.l.b16 %v1389
    %v2634 = vunpack.c.l.b16 %v1390
    %v2635 = vunpack.c.l.b16 %v1391
    %v2636 = vunpack.c.l.b16 %v1392
    %v2637 = vunpack.c.l.b16 %v1393
    %v2638 = vunpack.c.l.b16 %v1394
    %v2639 = vunpack.c.l.b16 %v1395
    %v2640 = vunpack.c.l.b16 %v1396
    %v2641 = vunpack.c.l.b16 %v1397
    %v2642 = vunpack.c.l.b16 %v1398
    %v2643 = vunpack.c.l.b16 %v1399
    %v2644 = vunpack.c.l.b16 %v1400
    %v2645 = vpack.c.b16 %v2630, %v2629
    %v2646 = vpack.c.b16 %v2632, %v2631
    %v2647 = vpack.c.b16 %v2634, %v2633
    %v2648 = vpack.c.b16 %v2636, %v2635
    %v2649 = vpack.c.b16 %v2638, %v2637
    %v2650 = vpack.c.b16 %v2640, %v2639
    %v2651 = vpack.c.b16 %v2642, %v2641
    %v2652 = vpack.c.b16 %v2644, %v2643
    %2661 = vmatprep.subr.bf16.mxu0 0
    %2662 = vmatpush1.bf16.msra.mxu0 %v2652
    %2663 = vmatprep.subr.bf16.mxu0 0
    %2664 = vmatpush1.bf16.msra.mxu0 %v2651
    %2665 = vmatprep.subr.bf16.mxu0 0
    %2666 = vmatpush1.bf16.msra.mxu0 %v2650
    %2667 = vmatprep.subr.bf16.mxu0 0
    %2668 = vmatpush1.bf16.msra.mxu0 %v2649
    %2669 = vmatprep.subr.bf16.mxu0 0
    %2670 = vmatpush1.bf16.msra.mxu0 %v2648
    %2671 = vmatprep.subr.bf16.mxu0 0
    %2672 = vmatpush1.bf16.msra.mxu0 %v2647
    %2673 = vmatprep.subr.bf16.mxu0 0
    %2674 = vmatpush1.bf16.msra.mxu0 %v2646
    %2675 = vmatprep.subr.bf16.mxu0 0
    %2676 = vmatpush1.bf16.msra.mxu0 %v2645
    %2677 = vmatprep.subr.bf16.mxu0 0
    %2678 = vmatpush2.bf16.msra.mxu0 0
    %2679 = vmatprep.subr.bf16.mxu0 0
    %2680 = vmatpush2.bf16.msra.mxu0 0
    %2681 = vmatprep.subr.bf16.mxu0 0
    %2682 = vmatpush2.bf16.msra.mxu0 0
    %2683 = vmatprep.subr.bf16.mxu0 0
    %2684 = vmatpush2.bf16.msra.mxu0 0
    %2685 = vmatprep.subr.bf16.mxu0 0
    %2686 = vmatpush2.bf16.msra.mxu0 0
    %2687 = vmatprep.subr.bf16.mxu0 0
    %2688 = vmatpush2.bf16.msra.mxu0 0
    %2689 = vmatprep.subr.bf16.mxu0 0
    %2690 = vmatpush2.bf16.msra.mxu0 0
    %2691 = vmatprep.subr.bf16.mxu0 0
    %2692 = vmatpush2.bf16.msra.mxu0 0
    %2693 = vmatprep.mubr.bf16.mxu0 0
    %2694 = vmatmul.mubr.bf16.gmra.mxu0 %v2608
    %v2695 = vpop.f32.mrf.mxu0
    %v2696 = vadd.f32 %v2612, %v2695
    %v2697 = vpop.f32.mrf.mxu0
    %v2698 = vpop.f32.mrf.mxu0
    %v2699 = vadd.f32 %v2612, %v2698
    %v2700 = vpop.f32.mrf.mxu0
    %2701 = vdwg.mxu0
    %v2702 = vadd.f32 %v2497, %v2696
    %v2703 = vadd.f32 %v2498, %v2699
    %s2704 = scalar_lea.vmem %s1, 32
    %v2705 = vld [vmem:[%s2704] sm:$0xf]
    %v2706 = vld [vmem:[%s2704 + $0x4] sm:$0xf]
    %v2707 = vld [vmem:[%s2704 + $0x8] sm:$0xf]
    %v2708 = vld [vmem:[%s2704 + $0xc] sm:$0xf]
    %s2709 = scalar_lea.vmem %s2, 32
    %v2710 = vld [vmem:[%s2709] sm:$0xf]
    %v2711 = vld [vmem:[%s2709 + $0x4] sm:$0xf]
    %v2712 = vld [vmem:[%s2709 + $0x8] sm:$0xf]
    %v2713 = vld [vmem:[%s2709 + $0xc] sm:$0xf]
    %s2714 = scalar_lea.vmem %s3, 32
    %v2715 = vld [vmem:[%s2714] sm:$0xf]
    %v2716 = vld [vmem:[%s2714 + $0x4] sm:$0xf]
    %v2717 = vld [vmem:[%s2714 + $0x8] sm:$0xf]
    %v2718 = vld [vmem:[%s2714 + $0xc] sm:$0xf]
    %s2719 = scalar_lea.vmem %s4, 128
    %v2720 = vld [vmem:[%s2719] sm:$0xf]
    %v2721 = vld [vmem:[%s2719 + $0x4] sm:$0xf]
    %v2722 = vld [vmem:[%s2719 + $0x8] sm:$0xf]
    %v2723 = vld [vmem:[%s2719 + $0xc] sm:$0xf]
    %v2724 = vld [vmem:[%s2719 + $0x10] sm:$0xf]
    %v2725 = vld [vmem:[%s2719 + $0x14] sm:$0xf]
    %v2726 = vld [vmem:[%s2719 + $0x18] sm:$0xf]
    %v2727 = vld [vmem:[%s2719 + $0x1c] sm:$0xf]
    %v2728 = vld [vmem:[%s2719 + $0x20] sm:$0xf]
    %v2729 = vld [vmem:[%s2719 + $0x24] sm:$0xf]
    %v2730 = vld [vmem:[%s2719 + $0x28] sm:$0xf]
    %v2731 = vld [vmem:[%s2719 + $0x2c] sm:$0xf]
    %v2732 = vld [vmem:[%s2719 + $0x30] sm:$0xf]
    %v2733 = vld [vmem:[%s2719 + $0x34] sm:$0xf]
    %v2734 = vld [vmem:[%s2719 + $0x38] sm:$0xf]
    %v2735 = vld [vmem:[%s2719 + $0x3c] sm:$0xf]
    %s2736 = scalar_lea.vmem %s5, 16
    %v2737 = vld [vmem:[%s2736] sm:$0x3f]
    %v2738 = vld [vmem:[%s6 + $0x2] sm:$0x1]
    %v2739 = vld [vmem:[%s7 + $0x2] sm:$0x1]
    %v2740 = vsel %vm64, %v2702, 0.0
    %2741 = vadd.xlane.f32.xlu0 %v2740
    %v2742 = vpop.xlane.xlu0 %2741
    %v2743 = vsel %vm64, %v2703, 0.0
    %2744 = vadd.xlane.f32.xlu0 %v2743
    %v2745 = vpop.xlane.xlu0 %2744
    %v2746 = vmul.f32 %v2742, %v71
    %v2747 = vmul.f32 %v2745, %v71
    %v2748 = vsub.f32 %v2702, %v2746
    %v2749 = vsub.f32 %v2703, %v2747
    %v2750 = vmul.f32 %v2748, %v2748
    %v2751 = vmul.f32 %v2749, %v2749
    %v2752 = vsel %vm64, %v2750, 0.0
    %2753 = vadd.xlane.f32.xlu0 %v2752
    %v2754 = vpop.xlane.xlu0 %2753
    %v2755 = vsel %vm64, %v2751, 0.0
    %2756 = vadd.xlane.f32.xlu0 %v2755
    %v2757 = vpop.xlane.xlu0 %2756
    %v2758 = vmul.f32 %v2754, %v71
    %v2759 = vmul.f32 %v2757, %v71
    %v2760 = vadd.f32 %v2758, 1e-05
    %v2761 = vadd.f32 %v2759, 1e-05
    %v2762 = vrsqrt.pop %v2760
    %v2763 = vrsqrt.pop %v2761
    %v2764 = vmul.f32 %v2748, %v2762
    %v2765 = vmul.f32 %v2749, %v2763
    %v2766 = vlaneseq
    %v2767 = vshrl.u32 %v2766, 7
    %v2768 = vsub.s32 0, %v2767
    %v2769 = vrot.slane %v2737, %v2768
    %v2770 = vmul.f32 %v2764, %v2769
    %v2771 = vmul.f32 %v2765, %v2769
    %v2772 = vlaneseq
    %v2773 = vshrl.u32 %v2772, 7
    %v2774 = vsub.s32 1, %v2773
    %v2775 = vrot.slane %v2737, %v2774
    %v2776 = vadd.f32 %v2770, %v2775
    %v2777 = vadd.f32 %v2771, %v2775
    %v2778 = vpack.c.bf16 %v2777, %v2776
    %v2779 = vlaneseq
    %v2780 = vshrl.u32 %v2779, 7
    %v2781 = vsub.s32 0, %v2780
    %v2782 = vrot.slane %v2738, %v2781
    %v2787 = vunpack.c.l.b16 %v2705
    %v2788 = vunpack.c.l.b16 %v2706
    %v2789 = vunpack.c.l.b16 %v2707
    %v2790 = vunpack.c.l.b16 %v2708
    %v2791 = vpack.c.b16 %v2788, %v2787
    %v2792 = vpack.c.b16 %v2790, %v2789
    %v2796 = vsel %vm64, %v2778, 0
    %2798 = vmatprep.subr.bf16.mxu0 0
    %2799 = vmatpush1.bf16.msra.mxu0 0
    %2800 = vmatprep.subr.bf16.mxu0 0
    %2801 = vmatpush1.bf16.msra.mxu0 0
    %2802 = vmatprep.subr.bf16.mxu0 0
    %2803 = vmatpush1.bf16.msra.mxu0 0
    %2804 = vmatprep.subr.bf16.mxu0 0
    %2805 = vmatpush1.bf16.msra.mxu0 0
    %2806 = vmatprep.subr.bf16.mxu0 0
    %2807 = vmatpush1.bf16.msra.mxu0 0
    %2808 = vmatprep.subr.bf16.mxu0 0
    %2809 = vmatpush1.bf16.msra.mxu0 0
    %2810 = vmatprep.subr.bf16.mxu0 0
    %2811 = vmatpush1.bf16.msra.mxu0 %v2792
    %2812 = vmatprep.subr.bf16.mxu0 0
    %2813 = vmatpush1.bf16.msra.mxu0 %v2791
    %2814 = vmatprep.subr.bf16.mxu0 0
    %2815 = vmatpush2.bf16.msra.mxu0 0
    %2816 = vmatprep.subr.bf16.mxu0 0
    %2817 = vmatpush2.bf16.msra.mxu0 0
    %2818 = vmatprep.subr.bf16.mxu0 0
    %2819 = vmatpush2.bf16.msra.mxu0 0
    %2820 = vmatprep.subr.bf16.mxu0 0
    %2821 = vmatpush2.bf16.msra.mxu0 0
    %2822 = vmatprep.subr.bf16.mxu0 0
    %2823 = vmatpush2.bf16.msra.mxu0 0
    %2824 = vmatprep.subr.bf16.mxu0 0
    %2825 = vmatpush2.bf16.msra.mxu0 0
    %2826 = vmatprep.subr.bf16.mxu0 0
    %2827 = vmatpush2.bf16.msra.mxu0 0
    %2828 = vmatprep.subr.bf16.mxu0 0
    %2829 = vmatpush2.bf16.msra.mxu0 0
    %2830 = vmatprep.mubr.bf16.mxu0 0
    %2831 = vmatmul.mubr.bf16.gmra.mxu0 %v2796
    %v2832 = vpop.f32.mrf.mxu0
    %v2833 = vadd.f32 %v2782, %v2832
    %v2834 = vpop.f32.mrf.mxu0
    %v2835 = vpop.f32.mrf.mxu0
    %v2836 = vadd.f32 %v2782, %v2835
    %v2837 = vpop.f32.mrf.mxu0
    %2838 = vdwg.mxu0
    %2841 = vrot.lane.b32.xlu0 %v2833, 120
    %v2842 = vpop.permute.xlu0 %2841
    %2843 = vrot.lane.b32.xlu0 %v2836, 120
    %v2844 = vpop.permute.xlu0 %2843
    %2847 = vrot.lane.b32.xlu0 %v2833, 112
    %v2848 = vpop.permute.xlu0 %2847
    %2849 = vrot.lane.b32.xlu0 %v2836, 112
    %v2850 = vpop.permute.xlu0 %2849
    %2853 = vrot.lane.b32.xlu0 %v2833, 104
    %v2854 = vpop.permute.xlu0 %2853
    %2855 = vrot.lane.b32.xlu0 %v2836, 104
    %v2856 = vpop.permute.xlu0 %2855
    %v2859 = vpack.c.bf16 %v2833, %v2833
    %v2860 = vpack.c.bf16 %v2836, %v2836
    %v2861 = vpack.c.bf16 %v2842, %v2842
    %v2862 = vpack.c.bf16 %v2844, %v2844
    %v2863 = vpack.c.bf16 %v2848, %v2848
    %v2864 = vpack.c.bf16 %v2850, %v2850
    %v2865 = vpack.c.bf16 %v2854, %v2854
    %v2866 = vpack.c.bf16 %v2856, %v2856
    %2868 = vrot.lane.b32.xlu0 %v2859, 96
    %v2869 = vpop.permute.xlu0 %2868
    %v2871 = vsel %vm196, %v2859, 0
    %v2874 = vsel %vm196, %v2869, 0
    %2876 = vmatprep.subr.bf16.mxu0 0
    %2877 = vmatpush1.bf16.xpose.msra.mxu0 0
    %2878 = vmatprep.subr.bf16.mxu0 0
    %2879 = vmatpush1.bf16.xpose.msra.mxu0 0
    %2880 = vmatprep.subr.bf16.mxu0 0
    %2881 = vmatpush1.bf16.xpose.msra.mxu0 0
    %2882 = vmatprep.subr.bf16.mxu0 0
    %2883 = vmatpush1.bf16.xpose.msra.mxu0 0
    %2884 = vmatprep.subr.bf16.mxu0 0
    %2885 = vmatpush1.bf16.xpose.msra.mxu0 0
    %2886 = vmatprep.subr.bf16.mxu0 0
    %2887 = vmatpush1.bf16.xpose.msra.mxu0 0
    %2888 = vmatprep.subr.bf16.mxu0 0
    %2889 = vmatpush1.bf16.xpose.msra.mxu0 0
    %2890 = vmatprep.subr.bf16.mxu0 0
    %2891 = vmatpush1.bf16.xpose.msra.mxu0 %v2874
    %2892 = vmatprep.subr.bf16.mxu0 0
    %2893 = vmatpush2.bf16.xpose.msra.mxu0 0
    %2894 = vmatprep.subr.bf16.mxu0 0
    %2895 = vmatpush2.bf16.xpose.msra.mxu0 0
    %2896 = vmatprep.subr.bf16.mxu0 0
    %2897 = vmatpush2.bf16.xpose.msra.mxu0 0
    %2898 = vmatprep.subr.bf16.mxu0 0
    %2899 = vmatpush2.bf16.xpose.msra.mxu0 0
    %2900 = vmatprep.subr.bf16.mxu0 0
    %2901 = vmatpush2.bf16.xpose.msra.mxu0 0
    %2902 = vmatprep.subr.bf16.mxu0 0
    %2903 = vmatpush2.bf16.xpose.msra.mxu0 0
    %2904 = vmatprep.subr.bf16.mxu0 0
    %2905 = vmatpush2.bf16.xpose.msra.mxu0 0
    %2906 = vmatprep.subr.bf16.mxu0 0
    %2907 = vmatpush2.bf16.xpose.msra.mxu0 0
    %2908 = vmatprep.mubr.bf16.mxu0 0
    %2909 = vmatmul.mubr.bf16.gmra.mxu0 %v2871
    %v2910 = vpop.f32.mrf.mxu0
    %v2911 = vadd.f32 0.0, %v2910
    %v2912 = vpop.f32.mrf.mxu0
    %v2913 = vpop.f32.mrf.mxu0
    %v2914 = vpop.f32.mrf.mxu0
    %2915 = vdwg.mxu0
    %2917 = vrot.lane.b32.xlu0 %v2860, 96
    %v2918 = vpop.permute.xlu0 %2917
    %v2920 = vsel %vm196, %v2860, 0
    %v2923 = vsel %vm196, %v2918, 0
    %2925 = vmatprep.subr.bf16.mxu0 0
    %2926 = vmatpush1.bf16.xpose.msra.mxu0 0
    %2927 = vmatprep.subr.bf16.mxu0 0
    %2928 = vmatpush1.bf16.xpose.msra.mxu0 0
    %2929 = vmatprep.subr.bf16.mxu0 0
    %2930 = vmatpush1.bf16.xpose.msra.mxu0 0
    %2931 = vmatprep.subr.bf16.mxu0 0
    %2932 = vmatpush1.bf16.xpose.msra.mxu0 0
    %2933 = vmatprep.subr.bf16.mxu0 0
    %2934 = vmatpush1.bf16.xpose.msra.mxu0 0
    %2935 = vmatprep.subr.bf16.mxu0 0
    %2936 = vmatpush1.bf16.xpose.msra.mxu0 0
    %2937 = vmatprep.subr.bf16.mxu0 0
    %2938 = vmatpush1.bf16.xpose.msra.mxu0 0
    %2939 = vmatprep.subr.bf16.mxu0 0
    %2940 = vmatpush1.bf16.xpose.msra.mxu0 %v2923
    %2941 = vmatprep.subr.bf16.mxu0 0
    %2942 = vmatpush2.bf16.xpose.msra.mxu0 0
    %2943 = vmatprep.subr.bf16.mxu0 0
    %2944 = vmatpush2.bf16.xpose.msra.mxu0 0
    %2945 = vmatprep.subr.bf16.mxu0 0
    %2946 = vmatpush2.bf16.xpose.msra.mxu0 0
    %2947 = vmatprep.subr.bf16.mxu0 0
    %2948 = vmatpush2.bf16.xpose.msra.mxu0 0
    %2949 = vmatprep.subr.bf16.mxu0 0
    %2950 = vmatpush2.bf16.xpose.msra.mxu0 0
    %2951 = vmatprep.subr.bf16.mxu0 0
    %2952 = vmatpush2.bf16.xpose.msra.mxu0 0
    %2953 = vmatprep.subr.bf16.mxu0 0
    %2954 = vmatpush2.bf16.xpose.msra.mxu0 0
    %2955 = vmatprep.subr.bf16.mxu0 0
    %2956 = vmatpush2.bf16.xpose.msra.mxu0 0
    %2957 = vmatprep.mubr.bf16.mxu0 0
    %2958 = vmatmul.mubr.bf16.gmra.mxu0 %v2920
    %v2959 = vpop.f32.mrf.mxu0
    %v2960 = vadd.f32 0.0, %v2959
    %v2961 = vpop.f32.mrf.mxu0
    %v2962 = vpop.f32.mrf.mxu0
    %v2963 = vpop.f32.mrf.mxu0
    %2964 = vdwg.mxu0
    %2966 = vrot.lane.b32.xlu0 %v2861, 96
    %v2967 = vpop.permute.xlu0 %2966
    %v2969 = vsel %vm196, %v2861, 0
    %v2972 = vsel %vm196, %v2967, 0
    %2974 = vmatprep.subr.bf16.mxu0 0
    %2975 = vmatpush1.bf16.xpose.msra.mxu0 0
    %2976 = vmatprep.subr.bf16.mxu0 0
    %2977 = vmatpush1.bf16.xpose.msra.mxu0 0
    %2978 = vmatprep.subr.bf16.mxu0 0
    %2979 = vmatpush1.bf16.xpose.msra.mxu0 0
    %2980 = vmatprep.subr.bf16.mxu0 0
    %2981 = vmatpush1.bf16.xpose.msra.mxu0 0
    %2982 = vmatprep.subr.bf16.mxu0 0
    %2983 = vmatpush1.bf16.xpose.msra.mxu0 0
    %2984 = vmatprep.subr.bf16.mxu0 0
    %2985 = vmatpush1.bf16.xpose.msra.mxu0 0
    %2986 = vmatprep.subr.bf16.mxu0 0
    %2987 = vmatpush1.bf16.xpose.msra.mxu0 0
    %2988 = vmatprep.subr.bf16.mxu0 0
    %2989 = vmatpush1.bf16.xpose.msra.mxu0 %v2972
    %2990 = vmatprep.subr.bf16.mxu0 0
    %2991 = vmatpush2.bf16.xpose.msra.mxu0 0
    %2992 = vmatprep.subr.bf16.mxu0 0
    %2993 = vmatpush2.bf16.xpose.msra.mxu0 0
    %2994 = vmatprep.subr.bf16.mxu0 0
    %2995 = vmatpush2.bf16.xpose.msra.mxu0 0
    %2996 = vmatprep.subr.bf16.mxu0 0
    %2997 = vmatpush2.bf16.xpose.msra.mxu0 0
    %2998 = vmatprep.subr.bf16.mxu0 0
    %2999 = vmatpush2.bf16.xpose.msra.mxu0 0
    %3000 = vmatprep.subr.bf16.mxu0 0
    %3001 = vmatpush2.bf16.xpose.msra.mxu0 0
    %3002 = vmatprep.subr.bf16.mxu0 0
    %3003 = vmatpush2.bf16.xpose.msra.mxu0 0
    %3004 = vmatprep.subr.bf16.mxu0 0
    %3005 = vmatpush2.bf16.xpose.msra.mxu0 0
    %3006 = vmatprep.mubr.bf16.mxu0 0
    %3007 = vmatmul.mubr.bf16.gmra.mxu0 %v2969
    %v3008 = vpop.f32.mrf.mxu0
    %v3009 = vadd.f32 0.0, %v3008
    %v3010 = vpop.f32.mrf.mxu0
    %v3011 = vpop.f32.mrf.mxu0
    %v3012 = vpop.f32.mrf.mxu0
    %3013 = vdwg.mxu0
    %3015 = vrot.lane.b32.xlu0 %v2862, 96
    %v3016 = vpop.permute.xlu0 %3015
    %v3018 = vsel %vm196, %v2862, 0
    %v3021 = vsel %vm196, %v3016, 0
    %3023 = vmatprep.subr.bf16.mxu0 0
    %3024 = vmatpush1.bf16.xpose.msra.mxu0 0
    %3025 = vmatprep.subr.bf16.mxu0 0
    %3026 = vmatpush1.bf16.xpose.msra.mxu0 0
    %3027 = vmatprep.subr.bf16.mxu0 0
    %3028 = vmatpush1.bf16.xpose.msra.mxu0 0
    %3029 = vmatprep.subr.bf16.mxu0 0
    %3030 = vmatpush1.bf16.xpose.msra.mxu0 0
    %3031 = vmatprep.subr.bf16.mxu0 0
    %3032 = vmatpush1.bf16.xpose.msra.mxu0 0
    %3033 = vmatprep.subr.bf16.mxu0 0
    %3034 = vmatpush1.bf16.xpose.msra.mxu0 0
    %3035 = vmatprep.subr.bf16.mxu0 0
    %3036 = vmatpush1.bf16.xpose.msra.mxu0 0
    %3037 = vmatprep.subr.bf16.mxu0 0
    %3038 = vmatpush1.bf16.xpose.msra.mxu0 %v3021
    %3039 = vmatprep.subr.bf16.mxu0 0
    %3040 = vmatpush2.bf16.xpose.msra.mxu0 0
    %3041 = vmatprep.subr.bf16.mxu0 0
    %3042 = vmatpush2.bf16.xpose.msra.mxu0 0
    %3043 = vmatprep.subr.bf16.mxu0 0
    %3044 = vmatpush2.bf16.xpose.msra.mxu0 0
    %3045 = vmatprep.subr.bf16.mxu0 0
    %3046 = vmatpush2.bf16.xpose.msra.mxu0 0
    %3047 = vmatprep.subr.bf16.mxu0 0
    %3048 = vmatpush2.bf16.xpose.msra.mxu0 0
    %3049 = vmatprep.subr.bf16.mxu0 0
    %3050 = vmatpush2.bf16.xpose.msra.mxu0 0
    %3051 = vmatprep.subr.bf16.mxu0 0
    %3052 = vmatpush2.bf16.xpose.msra.mxu0 0
    %3053 = vmatprep.subr.bf16.mxu0 0
    %3054 = vmatpush2.bf16.xpose.msra.mxu0 0
    %3055 = vmatprep.mubr.bf16.mxu0 0
    %3056 = vmatmul.mubr.bf16.gmra.mxu0 %v3018
    %v3057 = vpop.f32.mrf.mxu0
    %v3058 = vadd.f32 0.0, %v3057
    %v3059 = vpop.f32.mrf.mxu0
    %v3060 = vpop.f32.mrf.mxu0
    %v3061 = vpop.f32.mrf.mxu0
    %3062 = vdwg.mxu0
    %3064 = vrot.lane.b32.xlu0 %v2863, 96
    %v3065 = vpop.permute.xlu0 %3064
    %v3067 = vsel %vm196, %v2863, 0
    %v3070 = vsel %vm196, %v3065, 0
    %3072 = vmatprep.subr.bf16.mxu0 0
    %3073 = vmatpush1.bf16.xpose.msra.mxu0 0
    %3074 = vmatprep.subr.bf16.mxu0 0
    %3075 = vmatpush1.bf16.xpose.msra.mxu0 0
    %3076 = vmatprep.subr.bf16.mxu0 0
    %3077 = vmatpush1.bf16.xpose.msra.mxu0 0
    %3078 = vmatprep.subr.bf16.mxu0 0
    %3079 = vmatpush1.bf16.xpose.msra.mxu0 0
    %3080 = vmatprep.subr.bf16.mxu0 0
    %3081 = vmatpush1.bf16.xpose.msra.mxu0 0
    %3082 = vmatprep.subr.bf16.mxu0 0
    %3083 = vmatpush1.bf16.xpose.msra.mxu0 0
    %3084 = vmatprep.subr.bf16.mxu0 0
    %3085 = vmatpush1.bf16.xpose.msra.mxu0 0
    %3086 = vmatprep.subr.bf16.mxu0 0
    %3087 = vmatpush1.bf16.xpose.msra.mxu0 %v3070
    %3088 = vmatprep.subr.bf16.mxu0 0
    %3089 = vmatpush2.bf16.xpose.msra.mxu0 0
    %3090 = vmatprep.subr.bf16.mxu0 0
    %3091 = vmatpush2.bf16.xpose.msra.mxu0 0
    %3092 = vmatprep.subr.bf16.mxu0 0
    %3093 = vmatpush2.bf16.xpose.msra.mxu0 0
    %3094 = vmatprep.subr.bf16.mxu0 0
    %3095 = vmatpush2.bf16.xpose.msra.mxu0 0
    %3096 = vmatprep.subr.bf16.mxu0 0
    %3097 = vmatpush2.bf16.xpose.msra.mxu0 0
    %3098 = vmatprep.subr.bf16.mxu0 0
    %3099 = vmatpush2.bf16.xpose.msra.mxu0 0
    %3100 = vmatprep.subr.bf16.mxu0 0
    %3101 = vmatpush2.bf16.xpose.msra.mxu0 0
    %3102 = vmatprep.subr.bf16.mxu0 0
    %3103 = vmatpush2.bf16.xpose.msra.mxu0 0
    %3104 = vmatprep.mubr.bf16.mxu0 0
    %3105 = vmatmul.mubr.bf16.gmra.mxu0 %v3067
    %v3106 = vpop.f32.mrf.mxu0
    %v3107 = vadd.f32 0.0, %v3106
    %v3108 = vpop.f32.mrf.mxu0
    %v3109 = vpop.f32.mrf.mxu0
    %v3110 = vpop.f32.mrf.mxu0
    %3111 = vdwg.mxu0
    %3113 = vrot.lane.b32.xlu0 %v2864, 96
    %v3114 = vpop.permute.xlu0 %3113
    %v3116 = vsel %vm196, %v2864, 0
    %v3119 = vsel %vm196, %v3114, 0
    %3121 = vmatprep.subr.bf16.mxu0 0
    %3122 = vmatpush1.bf16.xpose.msra.mxu0 0
    %3123 = vmatprep.subr.bf16.mxu0 0
    %3124 = vmatpush1.bf16.xpose.msra.mxu0 0
    %3125 = vmatprep.subr.bf16.mxu0 0
    %3126 = vmatpush1.bf16.xpose.msra.mxu0 0
    %3127 = vmatprep.subr.bf16.mxu0 0
    %3128 = vmatpush1.bf16.xpose.msra.mxu0 0
    %3129 = vmatprep.subr.bf16.mxu0 0
    %3130 = vmatpush1.bf16.xpose.msra.mxu0 0
    %3131 = vmatprep.subr.bf16.mxu0 0
    %3132 = vmatpush1.bf16.xpose.msra.mxu0 0
    %3133 = vmatprep.subr.bf16.mxu0 0
    %3134 = vmatpush1.bf16.xpose.msra.mxu0 0
    %3135 = vmatprep.subr.bf16.mxu0 0
    %3136 = vmatpush1.bf16.xpose.msra.mxu0 %v3119
    %3137 = vmatprep.subr.bf16.mxu0 0
    %3138 = vmatpush2.bf16.xpose.msra.mxu0 0
    %3139 = vmatprep.subr.bf16.mxu0 0
    %3140 = vmatpush2.bf16.xpose.msra.mxu0 0
    %3141 = vmatprep.subr.bf16.mxu0 0
    %3142 = vmatpush2.bf16.xpose.msra.mxu0 0
    %3143 = vmatprep.subr.bf16.mxu0 0
    %3144 = vmatpush2.bf16.xpose.msra.mxu0 0
    %3145 = vmatprep.subr.bf16.mxu0 0
    %3146 = vmatpush2.bf16.xpose.msra.mxu0 0
    %3147 = vmatprep.subr.bf16.mxu0 0
    %3148 = vmatpush2.bf16.xpose.msra.mxu0 0
    %3149 = vmatprep.subr.bf16.mxu0 0
    %3150 = vmatpush2.bf16.xpose.msra.mxu0 0
    %3151 = vmatprep.subr.bf16.mxu0 0
    %3152 = vmatpush2.bf16.xpose.msra.mxu0 0
    %3153 = vmatprep.mubr.bf16.mxu0 0
    %3154 = vmatmul.mubr.bf16.gmra.mxu0 %v3116
    %v3155 = vpop.f32.mrf.mxu0
    %v3156 = vadd.f32 0.0, %v3155
    %v3157 = vpop.f32.mrf.mxu0
    %v3158 = vpop.f32.mrf.mxu0
    %v3159 = vpop.f32.mrf.mxu0
    %3160 = vdwg.mxu0
    %3162 = vrot.lane.b32.xlu0 %v2865, 96
    %v3163 = vpop.permute.xlu0 %3162
    %v3165 = vsel %vm196, %v2865, 0
    %v3168 = vsel %vm196, %v3163, 0
    %3170 = vmatprep.subr.bf16.mxu0 0
    %3171 = vmatpush1.bf16.xpose.msra.mxu0 0
    %3172 = vmatprep.subr.bf16.mxu0 0
    %3173 = vmatpush1.bf16.xpose.msra.mxu0 0
    %3174 = vmatprep.subr.bf16.mxu0 0
    %3175 = vmatpush1.bf16.xpose.msra.mxu0 0
    %3176 = vmatprep.subr.bf16.mxu0 0
    %3177 = vmatpush1.bf16.xpose.msra.mxu0 0
    %3178 = vmatprep.subr.bf16.mxu0 0
    %3179 = vmatpush1.bf16.xpose.msra.mxu0 0
    %3180 = vmatprep.subr.bf16.mxu0 0
    %3181 = vmatpush1.bf16.xpose.msra.mxu0 0
    %3182 = vmatprep.subr.bf16.mxu0 0
    %3183 = vmatpush1.bf16.xpose.msra.mxu0 0
    %3184 = vmatprep.subr.bf16.mxu0 0
    %3185 = vmatpush1.bf16.xpose.msra.mxu0 %v3168
    %3186 = vmatprep.subr.bf16.mxu0 0
    %3187 = vmatpush2.bf16.xpose.msra.mxu0 0
    %3188 = vmatprep.subr.bf16.mxu0 0
    %3189 = vmatpush2.bf16.xpose.msra.mxu0 0
    %3190 = vmatprep.subr.bf16.mxu0 0
    %3191 = vmatpush2.bf16.xpose.msra.mxu0 0
    %3192 = vmatprep.subr.bf16.mxu0 0
    %3193 = vmatpush2.bf16.xpose.msra.mxu0 0
    %3194 = vmatprep.subr.bf16.mxu0 0
    %3195 = vmatpush2.bf16.xpose.msra.mxu0 0
    %3196 = vmatprep.subr.bf16.mxu0 0
    %3197 = vmatpush2.bf16.xpose.msra.mxu0 0
    %3198 = vmatprep.subr.bf16.mxu0 0
    %3199 = vmatpush2.bf16.xpose.msra.mxu0 0
    %3200 = vmatprep.subr.bf16.mxu0 0
    %3201 = vmatpush2.bf16.xpose.msra.mxu0 0
    %3202 = vmatprep.mubr.bf16.mxu0 0
    %3203 = vmatmul.mubr.bf16.gmra.mxu0 %v3165
    %v3204 = vpop.f32.mrf.mxu0
    %v3205 = vadd.f32 0.0, %v3204
    %v3206 = vpop.f32.mrf.mxu0
    %v3207 = vpop.f32.mrf.mxu0
    %v3208 = vpop.f32.mrf.mxu0
    %3209 = vdwg.mxu0
    %3211 = vrot.lane.b32.xlu0 %v2866, 96
    %v3212 = vpop.permute.xlu0 %3211
    %v3214 = vsel %vm196, %v2866, 0
    %v3217 = vsel %vm196, %v3212, 0
    %3219 = vmatprep.subr.bf16.mxu0 0
    %3220 = vmatpush1.bf16.xpose.msra.mxu0 0
    %3221 = vmatprep.subr.bf16.mxu0 0
    %3222 = vmatpush1.bf16.xpose.msra.mxu0 0
    %3223 = vmatprep.subr.bf16.mxu0 0
    %3224 = vmatpush1.bf16.xpose.msra.mxu0 0
    %3225 = vmatprep.subr.bf16.mxu0 0
    %3226 = vmatpush1.bf16.xpose.msra.mxu0 0
    %3227 = vmatprep.subr.bf16.mxu0 0
    %3228 = vmatpush1.bf16.xpose.msra.mxu0 0
    %3229 = vmatprep.subr.bf16.mxu0 0
    %3230 = vmatpush1.bf16.xpose.msra.mxu0 0
    %3231 = vmatprep.subr.bf16.mxu0 0
    %3232 = vmatpush1.bf16.xpose.msra.mxu0 0
    %3233 = vmatprep.subr.bf16.mxu0 0
    %3234 = vmatpush1.bf16.xpose.msra.mxu0 %v3217
    %3235 = vmatprep.subr.bf16.mxu0 0
    %3236 = vmatpush2.bf16.xpose.msra.mxu0 0
    %3237 = vmatprep.subr.bf16.mxu0 0
    %3238 = vmatpush2.bf16.xpose.msra.mxu0 0
    %3239 = vmatprep.subr.bf16.mxu0 0
    %3240 = vmatpush2.bf16.xpose.msra.mxu0 0
    %3241 = vmatprep.subr.bf16.mxu0 0
    %3242 = vmatpush2.bf16.xpose.msra.mxu0 0
    %3243 = vmatprep.subr.bf16.mxu0 0
    %3244 = vmatpush2.bf16.xpose.msra.mxu0 0
    %3245 = vmatprep.subr.bf16.mxu0 0
    %3246 = vmatpush2.bf16.xpose.msra.mxu0 0
    %3247 = vmatprep.subr.bf16.mxu0 0
    %3248 = vmatpush2.bf16.xpose.msra.mxu0 0
    %3249 = vmatprep.subr.bf16.mxu0 0
    %3250 = vmatpush2.bf16.xpose.msra.mxu0 0
    %3251 = vmatprep.mubr.bf16.mxu0 0
    %3252 = vmatmul.mubr.bf16.gmra.mxu0 %v3214
    %v3253 = vpop.f32.mrf.mxu0
    %v3254 = vadd.f32 0.0, %v3253
    %v3255 = vpop.f32.mrf.mxu0
    %v3256 = vpop.f32.mrf.mxu0
    %v3257 = vpop.f32.mrf.mxu0
    %3258 = vdwg.mxu0
    %v3259 = vsel %vm196, %v2911, -inf
    %3260 = vmax.xlane.f32.xlu0 %v3259
    %v3261 = vpop.xlane.xlu0 %3260
    %v3262 = vsel %vm196, %v2960, -inf
    %3263 = vmax.xlane.f32.xlu0 %v3262
    %v3264 = vpop.xlane.xlu0 %3263
    %v3265 = vsel %vm196, %v3009, -inf
    %3266 = vmax.xlane.f32.xlu0 %v3265
    %v3267 = vpop.xlane.xlu0 %3266
    %v3268 = vsel %vm196, %v3058, -inf
    %3269 = vmax.xlane.f32.xlu0 %v3268
    %v3270 = vpop.xlane.xlu0 %3269
    %v3271 = vsel %vm196, %v3107, -inf
    %3272 = vmax.xlane.f32.xlu0 %v3271
    %v3273 = vpop.xlane.xlu0 %3272
    %v3274 = vsel %vm196, %v3156, -inf
    %3275 = vmax.xlane.f32.xlu0 %v3274
    %v3276 = vpop.xlane.xlu0 %3275
    %v3277 = vsel %vm196, %v3205, -inf
    %3278 = vmax.xlane.f32.xlu0 %v3277
    %v3279 = vpop.xlane.xlu0 %3278
    %v3280 = vsel %vm196, %v3254, -inf
    %3281 = vmax.xlane.f32.xlu0 %v3280
    %v3282 = vpop.xlane.xlu0 %3281
    %v3283 = vsub.f32 %v2911, %v3261
    %v3284 = vsub.f32 %v2960, %v3264
    %v3285 = vsub.f32 %v3009, %v3267
    %v3286 = vsub.f32 %v3058, %v3270
    %v3287 = vsub.f32 %v3107, %v3273
    %v3288 = vsub.f32 %v3156, %v3276
    %v3289 = vsub.f32 %v3205, %v3279
    %v3290 = vsub.f32 %v3254, %v3282
    %v3291 = vmul.f32 %v3283, 1.442695
    %v3292 = vpow.pop %v3291
    %v3293 = vmul.f32 %v3284, 1.442695
    %v3294 = vpow.pop %v3293
    %v3295 = vmul.f32 %v3285, 1.442695
    %v3296 = vpow.pop %v3295
    %v3297 = vmul.f32 %v3286, 1.442695
    %v3298 = vpow.pop %v3297
    %v3299 = vmul.f32 %v3287, 1.442695
    %v3300 = vpow.pop %v3299
    %v3301 = vmul.f32 %v3288, 1.442695
    %v3302 = vpow.pop %v3301
    %v3303 = vmul.f32 %v3289, 1.442695
    %v3304 = vpow.pop %v3303
    %v3305 = vmul.f32 %v3290, 1.442695
    %v3306 = vpow.pop %v3305
    %v3307 = vsel %vm196, %v3292, 0.0
    %3308 = vadd.xlane.f32.xlu0 %v3307
    %v3309 = vpop.xlane.xlu0 %3308
    %v3310 = vsel %vm196, %v3294, 0.0
    %3311 = vadd.xlane.f32.xlu0 %v3310
    %v3312 = vpop.xlane.xlu0 %3311
    %v3313 = vsel %vm196, %v3296, 0.0
    %3314 = vadd.xlane.f32.xlu0 %v3313
    %v3315 = vpop.xlane.xlu0 %3314
    %v3316 = vsel %vm196, %v3298, 0.0
    %3317 = vadd.xlane.f32.xlu0 %v3316
    %v3318 = vpop.xlane.xlu0 %3317
    %v3319 = vsel %vm196, %v3300, 0.0
    %3320 = vadd.xlane.f32.xlu0 %v3319
    %v3321 = vpop.xlane.xlu0 %3320
    %v3322 = vsel %vm196, %v3302, 0.0
    %3323 = vadd.xlane.f32.xlu0 %v3322
    %v3324 = vpop.xlane.xlu0 %3323
    %v3325 = vsel %vm196, %v3304, 0.0
    %3326 = vadd.xlane.f32.xlu0 %v3325
    %v3327 = vpop.xlane.xlu0 %3326
    %v3328 = vsel %vm196, %v3306, 0.0
    %3329 = vadd.xlane.f32.xlu0 %v3328
    %v3330 = vpop.xlane.xlu0 %3329
    %v3331 = vrcp.pop %v3309
    %v3332 = vrcp.pop %v3312
    %v3333 = vrcp.pop %v3315
    %v3334 = vrcp.pop %v3318
    %v3335 = vrcp.pop %v3321
    %v3336 = vrcp.pop %v3324
    %v3337 = vrcp.pop %v3327
    %v3338 = vrcp.pop %v3330
    %v3339 = vmul.f32 %v3292, %v3331
    %v3340 = vmul.f32 %v3294, %v3332
    %v3341 = vmul.f32 %v3296, %v3333
    %v3342 = vmul.f32 %v3298, %v3334
    %v3343 = vmul.f32 %v3300, %v3335
    %v3344 = vmul.f32 %v3302, %v3336
    %v3345 = vmul.f32 %v3304, %v3337
    %v3346 = vmul.f32 %v3306, %v3338
    %v3347 = vpack.c.bf16 %v3339, %v3339
    %v3348 = vpack.c.bf16 %v3340, %v3340
    %v3349 = vpack.c.bf16 %v3341, %v3341
    %v3350 = vpack.c.bf16 %v3342, %v3342
    %v3351 = vpack.c.bf16 %v3343, %v3343
    %v3352 = vpack.c.bf16 %v3344, %v3344
    %v3353 = vpack.c.bf16 %v3345, %v3345
    %v3354 = vpack.c.bf16 %v3346, %v3346
    %3355 = vrot.lane.b32.xlu0 %v2859, 64
    %v3356 = vpop.permute.xlu0 %3355
    %v3358 = vsel %vm196, %v3347, 0
    %v3361 = vsel %vm687, %v3356, 0
    %3363 = vmatprep.subr.bf16.mxu0 0
    %3364 = vmatpush1.bf16.msra.mxu0 0
    %3365 = vmatprep.subr.bf16.mxu0 0
    %3366 = vmatpush1.bf16.msra.mxu0 0
    %3367 = vmatprep.subr.bf16.mxu0 0
    %3368 = vmatpush1.bf16.msra.mxu0 0
    %3369 = vmatprep.subr.bf16.mxu0 0
    %3370 = vmatpush1.bf16.msra.mxu0 0
    %3371 = vmatprep.subr.bf16.mxu0 0
    %3372 = vmatpush1.bf16.msra.mxu0 0
    %3373 = vmatprep.subr.bf16.mxu0 0
    %3374 = vmatpush1.bf16.msra.mxu0 0
    %3375 = vmatprep.subr.bf16.mxu0 0
    %3376 = vmatpush1.bf16.msra.mxu0 0
    %3377 = vmatprep.subr.bf16.mxu0 0
    %3378 = vmatpush1.bf16.msra.mxu0 %v3361
    %3379 = vmatprep.subr.bf16.mxu0 0
    %3380 = vmatpush2.bf16.msra.mxu0 0
    %3381 = vmatprep.subr.bf16.mxu0 0
    %3382 = vmatpush2.bf16.msra.mxu0 0
    %3383 = vmatprep.subr.bf16.mxu0 0
    %3384 = vmatpush2.bf16.msra.mxu0 0
    %3385 = vmatprep.subr.bf16.mxu0 0
    %3386 = vmatpush2.bf16.msra.mxu0 0
    %3387 = vmatprep.subr.bf16.mxu0 0
    %3388 = vmatpush2.bf16.msra.mxu0 0
    %3389 = vmatprep.subr.bf16.mxu0 0
    %3390 = vmatpush2.bf16.msra.mxu0 0
    %3391 = vmatprep.subr.bf16.mxu0 0
    %3392 = vmatpush2.bf16.msra.mxu0 0
    %3393 = vmatprep.subr.bf16.mxu0 0
    %3394 = vmatpush2.bf16.msra.mxu0 0
    %3395 = vmatprep.mubr.bf16.mxu0 0
    %3396 = vmatmul.mubr.bf16.gmra.mxu0 %v3358
    %v3397 = vpop.f32.mrf.mxu0
    %v3398 = vadd.f32 0.0, %v3397
    %v3399 = vpop.f32.mrf.mxu0
    %v3400 = vpop.f32.mrf.mxu0
    %v3401 = vpop.f32.mrf.mxu0
    %3402 = vdwg.mxu0
    %3403 = vrot.lane.b32.xlu0 %v2860, 64
    %v3404 = vpop.permute.xlu0 %3403
    %v3406 = vsel %vm196, %v3348, 0
    %v3409 = vsel %vm687, %v3404, 0
    %3411 = vmatprep.subr.bf16.mxu0 0
    %3412 = vmatpush1.bf16.msra.mxu0 0
    %3413 = vmatprep.subr.bf16.mxu0 0
    %3414 = vmatpush1.bf16.msra.mxu0 0
    %3415 = vmatprep.subr.bf16.mxu0 0
    %3416 = vmatpush1.bf16.msra.mxu0 0
    %3417 = vmatprep.subr.bf16.mxu0 0
    %3418 = vmatpush1.bf16.msra.mxu0 0
    %3419 = vmatprep.subr.bf16.mxu0 0
    %3420 = vmatpush1.bf16.msra.mxu0 0
    %3421 = vmatprep.subr.bf16.mxu0 0
    %3422 = vmatpush1.bf16.msra.mxu0 0
    %3423 = vmatprep.subr.bf16.mxu0 0
    %3424 = vmatpush1.bf16.msra.mxu0 0
    %3425 = vmatprep.subr.bf16.mxu0 0
    %3426 = vmatpush1.bf16.msra.mxu0 %v3409
    %3427 = vmatprep.subr.bf16.mxu0 0
    %3428 = vmatpush2.bf16.msra.mxu0 0
    %3429 = vmatprep.subr.bf16.mxu0 0
    %3430 = vmatpush2.bf16.msra.mxu0 0
    %3431 = vmatprep.subr.bf16.mxu0 0
    %3432 = vmatpush2.bf16.msra.mxu0 0
    %3433 = vmatprep.subr.bf16.mxu0 0
    %3434 = vmatpush2.bf16.msra.mxu0 0
    %3435 = vmatprep.subr.bf16.mxu0 0
    %3436 = vmatpush2.bf16.msra.mxu0 0
    %3437 = vmatprep.subr.bf16.mxu0 0
    %3438 = vmatpush2.bf16.msra.mxu0 0
    %3439 = vmatprep.subr.bf16.mxu0 0
    %3440 = vmatpush2.bf16.msra.mxu0 0
    %3441 = vmatprep.subr.bf16.mxu0 0
    %3442 = vmatpush2.bf16.msra.mxu0 0
    %3443 = vmatprep.mubr.bf16.mxu0 0
    %3444 = vmatmul.mubr.bf16.gmra.mxu0 %v3406
    %v3445 = vpop.f32.mrf.mxu0
    %v3446 = vadd.f32 0.0, %v3445
    %v3447 = vpop.f32.mrf.mxu0
    %v3448 = vpop.f32.mrf.mxu0
    %v3449 = vpop.f32.mrf.mxu0
    %3450 = vdwg.mxu0
    %3451 = vrot.lane.b32.xlu0 %v2861, 64
    %v3452 = vpop.permute.xlu0 %3451
    %v3454 = vsel %vm196, %v3349, 0
    %v3457 = vsel %vm687, %v3452, 0
    %3459 = vmatprep.subr.bf16.mxu0 0
    %3460 = vmatpush1.bf16.msra.mxu0 0
    %3461 = vmatprep.subr.bf16.mxu0 0
    %3462 = vmatpush1.bf16.msra.mxu0 0
    %3463 = vmatprep.subr.bf16.mxu0 0
    %3464 = vmatpush1.bf16.msra.mxu0 0
    %3465 = vmatprep.subr.bf16.mxu0 0
    %3466 = vmatpush1.bf16.msra.mxu0 0
    %3467 = vmatprep.subr.bf16.mxu0 0
    %3468 = vmatpush1.bf16.msra.mxu0 0
    %3469 = vmatprep.subr.bf16.mxu0 0
    %3470 = vmatpush1.bf16.msra.mxu0 0
    %3471 = vmatprep.subr.bf16.mxu0 0
    %3472 = vmatpush1.bf16.msra.mxu0 0
    %3473 = vmatprep.subr.bf16.mxu0 0
    %3474 = vmatpush1.bf16.msra.mxu0 %v3457
    %3475 = vmatprep.subr.bf16.mxu0 0
    %3476 = vmatpush2.bf16.msra.mxu0 0
    %3477 = vmatprep.subr.bf16.mxu0 0
    %3478 = vmatpush2.bf16.msra.mxu0 0
    %3479 = vmatprep.subr.bf16.mxu0 0
    %3480 = vmatpush2.bf16.msra.mxu0 0
    %3481 = vmatprep.subr.bf16.mxu0 0
    %3482 = vmatpush2.bf16.msra.mxu0 0
    %3483 = vmatprep.subr.bf16.mxu0 0
    %3484 = vmatpush2.bf16.msra.mxu0 0
    %3485 = vmatprep.subr.bf16.mxu0 0
    %3486 = vmatpush2.bf16.msra.mxu0 0
    %3487 = vmatprep.subr.bf16.mxu0 0
    %3488 = vmatpush2.bf16.msra.mxu0 0
    %3489 = vmatprep.subr.bf16.mxu0 0
    %3490 = vmatpush2.bf16.msra.mxu0 0
    %3491 = vmatprep.mubr.bf16.mxu0 0
    %3492 = vmatmul.mubr.bf16.gmra.mxu0 %v3454
    %v3493 = vpop.f32.mrf.mxu0
    %v3494 = vadd.f32 0.0, %v3493
    %v3495 = vpop.f32.mrf.mxu0
    %v3496 = vpop.f32.mrf.mxu0
    %v3497 = vpop.f32.mrf.mxu0
    %3498 = vdwg.mxu0
    %3499 = vrot.lane.b32.xlu0 %v2862, 64
    %v3500 = vpop.permute.xlu0 %3499
    %v3502 = vsel %vm196, %v3350, 0
    %v3505 = vsel %vm687, %v3500, 0
    %3507 = vmatprep.subr.bf16.mxu0 0
    %3508 = vmatpush1.bf16.msra.mxu0 0
    %3509 = vmatprep.subr.bf16.mxu0 0
    %3510 = vmatpush1.bf16.msra.mxu0 0
    %3511 = vmatprep.subr.bf16.mxu0 0
    %3512 = vmatpush1.bf16.msra.mxu0 0
    %3513 = vmatprep.subr.bf16.mxu0 0
    %3514 = vmatpush1.bf16.msra.mxu0 0
    %3515 = vmatprep.subr.bf16.mxu0 0
    %3516 = vmatpush1.bf16.msra.mxu0 0
    %3517 = vmatprep.subr.bf16.mxu0 0
    %3518 = vmatpush1.bf16.msra.mxu0 0
    %3519 = vmatprep.subr.bf16.mxu0 0
    %3520 = vmatpush1.bf16.msra.mxu0 0
    %3521 = vmatprep.subr.bf16.mxu0 0
    %3522 = vmatpush1.bf16.msra.mxu0 %v3505
    %3523 = vmatprep.subr.bf16.mxu0 0
    %3524 = vmatpush2.bf16.msra.mxu0 0
    %3525 = vmatprep.subr.bf16.mxu0 0
    %3526 = vmatpush2.bf16.msra.mxu0 0
    %3527 = vmatprep.subr.bf16.mxu0 0
    %3528 = vmatpush2.bf16.msra.mxu0 0
    %3529 = vmatprep.subr.bf16.mxu0 0
    %3530 = vmatpush2.bf16.msra.mxu0 0
    %3531 = vmatprep.subr.bf16.mxu0 0
    %3532 = vmatpush2.bf16.msra.mxu0 0
    %3533 = vmatprep.subr.bf16.mxu0 0
    %3534 = vmatpush2.bf16.msra.mxu0 0
    %3535 = vmatprep.subr.bf16.mxu0 0
    %3536 = vmatpush2.bf16.msra.mxu0 0
    %3537 = vmatprep.subr.bf16.mxu0 0
    %3538 = vmatpush2.bf16.msra.mxu0 0
    %3539 = vmatprep.mubr.bf16.mxu0 0
    %3540 = vmatmul.mubr.bf16.gmra.mxu0 %v3502
    %v3541 = vpop.f32.mrf.mxu0
    %v3542 = vadd.f32 0.0, %v3541
    %v3543 = vpop.f32.mrf.mxu0
    %v3544 = vpop.f32.mrf.mxu0
    %v3545 = vpop.f32.mrf.mxu0
    %3546 = vdwg.mxu0
    %3547 = vrot.lane.b32.xlu0 %v2863, 64
    %v3548 = vpop.permute.xlu0 %3547
    %v3550 = vsel %vm196, %v3351, 0
    %v3553 = vsel %vm687, %v3548, 0
    %3555 = vmatprep.subr.bf16.mxu0 0
    %3556 = vmatpush1.bf16.msra.mxu0 0
    %3557 = vmatprep.subr.bf16.mxu0 0
    %3558 = vmatpush1.bf16.msra.mxu0 0
    %3559 = vmatprep.subr.bf16.mxu0 0
    %3560 = vmatpush1.bf16.msra.mxu0 0
    %3561 = vmatprep.subr.bf16.mxu0 0
    %3562 = vmatpush1.bf16.msra.mxu0 0
    %3563 = vmatprep.subr.bf16.mxu0 0
    %3564 = vmatpush1.bf16.msra.mxu0 0
    %3565 = vmatprep.subr.bf16.mxu0 0
    %3566 = vmatpush1.bf16.msra.mxu0 0
    %3567 = vmatprep.subr.bf16.mxu0 0
    %3568 = vmatpush1.bf16.msra.mxu0 0
    %3569 = vmatprep.subr.bf16.mxu0 0
    %3570 = vmatpush1.bf16.msra.mxu0 %v3553
    %3571 = vmatprep.subr.bf16.mxu0 0
    %3572 = vmatpush2.bf16.msra.mxu0 0
    %3573 = vmatprep.subr.bf16.mxu0 0
    %3574 = vmatpush2.bf16.msra.mxu0 0
    %3575 = vmatprep.subr.bf16.mxu0 0
    %3576 = vmatpush2.bf16.msra.mxu0 0
    %3577 = vmatprep.subr.bf16.mxu0 0
    %3578 = vmatpush2.bf16.msra.mxu0 0
    %3579 = vmatprep.subr.bf16.mxu0 0
    %3580 = vmatpush2.bf16.msra.mxu0 0
    %3581 = vmatprep.subr.bf16.mxu0 0
    %3582 = vmatpush2.bf16.msra.mxu0 0
    %3583 = vmatprep.subr.bf16.mxu0 0
    %3584 = vmatpush2.bf16.msra.mxu0 0
    %3585 = vmatprep.subr.bf16.mxu0 0
    %3586 = vmatpush2.bf16.msra.mxu0 0
    %3587 = vmatprep.mubr.bf16.mxu0 0
    %3588 = vmatmul.mubr.bf16.gmra.mxu0 %v3550
    %v3589 = vpop.f32.mrf.mxu0
    %v3590 = vadd.f32 0.0, %v3589
    %v3591 = vpop.f32.mrf.mxu0
    %v3592 = vpop.f32.mrf.mxu0
    %v3593 = vpop.f32.mrf.mxu0
    %3594 = vdwg.mxu0
    %3595 = vrot.lane.b32.xlu0 %v2864, 64
    %v3596 = vpop.permute.xlu0 %3595
    %v3598 = vsel %vm196, %v3352, 0
    %v3601 = vsel %vm687, %v3596, 0
    %3603 = vmatprep.subr.bf16.mxu0 0
    %3604 = vmatpush1.bf16.msra.mxu0 0
    %3605 = vmatprep.subr.bf16.mxu0 0
    %3606 = vmatpush1.bf16.msra.mxu0 0
    %3607 = vmatprep.subr.bf16.mxu0 0
    %3608 = vmatpush1.bf16.msra.mxu0 0
    %3609 = vmatprep.subr.bf16.mxu0 0
    %3610 = vmatpush1.bf16.msra.mxu0 0
    %3611 = vmatprep.subr.bf16.mxu0 0
    %3612 = vmatpush1.bf16.msra.mxu0 0
    %3613 = vmatprep.subr.bf16.mxu0 0
    %3614 = vmatpush1.bf16.msra.mxu0 0
    %3615 = vmatprep.subr.bf16.mxu0 0
    %3616 = vmatpush1.bf16.msra.mxu0 0
    %3617 = vmatprep.subr.bf16.mxu0 0
    %3618 = vmatpush1.bf16.msra.mxu0 %v3601
    %3619 = vmatprep.subr.bf16.mxu0 0
    %3620 = vmatpush2.bf16.msra.mxu0 0
    %3621 = vmatprep.subr.bf16.mxu0 0
    %3622 = vmatpush2.bf16.msra.mxu0 0
    %3623 = vmatprep.subr.bf16.mxu0 0
    %3624 = vmatpush2.bf16.msra.mxu0 0
    %3625 = vmatprep.subr.bf16.mxu0 0
    %3626 = vmatpush2.bf16.msra.mxu0 0
    %3627 = vmatprep.subr.bf16.mxu0 0
    %3628 = vmatpush2.bf16.msra.mxu0 0
    %3629 = vmatprep.subr.bf16.mxu0 0
    %3630 = vmatpush2.bf16.msra.mxu0 0
    %3631 = vmatprep.subr.bf16.mxu0 0
    %3632 = vmatpush2.bf16.msra.mxu0 0
    %3633 = vmatprep.subr.bf16.mxu0 0
    %3634 = vmatpush2.bf16.msra.mxu0 0
    %3635 = vmatprep.mubr.bf16.mxu0 0
    %3636 = vmatmul.mubr.bf16.gmra.mxu0 %v3598
    %v3637 = vpop.f32.mrf.mxu0
    %v3638 = vadd.f32 0.0, %v3637
    %v3639 = vpop.f32.mrf.mxu0
    %v3640 = vpop.f32.mrf.mxu0
    %v3641 = vpop.f32.mrf.mxu0
    %3642 = vdwg.mxu0
    %3643 = vrot.lane.b32.xlu0 %v2865, 64
    %v3644 = vpop.permute.xlu0 %3643
    %v3646 = vsel %vm196, %v3353, 0
    %v3649 = vsel %vm687, %v3644, 0
    %3651 = vmatprep.subr.bf16.mxu0 0
    %3652 = vmatpush1.bf16.msra.mxu0 0
    %3653 = vmatprep.subr.bf16.mxu0 0
    %3654 = vmatpush1.bf16.msra.mxu0 0
    %3655 = vmatprep.subr.bf16.mxu0 0
    %3656 = vmatpush1.bf16.msra.mxu0 0
    %3657 = vmatprep.subr.bf16.mxu0 0
    %3658 = vmatpush1.bf16.msra.mxu0 0
    %3659 = vmatprep.subr.bf16.mxu0 0
    %3660 = vmatpush1.bf16.msra.mxu0 0
    %3661 = vmatprep.subr.bf16.mxu0 0
    %3662 = vmatpush1.bf16.msra.mxu0 0
    %3663 = vmatprep.subr.bf16.mxu0 0
    %3664 = vmatpush1.bf16.msra.mxu0 0
    %3665 = vmatprep.subr.bf16.mxu0 0
    %3666 = vmatpush1.bf16.msra.mxu0 %v3649
    %3667 = vmatprep.subr.bf16.mxu0 0
    %3668 = vmatpush2.bf16.msra.mxu0 0
    %3669 = vmatprep.subr.bf16.mxu0 0
    %3670 = vmatpush2.bf16.msra.mxu0 0
    %3671 = vmatprep.subr.bf16.mxu0 0
    %3672 = vmatpush2.bf16.msra.mxu0 0
    %3673 = vmatprep.subr.bf16.mxu0 0
    %3674 = vmatpush2.bf16.msra.mxu0 0
    %3675 = vmatprep.subr.bf16.mxu0 0
    %3676 = vmatpush2.bf16.msra.mxu0 0
    %3677 = vmatprep.subr.bf16.mxu0 0
    %3678 = vmatpush2.bf16.msra.mxu0 0
    %3679 = vmatprep.subr.bf16.mxu0 0
    %3680 = vmatpush2.bf16.msra.mxu0 0
    %3681 = vmatprep.subr.bf16.mxu0 0
    %3682 = vmatpush2.bf16.msra.mxu0 0
    %3683 = vmatprep.mubr.bf16.mxu0 0
    %3684 = vmatmul.mubr.bf16.gmra.mxu0 %v3646
    %v3685 = vpop.f32.mrf.mxu0
    %v3686 = vadd.f32 0.0, %v3685
    %v3687 = vpop.f32.mrf.mxu0
    %v3688 = vpop.f32.mrf.mxu0
    %v3689 = vpop.f32.mrf.mxu0
    %3690 = vdwg.mxu0
    %3691 = vrot.lane.b32.xlu0 %v2866, 64
    %v3692 = vpop.permute.xlu0 %3691
    %v3694 = vsel %vm196, %v3354, 0
    %v3697 = vsel %vm687, %v3692, 0
    %3699 = vmatprep.subr.bf16.mxu0 0
    %3700 = vmatpush1.bf16.msra.mxu0 0
    %3701 = vmatprep.subr.bf16.mxu0 0
    %3702 = vmatpush1.bf16.msra.mxu0 0
    %3703 = vmatprep.subr.bf16.mxu0 0
    %3704 = vmatpush1.bf16.msra.mxu0 0
    %3705 = vmatprep.subr.bf16.mxu0 0
    %3706 = vmatpush1.bf16.msra.mxu0 0
    %3707 = vmatprep.subr.bf16.mxu0 0
    %3708 = vmatpush1.bf16.msra.mxu0 0
    %3709 = vmatprep.subr.bf16.mxu0 0
    %3710 = vmatpush1.bf16.msra.mxu0 0
    %3711 = vmatprep.subr.bf16.mxu0 0
    %3712 = vmatpush1.bf16.msra.mxu0 0
    %3713 = vmatprep.subr.bf16.mxu0 0
    %3714 = vmatpush1.bf16.msra.mxu0 %v3697
    %3715 = vmatprep.subr.bf16.mxu0 0
    %3716 = vmatpush2.bf16.msra.mxu0 0
    %3717 = vmatprep.subr.bf16.mxu0 0
    %3718 = vmatpush2.bf16.msra.mxu0 0
    %3719 = vmatprep.subr.bf16.mxu0 0
    %3720 = vmatpush2.bf16.msra.mxu0 0
    %3721 = vmatprep.subr.bf16.mxu0 0
    %3722 = vmatpush2.bf16.msra.mxu0 0
    %3723 = vmatprep.subr.bf16.mxu0 0
    %3724 = vmatpush2.bf16.msra.mxu0 0
    %3725 = vmatprep.subr.bf16.mxu0 0
    %3726 = vmatpush2.bf16.msra.mxu0 0
    %3727 = vmatprep.subr.bf16.mxu0 0
    %3728 = vmatpush2.bf16.msra.mxu0 0
    %3729 = vmatprep.subr.bf16.mxu0 0
    %3730 = vmatpush2.bf16.msra.mxu0 0
    %3731 = vmatprep.mubr.bf16.mxu0 0
    %3732 = vmatmul.mubr.bf16.gmra.mxu0 %v3694
    %v3733 = vpop.f32.mrf.mxu0
    %v3734 = vadd.f32 0.0, %v3733
    %v3735 = vpop.f32.mrf.mxu0
    %v3736 = vpop.f32.mrf.mxu0
    %v3737 = vpop.f32.mrf.mxu0
    %3738 = vdwg.mxu0
    %3741 = vrot.lane.b32.xlu0 %v3494, 8
    %v3742 = vpop.permute.xlu0 %3741
    %3743 = vrot.lane.b32.xlu0 %v3542, 8
    %v3744 = vpop.permute.xlu0 %3743
    %3749 = vrot.lane.b32.xlu0 %v3590, 16
    %v3750 = vpop.permute.xlu0 %3749
    %3751 = vrot.lane.b32.xlu0 %v3638, 16
    %v3752 = vpop.permute.xlu0 %3751
    %3757 = vrot.lane.b32.xlu0 %v3686, 24
    %v3758 = vpop.permute.xlu0 %3757
    %3759 = vrot.lane.b32.xlu0 %v3734, 24
    %v3760 = vpop.permute.xlu0 %3759
    %v3763 = vsel %vm196, %v3398, %v3742
    %v3764 = vsel %vm196, %v3446, %v3744
    %v3765 = vsel %vm1093, %v3763, %v3750
    %v3766 = vsel %vm1093, %v3764, %v3752
    %v3767 = vsel %vm1096, %v3765, %v3758
    %v3768 = vsel %vm1096, %v3766, %v3760
    %v3769 = vpack.c.bf16 %v3768, %v3767
    %v3774 = vunpack.c.l.b16 %v2710
    %v3775 = vunpack.c.l.b16 %v2711
    %v3776 = vunpack.c.l.b16 %v2712
    %v3777 = vunpack.c.l.b16 %v2713
    %v3778 = vpack.c.b16 %v3775, %v3774
    %v3779 = vpack.c.b16 %v3777, %v3776
    %v3783 = vsel %vm64, %v3769, 0
    %3785 = vmatprep.subr.bf16.mxu0 0
    %3786 = vmatpush1.bf16.msra.mxu0 0
    %3787 = vmatprep.subr.bf16.mxu0 0
    %3788 = vmatpush1.bf16.msra.mxu0 0
    %3789 = vmatprep.subr.bf16.mxu0 0
    %3790 = vmatpush1.bf16.msra.mxu0 0
    %3791 = vmatprep.subr.bf16.mxu0 0
    %3792 = vmatpush1.bf16.msra.mxu0 0
    %3793 = vmatprep.subr.bf16.mxu0 0
    %3794 = vmatpush1.bf16.msra.mxu0 0
    %3795 = vmatprep.subr.bf16.mxu0 0
    %3796 = vmatpush1.bf16.msra.mxu0 0
    %3797 = vmatprep.subr.bf16.mxu0 0
    %3798 = vmatpush1.bf16.msra.mxu0 %v3779
    %3799 = vmatprep.subr.bf16.mxu0 0
    %3800 = vmatpush1.bf16.msra.mxu0 %v3778
    %3801 = vmatprep.subr.bf16.mxu0 0
    %3802 = vmatpush2.bf16.msra.mxu0 0
    %3803 = vmatprep.subr.bf16.mxu0 0
    %3804 = vmatpush2.bf16.msra.mxu0 0
    %3805 = vmatprep.subr.bf16.mxu0 0
    %3806 = vmatpush2.bf16.msra.mxu0 0
    %3807 = vmatprep.subr.bf16.mxu0 0
    %3808 = vmatpush2.bf16.msra.mxu0 0
    %3809 = vmatprep.subr.bf16.mxu0 0
    %3810 = vmatpush2.bf16.msra.mxu0 0
    %3811 = vmatprep.subr.bf16.mxu0 0
    %3812 = vmatpush2.bf16.msra.mxu0 0
    %3813 = vmatprep.subr.bf16.mxu0 0
    %3814 = vmatpush2.bf16.msra.mxu0 0
    %3815 = vmatprep.subr.bf16.mxu0 0
    %3816 = vmatpush2.bf16.msra.mxu0 0
    %3817 = vmatprep.mubr.bf16.mxu0 0
    %3818 = vmatmul.mubr.bf16.gmra.mxu0 %v3783
    %v3819 = vpop.f32.mrf.mxu0
    %v3820 = vadd.f32 0.0, %v3819
    %v3821 = vpop.f32.mrf.mxu0
    %v3822 = vpop.f32.mrf.mxu0
    %v3823 = vadd.f32 0.0, %v3822
    %v3824 = vpop.f32.mrf.mxu0
    %3825 = vdwg.mxu0
    %v3826 = vadd.f32 %v2702, %v3820
    %v3827 = vadd.f32 %v2703, %v3823
    %v3828 = vlaneseq
    %v3829 = vshrl.u32 %v3828, 7
    %v3830 = vsub.s32 2, %v3829
    %v3831 = vrot.slane %v2737, %v3830
    %v3832 = vadd.f32 %v3826, %v3831
    %v3833 = vadd.f32 %v3827, %v3831
    %v3834 = vsel %vm64, %v3832, 0.0
    %3835 = vadd.xlane.f32.xlu0 %v3834
    %v3836 = vpop.xlane.xlu0 %3835
    %v3837 = vsel %vm64, %v3833, 0.0
    %3838 = vadd.xlane.f32.xlu0 %v3837
    %v3839 = vpop.xlane.xlu0 %3838
    %v3840 = vmul.f32 %v3836, %v71
    %v3841 = vmul.f32 %v3839, %v71
    %v3842 = vsub.f32 %v3832, %v3840
    %v3843 = vsub.f32 %v3833, %v3841
    %v3844 = vmul.f32 %v3842, %v3842
    %v3845 = vmul.f32 %v3843, %v3843
    %v3846 = vsel %vm64, %v3844, 0.0
    %3847 = vadd.xlane.f32.xlu0 %v3846
    %v3848 = vpop.xlane.xlu0 %3847
    %v3849 = vsel %vm64, %v3845, 0.0
    %3850 = vadd.xlane.f32.xlu0 %v3849
    %v3851 = vpop.xlane.xlu0 %3850
    %v3852 = vmul.f32 %v3848, %v71
    %v3853 = vmul.f32 %v3851, %v71
    %v3854 = vadd.f32 %v3852, 1e-05
    %v3855 = vadd.f32 %v3853, 1e-05
    %v3856 = vrsqrt.pop %v3854
    %v3857 = vrsqrt.pop %v3855
    %v3858 = vmul.f32 %v3842, %v3856
    %v3859 = vmul.f32 %v3843, %v3857
    %v3860 = vlaneseq
    %v3861 = vshrl.u32 %v3860, 7
    %v3862 = vsub.s32 3, %v3861
    %v3863 = vrot.slane %v2737, %v3862
    %v3864 = vmul.f32 %v3858, %v3863
    %v3865 = vmul.f32 %v3859, %v3863
    %v3866 = vlaneseq
    %v3867 = vshrl.u32 %v3866, 7
    %v3868 = vsub.s32 4, %v3867
    %v3869 = vrot.slane %v2737, %v3868
    %v3870 = vadd.f32 %v3864, %v3869
    %v3871 = vadd.f32 %v3865, %v3869
    %v3872 = vpack.c.bf16 %v3871, %v3870
    %v3873 = vlaneseq
    %v3874 = vshrl.u32 %v3873, 7
    %v3875 = vsub.s32 0, %v3874
    %v3876 = vrot.slane %v2739, %v3875
    %v3881 = vunpack.c.l.b16 %v2715
    %v3882 = vunpack.c.l.b16 %v2716
    %v3883 = vunpack.c.l.b16 %v2717
    %v3884 = vunpack.c.l.b16 %v2718
    %v3885 = vpack.c.b16 %v3882, %v3881
    %v3886 = vpack.c.b16 %v3884, %v3883
    %v3890 = vsel %vm64, %v3872, 0
    %3892 = vmatprep.subr.bf16.mxu0 0
    %3893 = vmatpush1.bf16.msra.mxu0 0
    %3894 = vmatprep.subr.bf16.mxu0 0
    %3895 = vmatpush1.bf16.msra.mxu0 0
    %3896 = vmatprep.subr.bf16.mxu0 0
    %3897 = vmatpush1.bf16.msra.mxu0 0
    %3898 = vmatprep.subr.bf16.mxu0 0
    %3899 = vmatpush1.bf16.msra.mxu0 0
    %3900 = vmatprep.subr.bf16.mxu0 0
    %3901 = vmatpush1.bf16.msra.mxu0 0
    %3902 = vmatprep.subr.bf16.mxu0 0
    %3903 = vmatpush1.bf16.msra.mxu0 0
    %3904 = vmatprep.subr.bf16.mxu0 0
    %3905 = vmatpush1.bf16.msra.mxu0 %v3886
    %3906 = vmatprep.subr.bf16.mxu0 0
    %3907 = vmatpush1.bf16.msra.mxu0 %v3885
    %3908 = vmatprep.subr.bf16.mxu0 0
    %3909 = vmatpush2.bf16.msra.mxu0 0
    %3910 = vmatprep.subr.bf16.mxu0 0
    %3911 = vmatpush2.bf16.msra.mxu0 0
    %3912 = vmatprep.subr.bf16.mxu0 0
    %3913 = vmatpush2.bf16.msra.mxu0 0
    %3914 = vmatprep.subr.bf16.mxu0 0
    %3915 = vmatpush2.bf16.msra.mxu0 0
    %3916 = vmatprep.subr.bf16.mxu0 0
    %3917 = vmatpush2.bf16.msra.mxu0 0
    %3918 = vmatprep.subr.bf16.mxu0 0
    %3919 = vmatpush2.bf16.msra.mxu0 0
    %3920 = vmatprep.subr.bf16.mxu0 0
    %3921 = vmatpush2.bf16.msra.mxu0 0
    %3922 = vmatprep.subr.bf16.mxu0 0
    %3923 = vmatpush2.bf16.msra.mxu0 0
    %3924 = vmatprep.mubr.bf16.mxu0 0
    %3925 = vmatmul.mubr.bf16.gmra.mxu0 %v3890
    %v3926 = vpop.f32.mrf.mxu0
    %v3927 = vadd.f32 %v3876, %v3926
    %v3928 = vpop.f32.mrf.mxu0
    %v3929 = vpop.f32.mrf.mxu0
    %v3930 = vadd.f32 %v3876, %v3929
    %v3931 = vpop.f32.mrf.mxu0
    %3932 = vdwg.mxu0
    %v3933 = vmul.f32 %v3927, 0.5
    %v3934 = vmul.f32 %v3930, 0.5
    %v3935 = vmul.f32 %v3927, 0.70710677
    %v3936 = vmul.f32 %v3930, 0.70710677
    %v3937 = verf.f32.pop %v3935
    %v3938 = verf.f32.pop %v3936
    %v3939 = vadd.f32 %v3937, 1.0
    %v3940 = vadd.f32 %v3938, 1.0
    %v3941 = vmul.f32 %v3933, %v3939
    %v3942 = vmul.f32 %v3934, %v3940
    %v3943 = vpack.c.bf16 %v3942, %v3941
    %v3944 = vlaneseq
    %v3945 = vshrl.u32 %v3944, 7
    %v3946 = vsub.s32 5, %v3945
    %v3947 = vrot.slane %v2737, %v3946
    %v3964 = vunpack.c.l.b16 %v2720
    %v3965 = vunpack.c.l.b16 %v2721
    %v3966 = vunpack.c.l.b16 %v2722
    %v3967 = vunpack.c.l.b16 %v2723
    %v3968 = vunpack.c.l.b16 %v2724
    %v3969 = vunpack.c.l.b16 %v2725
    %v3970 = vunpack.c.l.b16 %v2726
    %v3971 = vunpack.c.l.b16 %v2727
    %v3972 = vunpack.c.l.b16 %v2728
    %v3973 = vunpack.c.l.b16 %v2729
    %v3974 = vunpack.c.l.b16 %v2730
    %v3975 = vunpack.c.l.b16 %v2731
    %v3976 = vunpack.c.l.b16 %v2732
    %v3977 = vunpack.c.l.b16 %v2733
    %v3978 = vunpack.c.l.b16 %v2734
    %v3979 = vunpack.c.l.b16 %v2735
    %v3980 = vpack.c.b16 %v3965, %v3964
    %v3981 = vpack.c.b16 %v3967, %v3966
    %v3982 = vpack.c.b16 %v3969, %v3968
    %v3983 = vpack.c.b16 %v3971, %v3970
    %v3984 = vpack.c.b16 %v3973, %v3972
    %v3985 = vpack.c.b16 %v3975, %v3974
    %v3986 = vpack.c.b16 %v3977, %v3976
    %v3987 = vpack.c.b16 %v3979, %v3978
    %3996 = vmatprep.subr.bf16.mxu0 0
    %3997 = vmatpush1.bf16.msra.mxu0 %v3987
    %3998 = vmatprep.subr.bf16.mxu0 0
    %3999 = vmatpush1.bf16.msra.mxu0 %v3986
    %4000 = vmatprep.subr.bf16.mxu0 0
    %4001 = vmatpush1.bf16.msra.mxu0 %v3985
    %4002 = vmatprep.subr.bf16.mxu0 0
    %4003 = vmatpush1.bf16.msra.mxu0 %v3984
    %4004 = vmatprep.subr.bf16.mxu0 0
    %4005 = vmatpush1.bf16.msra.mxu0 %v3983
    %4006 = vmatprep.subr.bf16.mxu0 0
    %4007 = vmatpush1.bf16.msra.mxu0 %v3982
    %4008 = vmatprep.subr.bf16.mxu0 0
    %4009 = vmatpush1.bf16.msra.mxu0 %v3981
    %4010 = vmatprep.subr.bf16.mxu0 0
    %4011 = vmatpush1.bf16.msra.mxu0 %v3980
    %4012 = vmatprep.subr.bf16.mxu0 0
    %4013 = vmatpush2.bf16.msra.mxu0 0
    %4014 = vmatprep.subr.bf16.mxu0 0
    %4015 = vmatpush2.bf16.msra.mxu0 0
    %4016 = vmatprep.subr.bf16.mxu0 0
    %4017 = vmatpush2.bf16.msra.mxu0 0
    %4018 = vmatprep.subr.bf16.mxu0 0
    %4019 = vmatpush2.bf16.msra.mxu0 0
    %4020 = vmatprep.subr.bf16.mxu0 0
    %4021 = vmatpush2.bf16.msra.mxu0 0
    %4022 = vmatprep.subr.bf16.mxu0 0
    %4023 = vmatpush2.bf16.msra.mxu0 0
    %4024 = vmatprep.subr.bf16.mxu0 0
    %4025 = vmatpush2.bf16.msra.mxu0 0
    %4026 = vmatprep.subr.bf16.mxu0 0
    %4027 = vmatpush2.bf16.msra.mxu0 0
    %4028 = vmatprep.mubr.bf16.mxu0 0
    %4029 = vmatmul.mubr.bf16.gmra.mxu0 %v3943
    %v4030 = vpop.f32.mrf.mxu0
    %v4031 = vadd.f32 %v3947, %v4030
    %v4032 = vpop.f32.mrf.mxu0
    %v4033 = vpop.f32.mrf.mxu0
    %v4034 = vadd.f32 %v3947, %v4033
    %v4035 = vpop.f32.mrf.mxu0
    %4036 = vdwg.mxu0
    %v4037 = vadd.f32 %v3832, %v4031
    %v4038 = vadd.f32 %v3833, %v4034
    %s4039 = scalar_lea.vmem %s1, 48
    %v4040 = vld [vmem:[%s4039] sm:$0xf]
    %v4041 = vld [vmem:[%s4039 + $0x4] sm:$0xf]
    %v4042 = vld [vmem:[%s4039 + $0x8] sm:$0xf]
    %v4043 = vld [vmem:[%s4039 + $0xc] sm:$0xf]
    %s4044 = scalar_lea.vmem %s2, 48
    %v4045 = vld [vmem:[%s4044] sm:$0xf]
    %v4046 = vld [vmem:[%s4044 + $0x4] sm:$0xf]
    %v4047 = vld [vmem:[%s4044 + $0x8] sm:$0xf]
    %v4048 = vld [vmem:[%s4044 + $0xc] sm:$0xf]
    %s4049 = scalar_lea.vmem %s3, 48
    %v4050 = vld [vmem:[%s4049] sm:$0xf]
    %v4051 = vld [vmem:[%s4049 + $0x4] sm:$0xf]
    %v4052 = vld [vmem:[%s4049 + $0x8] sm:$0xf]
    %v4053 = vld [vmem:[%s4049 + $0xc] sm:$0xf]
    %s4054 = scalar_lea.vmem %s4, 192
    %v4055 = vld [vmem:[%s4054] sm:$0xf]
    %v4056 = vld [vmem:[%s4054 + $0x4] sm:$0xf]
    %v4057 = vld [vmem:[%s4054 + $0x8] sm:$0xf]
    %v4058 = vld [vmem:[%s4054 + $0xc] sm:$0xf]
    %v4059 = vld [vmem:[%s4054 + $0x10] sm:$0xf]
    %v4060 = vld [vmem:[%s4054 + $0x14] sm:$0xf]
    %v4061 = vld [vmem:[%s4054 + $0x18] sm:$0xf]
    %v4062 = vld [vmem:[%s4054 + $0x1c] sm:$0xf]
    %v4063 = vld [vmem:[%s4054 + $0x20] sm:$0xf]
    %v4064 = vld [vmem:[%s4054 + $0x24] sm:$0xf]
    %v4065 = vld [vmem:[%s4054 + $0x28] sm:$0xf]
    %v4066 = vld [vmem:[%s4054 + $0x2c] sm:$0xf]
    %v4067 = vld [vmem:[%s4054 + $0x30] sm:$0xf]
    %v4068 = vld [vmem:[%s4054 + $0x34] sm:$0xf]
    %v4069 = vld [vmem:[%s4054 + $0x38] sm:$0xf]
    %v4070 = vld [vmem:[%s4054 + $0x3c] sm:$0xf]
    %s4071 = scalar_lea.vmem %s5, 24
    %v4072 = vld [vmem:[%s4071] sm:$0x3f]
    %v4073 = vld [vmem:[%s6 + $0x3] sm:$0x1]
    %v4074 = vld [vmem:[%s7 + $0x3] sm:$0x1]
    %v4075 = vsel %vm64, %v4037, 0.0
    %4076 = vadd.xlane.f32.xlu0 %v4075
    %v4077 = vpop.xlane.xlu0 %4076
    %v4078 = vsel %vm64, %v4038, 0.0
    %4079 = vadd.xlane.f32.xlu0 %v4078
    %v4080 = vpop.xlane.xlu0 %4079
    %v4081 = vmul.f32 %v4077, %v71
    %v4082 = vmul.f32 %v4080, %v71
    %v4083 = vsub.f32 %v4037, %v4081
    %v4084 = vsub.f32 %v4038, %v4082
    %v4085 = vmul.f32 %v4083, %v4083
    %v4086 = vmul.f32 %v4084, %v4084
    %v4087 = vsel %vm64, %v4085, 0.0
    %4088 = vadd.xlane.f32.xlu0 %v4087
    %v4089 = vpop.xlane.xlu0 %4088
    %v4090 = vsel %vm64, %v4086, 0.0
    %4091 = vadd.xlane.f32.xlu0 %v4090
    %v4092 = vpop.xlane.xlu0 %4091
    %v4093 = vmul.f32 %v4089, %v71
    %v4094 = vmul.f32 %v4092, %v71
    %v4095 = vadd.f32 %v4093, 1e-05
    %v4096 = vadd.f32 %v4094, 1e-05
    %v4097 = vrsqrt.pop %v4095
    %v4098 = vrsqrt.pop %v4096
    %v4099 = vmul.f32 %v4083, %v4097
    %v4100 = vmul.f32 %v4084, %v4098
    %v4101 = vlaneseq
    %v4102 = vshrl.u32 %v4101, 7
    %v4103 = vsub.s32 0, %v4102
    %v4104 = vrot.slane %v4072, %v4103
    %v4105 = vmul.f32 %v4099, %v4104
    %v4106 = vmul.f32 %v4100, %v4104
    %v4107 = vlaneseq
    %v4108 = vshrl.u32 %v4107, 7
    %v4109 = vsub.s32 1, %v4108
    %v4110 = vrot.slane %v4072, %v4109
    %v4111 = vadd.f32 %v4105, %v4110
    %v4112 = vadd.f32 %v4106, %v4110
    %v4113 = vpack.c.bf16 %v4112, %v4111
    %v4114 = vlaneseq
    %v4115 = vshrl.u32 %v4114, 7
    %v4116 = vsub.s32 0, %v4115
    %v4117 = vrot.slane %v4073, %v4116
    %v4122 = vunpack.c.l.b16 %v4040
    %v4123 = vunpack.c.l.b16 %v4041
    %v4124 = vunpack.c.l.b16 %v4042
    %v4125 = vunpack.c.l.b16 %v4043
    %v4126 = vpack.c.b16 %v4123, %v4122
    %v4127 = vpack.c.b16 %v4125, %v4124
    %v4131 = vsel %vm64, %v4113, 0
    %4133 = vmatprep.subr.bf16.mxu0 0
    %4134 = vmatpush1.bf16.msra.mxu0 0
    %4135 = vmatprep.subr.bf16.mxu0 0
    %4136 = vmatpush1.bf16.msra.mxu0 0
    %4137 = vmatprep.subr.bf16.mxu0 0
    %4138 = vmatpush1.bf16.msra.mxu0 0
    %4139 = vmatprep.subr.bf16.mxu0 0
    %4140 = vmatpush1.bf16.msra.mxu0 0
    %4141 = vmatprep.subr.bf16.mxu0 0
    %4142 = vmatpush1.bf16.msra.mxu0 0
    %4143 = vmatprep.subr.bf16.mxu0 0
    %4144 = vmatpush1.bf16.msra.mxu0 0
    %4145 = vmatprep.subr.bf16.mxu0 0
    %4146 = vmatpush1.bf16.msra.mxu0 %v4127
    %4147 = vmatprep.subr.bf16.mxu0 0
    %4148 = vmatpush1.bf16.msra.mxu0 %v4126
    %4149 = vmatprep.subr.bf16.mxu0 0
    %4150 = vmatpush2.bf16.msra.mxu0 0
    %4151 = vmatprep.subr.bf16.mxu0 0
    %4152 = vmatpush2.bf16.msra.mxu0 0
    %4153 = vmatprep.subr.bf16.mxu0 0
    %4154 = vmatpush2.bf16.msra.mxu0 0
    %4155 = vmatprep.subr.bf16.mxu0 0
    %4156 = vmatpush2.bf16.msra.mxu0 0
    %4157 = vmatprep.subr.bf16.mxu0 0
    %4158 = vmatpush2.bf16.msra.mxu0 0
    %4159 = vmatprep.subr.bf16.mxu0 0
    %4160 = vmatpush2.bf16.msra.mxu0 0
    %4161 = vmatprep.subr.bf16.mxu0 0
    %4162 = vmatpush2.bf16.msra.mxu0 0
    %4163 = vmatprep.subr.bf16.mxu0 0
    %4164 = vmatpush2.bf16.msra.mxu0 0
    %4165 = vmatprep.mubr.bf16.mxu0 0
    %4166 = vmatmul.mubr.bf16.gmra.mxu0 %v4131
    %v4167 = vpop.f32.mrf.mxu0
    %v4168 = vadd.f32 %v4117, %v4167
    %v4169 = vpop.f32.mrf.mxu0
    %v4170 = vpop.f32.mrf.mxu0
    %v4171 = vadd.f32 %v4117, %v4170
    %v4172 = vpop.f32.mrf.mxu0
    %4173 = vdwg.mxu0
    %4176 = vrot.lane.b32.xlu0 %v4168, 120
    %v4177 = vpop.permute.xlu0 %4176
    %4178 = vrot.lane.b32.xlu0 %v4171, 120
    %v4179 = vpop.permute.xlu0 %4178
    %4182 = vrot.lane.b32.xlu0 %v4168, 112
    %v4183 = vpop.permute.xlu0 %4182
    %4184 = vrot.lane.b32.xlu0 %v4171, 112
    %v4185 = vpop.permute.xlu0 %4184
    %4188 = vrot.lane.b32.xlu0 %v4168, 104
    %v4189 = vpop.permute.xlu0 %4188
    %4190 = vrot.lane.b32.xlu0 %v4171, 104
    %v4191 = vpop.permute.xlu0 %4190
    %v4194 = vpack.c.bf16 %v4168, %v4168
    %v4195 = vpack.c.bf16 %v4171, %v4171
    %v4196 = vpack.c.bf16 %v4177, %v4177
    %v4197 = vpack.c.bf16 %v4179, %v4179
    %v4198 = vpack.c.bf16 %v4183, %v4183
    %v4199 = vpack.c.bf16 %v4185, %v4185
    %v4200 = vpack.c.bf16 %v4189, %v4189
    %v4201 = vpack.c.bf16 %v4191, %v4191
    %4203 = vrot.lane.b32.xlu0 %v4194, 96
    %v4204 = vpop.permute.xlu0 %4203
    %v4206 = vsel %vm196, %v4194, 0
    %v4209 = vsel %vm196, %v4204, 0
    %4211 = vmatprep.subr.bf16.mxu0 0
    %4212 = vmatpush1.bf16.xpose.msra.mxu0 0
    %4213 = vmatprep.subr.bf16.mxu0 0
    %4214 = vmatpush1.bf16.xpose.msra.mxu0 0
    %4215 = vmatprep.subr.bf16.mxu0 0
    %4216 = vmatpush1.bf16.xpose.msra.mxu0 0
    %4217 = vmatprep.subr.bf16.mxu0 0
    %4218 = vmatpush1.bf16.xpose.msra.mxu0 0
    %4219 = vmatprep.subr.bf16.mxu0 0
    %4220 = vmatpush1.bf16.xpose.msra.mxu0 0
    %4221 = vmatprep.subr.bf16.mxu0 0
    %4222 = vmatpush1.bf16.xpose.msra.mxu0 0
    %4223 = vmatprep.subr.bf16.mxu0 0
    %4224 = vmatpush1.bf16.xpose.msra.mxu0 0
    %4225 = vmatprep.subr.bf16.mxu0 0
    %4226 = vmatpush1.bf16.xpose.msra.mxu0 %v4209
    %4227 = vmatprep.subr.bf16.mxu0 0
    %4228 = vmatpush2.bf16.xpose.msra.mxu0 0
    %4229 = vmatprep.subr.bf16.mxu0 0
    %4230 = vmatpush2.bf16.xpose.msra.mxu0 0
    %4231 = vmatprep.subr.bf16.mxu0 0
    %4232 = vmatpush2.bf16.xpose.msra.mxu0 0
    %4233 = vmatprep.subr.bf16.mxu0 0
    %4234 = vmatpush2.bf16.xpose.msra.mxu0 0
    %4235 = vmatprep.subr.bf16.mxu0 0
    %4236 = vmatpush2.bf16.xpose.msra.mxu0 0
    %4237 = vmatprep.subr.bf16.mxu0 0
    %4238 = vmatpush2.bf16.xpose.msra.mxu0 0
    %4239 = vmatprep.subr.bf16.mxu0 0
    %4240 = vmatpush2.bf16.xpose.msra.mxu0 0
    %4241 = vmatprep.subr.bf16.mxu0 0
    %4242 = vmatpush2.bf16.xpose.msra.mxu0 0
    %4243 = vmatprep.mubr.bf16.mxu0 0
    %4244 = vmatmul.mubr.bf16.gmra.mxu0 %v4206
    %v4245 = vpop.f32.mrf.mxu0
    %v4246 = vadd.f32 0.0, %v4245
    %v4247 = vpop.f32.mrf.mxu0
    %v4248 = vpop.f32.mrf.mxu0
    %v4249 = vpop.f32.mrf.mxu0
    %4250 = vdwg.mxu0
    %4252 = vrot.lane.b32.xlu0 %v4195, 96
    %v4253 = vpop.permute.xlu0 %4252
    %v4255 = vsel %vm196, %v4195, 0
    %v4258 = vsel %vm196, %v4253, 0
    %4260 = vmatprep.subr.bf16.mxu0 0
    %4261 = vmatpush1.bf16.xpose.msra.mxu0 0
    %4262 = vmatprep.subr.bf16.mxu0 0
    %4263 = vmatpush1.bf16.xpose.msra.mxu0 0
    %4264 = vmatprep.subr.bf16.mxu0 0
    %4265 = vmatpush1.bf16.xpose.msra.mxu0 0
    %4266 = vmatprep.subr.bf16.mxu0 0
    %4267 = vmatpush1.bf16.xpose.msra.mxu0 0
    %4268 = vmatprep.subr.bf16.mxu0 0
    %4269 = vmatpush1.bf16.xpose.msra.mxu0 0
    %4270 = vmatprep.subr.bf16.mxu0 0
    %4271 = vmatpush1.bf16.xpose.msra.mxu0 0
    %4272 = vmatprep.subr.bf16.mxu0 0
    %4273 = vmatpush1.bf16.xpose.msra.mxu0 0
    %4274 = vmatprep.subr.bf16.mxu0 0
    %4275 = vmatpush1.bf16.xpose.msra.mxu0 %v4258
    %4276 = vmatprep.subr.bf16.mxu0 0
    %4277 = vmatpush2.bf16.xpose.msra.mxu0 0
    %4278 = vmatprep.subr.bf16.mxu0 0
    %4279 = vmatpush2.bf16.xpose.msra.mxu0 0
    %4280 = vmatprep.subr.bf16.mxu0 0
    %4281 = vmatpush2.bf16.xpose.msra.mxu0 0
    %4282 = vmatprep.subr.bf16.mxu0 0
    %4283 = vmatpush2.bf16.xpose.msra.mxu0 0
    %4284 = vmatprep.subr.bf16.mxu0 0
    %4285 = vmatpush2.bf16.xpose.msra.mxu0 0
    %4286 = vmatprep.subr.bf16.mxu0 0
    %4287 = vmatpush2.bf16.xpose.msra.mxu0 0
    %4288 = vmatprep.subr.bf16.mxu0 0
    %4289 = vmatpush2.bf16.xpose.msra.mxu0 0
    %4290 = vmatprep.subr.bf16.mxu0 0
    %4291 = vmatpush2.bf16.xpose.msra.mxu0 0
    %4292 = vmatprep.mubr.bf16.mxu0 0
    %4293 = vmatmul.mubr.bf16.gmra.mxu0 %v4255
    %v4294 = vpop.f32.mrf.mxu0
    %v4295 = vadd.f32 0.0, %v4294
    %v4296 = vpop.f32.mrf.mxu0
    %v4297 = vpop.f32.mrf.mxu0
    %v4298 = vpop.f32.mrf.mxu0
    %4299 = vdwg.mxu0
    %4301 = vrot.lane.b32.xlu0 %v4196, 96
    %v4302 = vpop.permute.xlu0 %4301
    %v4304 = vsel %vm196, %v4196, 0
    %v4307 = vsel %vm196, %v4302, 0
    %4309 = vmatprep.subr.bf16.mxu0 0
    %4310 = vmatpush1.bf16.xpose.msra.mxu0 0
    %4311 = vmatprep.subr.bf16.mxu0 0
    %4312 = vmatpush1.bf16.xpose.msra.mxu0 0
    %4313 = vmatprep.subr.bf16.mxu0 0
    %4314 = vmatpush1.bf16.xpose.msra.mxu0 0
    %4315 = vmatprep.subr.bf16.mxu0 0
    %4316 = vmatpush1.bf16.xpose.msra.mxu0 0
    %4317 = vmatprep.subr.bf16.mxu0 0
    %4318 = vmatpush1.bf16.xpose.msra.mxu0 0
    %4319 = vmatprep.subr.bf16.mxu0 0
    %4320 = vmatpush1.bf16.xpose.msra.mxu0 0
    %4321 = vmatprep.subr.bf16.mxu0 0
    %4322 = vmatpush1.bf16.xpose.msra.mxu0 0
    %4323 = vmatprep.subr.bf16.mxu0 0
    %4324 = vmatpush1.bf16.xpose.msra.mxu0 %v4307
    %4325 = vmatprep.subr.bf16.mxu0 0
    %4326 = vmatpush2.bf16.xpose.msra.mxu0 0
    %4327 = vmatprep.subr.bf16.mxu0 0
    %4328 = vmatpush2.bf16.xpose.msra.mxu0 0
    %4329 = vmatprep.subr.bf16.mxu0 0
    %4330 = vmatpush2.bf16.xpose.msra.mxu0 0
    %4331 = vmatprep.subr.bf16.mxu0 0
    %4332 = vmatpush2.bf16.xpose.msra.mxu0 0
    %4333 = vmatprep.subr.bf16.mxu0 0
    %4334 = vmatpush2.bf16.xpose.msra.mxu0 0
    %4335 = vmatprep.subr.bf16.mxu0 0
    %4336 = vmatpush2.bf16.xpose.msra.mxu0 0
    %4337 = vmatprep.subr.bf16.mxu0 0
    %4338 = vmatpush2.bf16.xpose.msra.mxu0 0
    %4339 = vmatprep.subr.bf16.mxu0 0
    %4340 = vmatpush2.bf16.xpose.msra.mxu0 0
    %4341 = vmatprep.mubr.bf16.mxu0 0
    %4342 = vmatmul.mubr.bf16.gmra.mxu0 %v4304
    %v4343 = vpop.f32.mrf.mxu0
    %v4344 = vadd.f32 0.0, %v4343
    %v4345 = vpop.f32.mrf.mxu0
    %v4346 = vpop.f32.mrf.mxu0
    %v4347 = vpop.f32.mrf.mxu0
    %4348 = vdwg.mxu0
    %4350 = vrot.lane.b32.xlu0 %v4197, 96
    %v4351 = vpop.permute.xlu0 %4350
    %v4353 = vsel %vm196, %v4197, 0
    %v4356 = vsel %vm196, %v4351, 0
    %4358 = vmatprep.subr.bf16.mxu0 0
    %4359 = vmatpush1.bf16.xpose.msra.mxu0 0
    %4360 = vmatprep.subr.bf16.mxu0 0
    %4361 = vmatpush1.bf16.xpose.msra.mxu0 0
    %4362 = vmatprep.subr.bf16.mxu0 0
    %4363 = vmatpush1.bf16.xpose.msra.mxu0 0
    %4364 = vmatprep.subr.bf16.mxu0 0
    %4365 = vmatpush1.bf16.xpose.msra.mxu0 0
    %4366 = vmatprep.subr.bf16.mxu0 0
    %4367 = vmatpush1.bf16.xpose.msra.mxu0 0
    %4368 = vmatprep.subr.bf16.mxu0 0
    %4369 = vmatpush1.bf16.xpose.msra.mxu0 0
    %4370 = vmatprep.subr.bf16.mxu0 0
    %4371 = vmatpush1.bf16.xpose.msra.mxu0 0
    %4372 = vmatprep.subr.bf16.mxu0 0
    %4373 = vmatpush1.bf16.xpose.msra.mxu0 %v4356
    %4374 = vmatprep.subr.bf16.mxu0 0
    %4375 = vmatpush2.bf16.xpose.msra.mxu0 0
    %4376 = vmatprep.subr.bf16.mxu0 0
    %4377 = vmatpush2.bf16.xpose.msra.mxu0 0
    %4378 = vmatprep.subr.bf16.mxu0 0
    %4379 = vmatpush2.bf16.xpose.msra.mxu0 0
    %4380 = vmatprep.subr.bf16.mxu0 0
    %4381 = vmatpush2.bf16.xpose.msra.mxu0 0
    %4382 = vmatprep.subr.bf16.mxu0 0
    %4383 = vmatpush2.bf16.xpose.msra.mxu0 0
    %4384 = vmatprep.subr.bf16.mxu0 0
    %4385 = vmatpush2.bf16.xpose.msra.mxu0 0
    %4386 = vmatprep.subr.bf16.mxu0 0
    %4387 = vmatpush2.bf16.xpose.msra.mxu0 0
    %4388 = vmatprep.subr.bf16.mxu0 0
    %4389 = vmatpush2.bf16.xpose.msra.mxu0 0
    %4390 = vmatprep.mubr.bf16.mxu0 0
    %4391 = vmatmul.mubr.bf16.gmra.mxu0 %v4353
    %v4392 = vpop.f32.mrf.mxu0
    %v4393 = vadd.f32 0.0, %v4392
    %v4394 = vpop.f32.mrf.mxu0
    %v4395 = vpop.f32.mrf.mxu0
    %v4396 = vpop.f32.mrf.mxu0
    %4397 = vdwg.mxu0
    %4399 = vrot.lane.b32.xlu0 %v4198, 96
    %v4400 = vpop.permute.xlu0 %4399
    %v4402 = vsel %vm196, %v4198, 0
    %v4405 = vsel %vm196, %v4400, 0
    %4407 = vmatprep.subr.bf16.mxu0 0
    %4408 = vmatpush1.bf16.xpose.msra.mxu0 0
    %4409 = vmatprep.subr.bf16.mxu0 0
    %4410 = vmatpush1.bf16.xpose.msra.mxu0 0
    %4411 = vmatprep.subr.bf16.mxu0 0
    %4412 = vmatpush1.bf16.xpose.msra.mxu0 0
    %4413 = vmatprep.subr.bf16.mxu0 0
    %4414 = vmatpush1.bf16.xpose.msra.mxu0 0
    %4415 = vmatprep.subr.bf16.mxu0 0
    %4416 = vmatpush1.bf16.xpose.msra.mxu0 0
    %4417 = vmatprep.subr.bf16.mxu0 0
    %4418 = vmatpush1.bf16.xpose.msra.mxu0 0
    %4419 = vmatprep.subr.bf16.mxu0 0
    %4420 = vmatpush1.bf16.xpose.msra.mxu0 0
    %4421 = vmatprep.subr.bf16.mxu0 0
    %4422 = vmatpush1.bf16.xpose.msra.mxu0 %v4405
    %4423 = vmatprep.subr.bf16.mxu0 0
    %4424 = vmatpush2.bf16.xpose.msra.mxu0 0
    %4425 = vmatprep.subr.bf16.mxu0 0
    %4426 = vmatpush2.bf16.xpose.msra.mxu0 0
    %4427 = vmatprep.subr.bf16.mxu0 0
    %4428 = vmatpush2.bf16.xpose.msra.mxu0 0
    %4429 = vmatprep.subr.bf16.mxu0 0
    %4430 = vmatpush2.bf16.xpose.msra.mxu0 0
    %4431 = vmatprep.subr.bf16.mxu0 0
    %4432 = vmatpush2.bf16.xpose.msra.mxu0 0
    %4433 = vmatprep.subr.bf16.mxu0 0
    %4434 = vmatpush2.bf16.xpose.msra.mxu0 0
    %4435 = vmatprep.subr.bf16.mxu0 0
    %4436 = vmatpush2.bf16.xpose.msra.mxu0 0
    %4437 = vmatprep.subr.bf16.mxu0 0
    %4438 = vmatpush2.bf16.xpose.msra.mxu0 0
    %4439 = vmatprep.mubr.bf16.mxu0 0
    %4440 = vmatmul.mubr.bf16.gmra.mxu0 %v4402
    %v4441 = vpop.f32.mrf.mxu0
    %v4442 = vadd.f32 0.0, %v4441
    %v4443 = vpop.f32.mrf.mxu0
    %v4444 = vpop.f32.mrf.mxu0
    %v4445 = vpop.f32.mrf.mxu0
    %4446 = vdwg.mxu0
    %4448 = vrot.lane.b32.xlu0 %v4199, 96
    %v4449 = vpop.permute.xlu0 %4448
    %v4451 = vsel %vm196, %v4199, 0
    %v4454 = vsel %vm196, %v4449, 0
    %4456 = vmatprep.subr.bf16.mxu0 0
    %4457 = vmatpush1.bf16.xpose.msra.mxu0 0
    %4458 = vmatprep.subr.bf16.mxu0 0
    %4459 = vmatpush1.bf16.xpose.msra.mxu0 0
    %4460 = vmatprep.subr.bf16.mxu0 0
    %4461 = vmatpush1.bf16.xpose.msra.mxu0 0
    %4462 = vmatprep.subr.bf16.mxu0 0
    %4463 = vmatpush1.bf16.xpose.msra.mxu0 0
    %4464 = vmatprep.subr.bf16.mxu0 0
    %4465 = vmatpush1.bf16.xpose.msra.mxu0 0
    %4466 = vmatprep.subr.bf16.mxu0 0
    %4467 = vmatpush1.bf16.xpose.msra.mxu0 0
    %4468 = vmatprep.subr.bf16.mxu0 0
    %4469 = vmatpush1.bf16.xpose.msra.mxu0 0
    %4470 = vmatprep.subr.bf16.mxu0 0
    %4471 = vmatpush1.bf16.xpose.msra.mxu0 %v4454
    %4472 = vmatprep.subr.bf16.mxu0 0
    %4473 = vmatpush2.bf16.xpose.msra.mxu0 0
    %4474 = vmatprep.subr.bf16.mxu0 0
    %4475 = vmatpush2.bf16.xpose.msra.mxu0 0
    %4476 = vmatprep.subr.bf16.mxu0 0
    %4477 = vmatpush2.bf16.xpose.msra.mxu0 0
    %4478 = vmatprep.subr.bf16.mxu0 0
    %4479 = vmatpush2.bf16.xpose.msra.mxu0 0
    %4480 = vmatprep.subr.bf16.mxu0 0
    %4481 = vmatpush2.bf16.xpose.msra.mxu0 0
    %4482 = vmatprep.subr.bf16.mxu0 0
    %4483 = vmatpush2.bf16.xpose.msra.mxu0 0
    %4484 = vmatprep.subr.bf16.mxu0 0
    %4485 = vmatpush2.bf16.xpose.msra.mxu0 0
    %4486 = vmatprep.subr.bf16.mxu0 0
    %4487 = vmatpush2.bf16.xpose.msra.mxu0 0
    %4488 = vmatprep.mubr.bf16.mxu0 0
    %4489 = vmatmul.mubr.bf16.gmra.mxu0 %v4451
    %v4490 = vpop.f32.mrf.mxu0
    %v4491 = vadd.f32 0.0, %v4490
    %v4492 = vpop.f32.mrf.mxu0
    %v4493 = vpop.f32.mrf.mxu0
    %v4494 = vpop.f32.mrf.mxu0
    %4495 = vdwg.mxu0
    %4497 = vrot.lane.b32.xlu0 %v4200, 96
    %v4498 = vpop.permute.xlu0 %4497
    %v4500 = vsel %vm196, %v4200, 0
    %v4503 = vsel %vm196, %v4498, 0
    %4505 = vmatprep.subr.bf16.mxu0 0
    %4506 = vmatpush1.bf16.xpose.msra.mxu0 0
    %4507 = vmatprep.subr.bf16.mxu0 0
    %4508 = vmatpush1.bf16.xpose.msra.mxu0 0
    %4509 = vmatprep.subr.bf16.mxu0 0
    %4510 = vmatpush1.bf16.xpose.msra.mxu0 0
    %4511 = vmatprep.subr.bf16.mxu0 0
    %4512 = vmatpush1.bf16.xpose.msra.mxu0 0
    %4513 = vmatprep.subr.bf16.mxu0 0
    %4514 = vmatpush1.bf16.xpose.msra.mxu0 0
    %4515 = vmatprep.subr.bf16.mxu0 0
    %4516 = vmatpush1.bf16.xpose.msra.mxu0 0
    %4517 = vmatprep.subr.bf16.mxu0 0
    %4518 = vmatpush1.bf16.xpose.msra.mxu0 0
    %4519 = vmatprep.subr.bf16.mxu0 0
    %4520 = vmatpush1.bf16.xpose.msra.mxu0 %v4503
    %4521 = vmatprep.subr.bf16.mxu0 0
    %4522 = vmatpush2.bf16.xpose.msra.mxu0 0
    %4523 = vmatprep.subr.bf16.mxu0 0
    %4524 = vmatpush2.bf16.xpose.msra.mxu0 0
    %4525 = vmatprep.subr.bf16.mxu0 0
    %4526 = vmatpush2.bf16.xpose.msra.mxu0 0
    %4527 = vmatprep.subr.bf16.mxu0 0
    %4528 = vmatpush2.bf16.xpose.msra.mxu0 0
    %4529 = vmatprep.subr.bf16.mxu0 0
    %4530 = vmatpush2.bf16.xpose.msra.mxu0 0
    %4531 = vmatprep.subr.bf16.mxu0 0
    %4532 = vmatpush2.bf16.xpose.msra.mxu0 0
    %4533 = vmatprep.subr.bf16.mxu0 0
    %4534 = vmatpush2.bf16.xpose.msra.mxu0 0
    %4535 = vmatprep.subr.bf16.mxu0 0
    %4536 = vmatpush2.bf16.xpose.msra.mxu0 0
    %4537 = vmatprep.mubr.bf16.mxu0 0
    %4538 = vmatmul.mubr.bf16.gmra.mxu0 %v4500
    %v4539 = vpop.f32.mrf.mxu0
    %v4540 = vadd.f32 0.0, %v4539
    %v4541 = vpop.f32.mrf.mxu0
    %v4542 = vpop.f32.mrf.mxu0
    %v4543 = vpop.f32.mrf.mxu0
    %4544 = vdwg.mxu0
    %4546 = vrot.lane.b32.xlu0 %v4201, 96
    %v4547 = vpop.permute.xlu0 %4546
    %v4549 = vsel %vm196, %v4201, 0
    %v4552 = vsel %vm196, %v4547, 0
    %4554 = vmatprep.subr.bf16.mxu0 0
    %4555 = vmatpush1.bf16.xpose.msra.mxu0 0
    %4556 = vmatprep.subr.bf16.mxu0 0
    %4557 = vmatpush1.bf16.xpose.msra.mxu0 0
    %4558 = vmatprep.subr.bf16.mxu0 0
    %4559 = vmatpush1.bf16.xpose.msra.mxu0 0
    %4560 = vmatprep.subr.bf16.mxu0 0
    %4561 = vmatpush1.bf16.xpose.msra.mxu0 0
    %4562 = vmatprep.subr.bf16.mxu0 0
    %4563 = vmatpush1.bf16.xpose.msra.mxu0 0
    %4564 = vmatprep.subr.bf16.mxu0 0
    %4565 = vmatpush1.bf16.xpose.msra.mxu0 0
    %4566 = vmatprep.subr.bf16.mxu0 0
    %4567 = vmatpush1.bf16.xpose.msra.mxu0 0
    %4568 = vmatprep.subr.bf16.mxu0 0
    %4569 = vmatpush1.bf16.xpose.msra.mxu0 %v4552
    %4570 = vmatprep.subr.bf16.mxu0 0
    %4571 = vmatpush2.bf16.xpose.msra.mxu0 0
    %4572 = vmatprep.subr.bf16.mxu0 0
    %4573 = vmatpush2.bf16.xpose.msra.mxu0 0
    %4574 = vmatprep.subr.bf16.mxu0 0
    %4575 = vmatpush2.bf16.xpose.msra.mxu0 0
    %4576 = vmatprep.subr.bf16.mxu0 0
    %4577 = vmatpush2.bf16.xpose.msra.mxu0 0
    %4578 = vmatprep.subr.bf16.mxu0 0
    %4579 = vmatpush2.bf16.xpose.msra.mxu0 0
    %4580 = vmatprep.subr.bf16.mxu0 0
    %4581 = vmatpush2.bf16.xpose.msra.mxu0 0
    %4582 = vmatprep.subr.bf16.mxu0 0
    %4583 = vmatpush2.bf16.xpose.msra.mxu0 0
    %4584 = vmatprep.subr.bf16.mxu0 0
    %4585 = vmatpush2.bf16.xpose.msra.mxu0 0
    %4586 = vmatprep.mubr.bf16.mxu0 0
    %4587 = vmatmul.mubr.bf16.gmra.mxu0 %v4549
    %v4588 = vpop.f32.mrf.mxu0
    %v4589 = vadd.f32 0.0, %v4588
    %v4590 = vpop.f32.mrf.mxu0
    %v4591 = vpop.f32.mrf.mxu0
    %v4592 = vpop.f32.mrf.mxu0
    %4593 = vdwg.mxu0
    %v4594 = vsel %vm196, %v4246, -inf
    %4595 = vmax.xlane.f32.xlu0 %v4594
    %v4596 = vpop.xlane.xlu0 %4595
    %v4597 = vsel %vm196, %v4295, -inf
    %4598 = vmax.xlane.f32.xlu0 %v4597
    %v4599 = vpop.xlane.xlu0 %4598
    %v4600 = vsel %vm196, %v4344, -inf
    %4601 = vmax.xlane.f32.xlu0 %v4600
    %v4602 = vpop.xlane.xlu0 %4601
    %v4603 = vsel %vm196, %v4393, -inf
    %4604 = vmax.xlane.f32.xlu0 %v4603
    %v4605 = vpop.xlane.xlu0 %4604
    %v4606 = vsel %vm196, %v4442, -inf
    %4607 = vmax.xlane.f32.xlu0 %v4606
    %v4608 = vpop.xlane.xlu0 %4607
    %v4609 = vsel %vm196, %v4491, -inf
    %4610 = vmax.xlane.f32.xlu0 %v4609
    %v4611 = vpop.xlane.xlu0 %4610
    %v4612 = vsel %vm196, %v4540, -inf
    %4613 = vmax.xlane.f32.xlu0 %v4612
    %v4614 = vpop.xlane.xlu0 %4613
    %v4615 = vsel %vm196, %v4589, -inf
    %4616 = vmax.xlane.f32.xlu0 %v4615
    %v4617 = vpop.xlane.xlu0 %4616
    %v4618 = vsub.f32 %v4246, %v4596
    %v4619 = vsub.f32 %v4295, %v4599
    %v4620 = vsub.f32 %v4344, %v4602
    %v4621 = vsub.f32 %v4393, %v4605
    %v4622 = vsub.f32 %v4442, %v4608
    %v4623 = vsub.f32 %v4491, %v4611
    %v4624 = vsub.f32 %v4540, %v4614
    %v4625 = vsub.f32 %v4589, %v4617
    %v4626 = vmul.f32 %v4618, 1.442695
    %v4627 = vpow.pop %v4626
    %v4628 = vmul.f32 %v4619, 1.442695
    %v4629 = vpow.pop %v4628
    %v4630 = vmul.f32 %v4620, 1.442695
    %v4631 = vpow.pop %v4630
    %v4632 = vmul.f32 %v4621, 1.442695
    %v4633 = vpow.pop %v4632
    %v4634 = vmul.f32 %v4622, 1.442695
    %v4635 = vpow.pop %v4634
    %v4636 = vmul.f32 %v4623, 1.442695
    %v4637 = vpow.pop %v4636
    %v4638 = vmul.f32 %v4624, 1.442695
    %v4639 = vpow.pop %v4638
    %v4640 = vmul.f32 %v4625, 1.442695
    %v4641 = vpow.pop %v4640
    %v4642 = vsel %vm196, %v4627, 0.0
    %4643 = vadd.xlane.f32.xlu0 %v4642
    %v4644 = vpop.xlane.xlu0 %4643
    %v4645 = vsel %vm196, %v4629, 0.0
    %4646 = vadd.xlane.f32.xlu0 %v4645
    %v4647 = vpop.xlane.xlu0 %4646
    %v4648 = vsel %vm196, %v4631, 0.0
    %4649 = vadd.xlane.f32.xlu0 %v4648
    %v4650 = vpop.xlane.xlu0 %4649
    %v4651 = vsel %vm196, %v4633, 0.0
    %4652 = vadd.xlane.f32.xlu0 %v4651
    %v4653 = vpop.xlane.xlu0 %4652
    %v4654 = vsel %vm196, %v4635, 0.0
    %4655 = vadd.xlane.f32.xlu0 %v4654
    %v4656 = vpop.xlane.xlu0 %4655
    %v4657 = vsel %vm196, %v4637, 0.0
    %4658 = vadd.xlane.f32.xlu0 %v4657
    %v4659 = vpop.xlane.xlu0 %4658
    %v4660 = vsel %vm196, %v4639, 0.0
    %4661 = vadd.xlane.f32.xlu0 %v4660
    %v4662 = vpop.xlane.xlu0 %4661
    %v4663 = vsel %vm196, %v4641, 0.0
    %4664 = vadd.xlane.f32.xlu0 %v4663
    %v4665 = vpop.xlane.xlu0 %4664
    %v4666 = vrcp.pop %v4644
    %v4667 = vrcp.pop %v4647
    %v4668 = vrcp.pop %v4650
    %v4669 = vrcp.pop %v4653
    %v4670 = vrcp.pop %v4656
    %v4671 = vrcp.pop %v4659
    %v4672 = vrcp.pop %v4662
    %v4673 = vrcp.pop %v4665
    %v4674 = vmul.f32 %v4627, %v4666
    %v4675 = vmul.f32 %v4629, %v4667
    %v4676 = vmul.f32 %v4631, %v4668
    %v4677 = vmul.f32 %v4633, %v4669
    %v4678 = vmul.f32 %v4635, %v4670
    %v4679 = vmul.f32 %v4637, %v4671
    %v4680 = vmul.f32 %v4639, %v4672
    %v4681 = vmul.f32 %v4641, %v4673
    %v4682 = vpack.c.bf16 %v4674, %v4674
    %v4683 = vpack.c.bf16 %v4675, %v4675
    %v4684 = vpack.c.bf16 %v4676, %v4676
    %v4685 = vpack.c.bf16 %v4677, %v4677
    %v4686 = vpack.c.bf16 %v4678, %v4678
    %v4687 = vpack.c.bf16 %v4679, %v4679
    %v4688 = vpack.c.bf16 %v4680, %v4680
    %v4689 = vpack.c.bf16 %v4681, %v4681
    %4690 = vrot.lane.b32.xlu0 %v4194, 64
    %v4691 = vpop.permute.xlu0 %4690
    %v4693 = vsel %vm196, %v4682, 0
    %v4696 = vsel %vm687, %v4691, 0
    %4698 = vmatprep.subr.bf16.mxu0 0
    %4699 = vmatpush1.bf16.msra.mxu0 0
    %4700 = vmatprep.subr.bf16.mxu0 0
    %4701 = vmatpush1.bf16.msra.mxu0 0
    %4702 = vmatprep.subr.bf16.mxu0 0
    %4703 = vmatpush1.bf16.msra.mxu0 0
    %4704 = vmatprep.subr.bf16.mxu0 0
    %4705 = vmatpush1.bf16.msra.mxu0 0
    %4706 = vmatprep.subr.bf16.mxu0 0
    %4707 = vmatpush1.bf16.msra.mxu0 0
    %4708 = vmatprep.subr.bf16.mxu0 0
    %4709 = vmatpush1.bf16.msra.mxu0 0
    %4710 = vmatprep.subr.bf16.mxu0 0
    %4711 = vmatpush1.bf16.msra.mxu0 0
    %4712 = vmatprep.subr.bf16.mxu0 0
    %4713 = vmatpush1.bf16.msra.mxu0 %v4696
    %4714 = vmatprep.subr.bf16.mxu0 0
    %4715 = vmatpush2.bf16.msra.mxu0 0
    %4716 = vmatprep.subr.bf16.mxu0 0
    %4717 = vmatpush2.bf16.msra.mxu0 0
    %4718 = vmatprep.subr.bf16.mxu0 0
    %4719 = vmatpush2.bf16.msra.mxu0 0
    %4720 = vmatprep.subr.bf16.mxu0 0
    %4721 = vmatpush2.bf16.msra.mxu0 0
    %4722 = vmatprep.subr.bf16.mxu0 0
    %4723 = vmatpush2.bf16.msra.mxu0 0
    %4724 = vmatprep.subr.bf16.mxu0 0
    %4725 = vmatpush2.bf16.msra.mxu0 0
    %4726 = vmatprep.subr.bf16.mxu0 0
    %4727 = vmatpush2.bf16.msra.mxu0 0
    %4728 = vmatprep.subr.bf16.mxu0 0
    %4729 = vmatpush2.bf16.msra.mxu0 0
    %4730 = vmatprep.mubr.bf16.mxu0 0
    %4731 = vmatmul.mubr.bf16.gmra.mxu0 %v4693
    %v4732 = vpop.f32.mrf.mxu0
    %v4733 = vadd.f32 0.0, %v4732
    %v4734 = vpop.f32.mrf.mxu0
    %v4735 = vpop.f32.mrf.mxu0
    %v4736 = vpop.f32.mrf.mxu0
    %4737 = vdwg.mxu0
    %4738 = vrot.lane.b32.xlu0 %v4195, 64
    %v4739 = vpop.permute.xlu0 %4738
    %v4741 = vsel %vm196, %v4683, 0
    %v4744 = vsel %vm687, %v4739, 0
    %4746 = vmatprep.subr.bf16.mxu0 0
    %4747 = vmatpush1.bf16.msra.mxu0 0
    %4748 = vmatprep.subr.bf16.mxu0 0
    %4749 = vmatpush1.bf16.msra.mxu0 0
    %4750 = vmatprep.subr.bf16.mxu0 0
    %4751 = vmatpush1.bf16.msra.mxu0 0
    %4752 = vmatprep.subr.bf16.mxu0 0
    %4753 = vmatpush1.bf16.msra.mxu0 0
    %4754 = vmatprep.subr.bf16.mxu0 0
    %4755 = vmatpush1.bf16.msra.mxu0 0
    %4756 = vmatprep.subr.bf16.mxu0 0
    %4757 = vmatpush1.bf16.msra.mxu0 0
    %4758 = vmatprep.subr.bf16.mxu0 0
    %4759 = vmatpush1.bf16.msra.mxu0 0
    %4760 = vmatprep.subr.bf16.mxu0 0
    %4761 = vmatpush1.bf16.msra.mxu0 %v4744
    %4762 = vmatprep.subr.bf16.mxu0 0
    %4763 = vmatpush2.bf16.msra.mxu0 0
    %4764 = vmatprep.subr.bf16.mxu0 0
    %4765 = vmatpush2.bf16.msra.mxu0 0
    %4766 = vmatprep.subr.bf16.mxu0 0
    %4767 = vmatpush2.bf16.msra.mxu0 0
    %4768 = vmatprep.subr.bf16.mxu0 0
    %4769 = vmatpush2.bf16.msra.mxu0 0
    %4770 = vmatprep.subr.bf16.mxu0 0
    %4771 = vmatpush2.bf16.msra.mxu0 0
    %4772 = vmatprep.subr.bf16.mxu0 0
    %4773 = vmatpush2.bf16.msra.mxu0 0
    %4774 = vmatprep.subr.bf16.mxu0 0
    %4775 = vmatpush2.bf16.msra.mxu0 0
    %4776 = vmatprep.subr.bf16.mxu0 0
    %4777 = vmatpush2.bf16.msra.mxu0 0
    %4778 = vmatprep.mubr.bf16.mxu0 0
    %4779 = vmatmul.mubr.bf16.gmra.mxu0 %v4741
    %v4780 = vpop.f32.mrf.mxu0
    %v4781 = vadd.f32 0.0, %v4780
    %v4782 = vpop.f32.mrf.mxu0
    %v4783 = vpop.f32.mrf.mxu0
    %v4784 = vpop.f32.mrf.mxu0
    %4785 = vdwg.mxu0
    %4786 = vrot.lane.b32.xlu0 %v4196, 64
    %v4787 = vpop.permute.xlu0 %4786
    %v4789 = vsel %vm196, %v4684, 0
    %v4792 = vsel %vm687, %v4787, 0
    %4794 = vmatprep.subr.bf16.mxu0 0
    %4795 = vmatpush1.bf16.msra.mxu0 0
    %4796 = vmatprep.subr.bf16.mxu0 0
    %4797 = vmatpush1.bf16.msra.mxu0 0
    %4798 = vmatprep.subr.bf16.mxu0 0
    %4799 = vmatpush1.bf16.msra.mxu0 0
    %4800 = vmatprep.subr.bf16.mxu0 0
    %4801 = vmatpush1.bf16.msra.mxu0 0
    %4802 = vmatprep.subr.bf16.mxu0 0
    %4803 = vmatpush1.bf16.msra.mxu0 0
    %4804 = vmatprep.subr.bf16.mxu0 0
    %4805 = vmatpush1.bf16.msra.mxu0 0
    %4806 = vmatprep.subr.bf16.mxu0 0
    %4807 = vmatpush1.bf16.msra.mxu0 0
    %4808 = vmatprep.subr.bf16.mxu0 0
    %4809 = vmatpush1.bf16.msra.mxu0 %v4792
    %4810 = vmatprep.subr.bf16.mxu0 0
    %4811 = vmatpush2.bf16.msra.mxu0 0
    %4812 = vmatprep.subr.bf16.mxu0 0
    %4813 = vmatpush2.bf16.msra.mxu0 0
    %4814 = vmatprep.subr.bf16.mxu0 0
    %4815 = vmatpush2.bf16.msra.mxu0 0
    %4816 = vmatprep.subr.bf16.mxu0 0
    %4817 = vmatpush2.bf16.msra.mxu0 0
    %4818 = vmatprep.subr.bf16.mxu0 0
    %4819 = vmatpush2.bf16.msra.mxu0 0
    %4820 = vmatprep.subr.bf16.mxu0 0
    %4821 = vmatpush2.bf16.msra.mxu0 0
    %4822 = vmatprep.subr.bf16.mxu0 0
    %4823 = vmatpush2.bf16.msra.mxu0 0
    %4824 = vmatprep.subr.bf16.mxu0 0
    %4825 = vmatpush2.bf16.msra.mxu0 0
    %4826 = vmatprep.mubr.bf16.mxu0 0
    %4827 = vmatmul.mubr.bf16.gmra.mxu0 %v4789
    %v4828 = vpop.f32.mrf.mxu0
    %v4829 = vadd.f32 0.0, %v4828
    %v4830 = vpop.f32.mrf.mxu0
    %v4831 = vpop.f32.mrf.mxu0
    %v4832 = vpop.f32.mrf.mxu0
    %4833 = vdwg.mxu0
    %4834 = vrot.lane.b32.xlu0 %v4197, 64
    %v4835 = vpop.permute.xlu0 %4834
    %v4837 = vsel %vm196, %v4685, 0
    %v4840 = vsel %vm687, %v4835, 0
    %4842 = vmatprep.subr.bf16.mxu0 0
    %4843 = vmatpush1.bf16.msra.mxu0 0
    %4844 = vmatprep.subr.bf16.mxu0 0
    %4845 = vmatpush1.bf16.msra.mxu0 0
    %4846 = vmatprep.subr.bf16.mxu0 0
    %4847 = vmatpush1.bf16.msra.mxu0 0
    %4848 = vmatprep.subr.bf16.mxu0 0
    %4849 = vmatpush1.bf16.msra.mxu0 0
    %4850 = vmatprep.subr.bf16.mxu0 0
    %4851 = vmatpush1.bf16.msra.mxu0 0
    %4852 = vmatprep.subr.bf16.mxu0 0
    %4853 = vmatpush1.bf16.msra.mxu0 0
    %4854 = vmatprep.subr.bf16.mxu0 0
    %4855 = vmatpush1.bf16.msra.mxu0 0
    %4856 = vmatprep.subr.bf16.mxu0 0
    %4857 = vmatpush1.bf16.msra.mxu0 %v4840
    %4858 = vmatprep.subr.bf16.mxu0 0
    %4859 = vmatpush2.bf16.msra.mxu0 0
    %4860 = vmatprep.subr.bf16.mxu0 0
    %4861 = vmatpush2.bf16.msra.mxu0 0
    %4862 = vmatprep.subr.bf16.mxu0 0
    %4863 = vmatpush2.bf16.msra.mxu0 0
    %4864 = vmatprep.subr.bf16.mxu0 0
    %4865 = vmatpush2.bf16.msra.mxu0 0
    %4866 = vmatprep.subr.bf16.mxu0 0
    %4867 = vmatpush2.bf16.msra.mxu0 0
    %4868 = vmatprep.subr.bf16.mxu0 0
    %4869 = vmatpush2.bf16.msra.mxu0 0
    %4870 = vmatprep.subr.bf16.mxu0 0
    %4871 = vmatpush2.bf16.msra.mxu0 0
    %4872 = vmatprep.subr.bf16.mxu0 0
    %4873 = vmatpush2.bf16.msra.mxu0 0
    %4874 = vmatprep.mubr.bf16.mxu0 0
    %4875 = vmatmul.mubr.bf16.gmra.mxu0 %v4837
    %v4876 = vpop.f32.mrf.mxu0
    %v4877 = vadd.f32 0.0, %v4876
    %v4878 = vpop.f32.mrf.mxu0
    %v4879 = vpop.f32.mrf.mxu0
    %v4880 = vpop.f32.mrf.mxu0
    %4881 = vdwg.mxu0
    %4882 = vrot.lane.b32.xlu0 %v4198, 64
    %v4883 = vpop.permute.xlu0 %4882
    %v4885 = vsel %vm196, %v4686, 0
    %v4888 = vsel %vm687, %v4883, 0
    %4890 = vmatprep.subr.bf16.mxu0 0
    %4891 = vmatpush1.bf16.msra.mxu0 0
    %4892 = vmatprep.subr.bf16.mxu0 0
    %4893 = vmatpush1.bf16.msra.mxu0 0
    %4894 = vmatprep.subr.bf16.mxu0 0
    %4895 = vmatpush1.bf16.msra.mxu0 0
    %4896 = vmatprep.subr.bf16.mxu0 0
    %4897 = vmatpush1.bf16.msra.mxu0 0
    %4898 = vmatprep.subr.bf16.mxu0 0
    %4899 = vmatpush1.bf16.msra.mxu0 0
    %4900 = vmatprep.subr.bf16.mxu0 0
    %4901 = vmatpush1.bf16.msra.mxu0 0
    %4902 = vmatprep.subr.bf16.mxu0 0
    %4903 = vmatpush1.bf16.msra.mxu0 0
    %4904 = vmatprep.subr.bf16.mxu0 0
    %4905 = vmatpush1.bf16.msra.mxu0 %v4888
    %4906 = vmatprep.subr.bf16.mxu0 0
    %4907 = vmatpush2.bf16.msra.mxu0 0
    %4908 = vmatprep.subr.bf16.mxu0 0
    %4909 = vmatpush2.bf16.msra.mxu0 0
    %4910 = vmatprep.subr.bf16.mxu0 0
    %4911 = vmatpush2.bf16.msra.mxu0 0
    %4912 = vmatprep.subr.bf16.mxu0 0
    %4913 = vmatpush2.bf16.msra.mxu0 0
    %4914 = vmatprep.subr.bf16.mxu0 0
    %4915 = vmatpush2.bf16.msra.mxu0 0
    %4916 = vmatprep.subr.bf16.mxu0 0
    %4917 = vmatpush2.bf16.msra.mxu0 0
    %4918 = vmatprep.subr.bf16.mxu0 0
    %4919 = vmatpush2.bf16.msra.mxu0 0
    %4920 = vmatprep.subr.bf16.mxu0 0
    %4921 = vmatpush2.bf16.msra.mxu0 0
    %4922 = vmatprep.mubr.bf16.mxu0 0
    %4923 = vmatmul.mubr.bf16.gmra.mxu0 %v4885
    %v4924 = vpop.f32.mrf.mxu0
    %v4925 = vadd.f32 0.0, %v4924
    %v4926 = vpop.f32.mrf.mxu0
    %v4927 = vpop.f32.mrf.mxu0
    %v4928 = vpop.f32.mrf.mxu0
    %4929 = vdwg.mxu0
    %4930 = vrot.lane.b32.xlu0 %v4199, 64
    %v4931 = vpop.permute.xlu0 %4930
    %v4933 = vsel %vm196, %v4687, 0
    %v4936 = vsel %vm687, %v4931, 0
    %4938 = vmatprep.subr.bf16.mxu0 0
    %4939 = vmatpush1.bf16.msra.mxu0 0
    %4940 = vmatprep.subr.bf16.mxu0 0
    %4941 = vmatpush1.bf16.msra.mxu0 0
    %4942 = vmatprep.subr.bf16.mxu0 0
    %4943 = vmatpush1.bf16.msra.mxu0 0
    %4944 = vmatprep.subr.bf16.mxu0 0
    %4945 = vmatpush1.bf16.msra.mxu0 0
    %4946 = vmatprep.subr.bf16.mxu0 0
    %4947 = vmatpush1.bf16.msra.mxu0 0
    %4948 = vmatprep.subr.bf16.mxu0 0
    %4949 = vmatpush1.bf16.msra.mxu0 0
    %4950 = vmatprep.subr.bf16.mxu0 0
    %4951 = vmatpush1.bf16.msra.mxu0 0
    %4952 = vmatprep.subr.bf16.mxu0 0
    %4953 = vmatpush1.bf16.msra.mxu0 %v4936
    %4954 = vmatprep.subr.bf16.mxu0 0
    %4955 = vmatpush2.bf16.msra.mxu0 0
    %4956 = vmatprep.subr.bf16.mxu0 0
    %4957 = vmatpush2.bf16.msra.mxu0 0
    %4958 = vmatprep.subr.bf16.mxu0 0
    %4959 = vmatpush2.bf16.msra.mxu0 0
    %4960 = vmatprep.subr.bf16.mxu0 0
    %4961 = vmatpush2.bf16.msra.mxu0 0
    %4962 = vmatprep.subr.bf16.mxu0 0
    %4963 = vmatpush2.bf16.msra.mxu0 0
    %4964 = vmatprep.subr.bf16.mxu0 0
    %4965 = vmatpush2.bf16.msra.mxu0 0
    %4966 = vmatprep.subr.bf16.mxu0 0
    %4967 = vmatpush2.bf16.msra.mxu0 0
    %4968 = vmatprep.subr.bf16.mxu0 0
    %4969 = vmatpush2.bf16.msra.mxu0 0
    %4970 = vmatprep.mubr.bf16.mxu0 0
    %4971 = vmatmul.mubr.bf16.gmra.mxu0 %v4933
    %v4972 = vpop.f32.mrf.mxu0
    %v4973 = vadd.f32 0.0, %v4972
    %v4974 = vpop.f32.mrf.mxu0
    %v4975 = vpop.f32.mrf.mxu0
    %v4976 = vpop.f32.mrf.mxu0
    %4977 = vdwg.mxu0
    %4978 = vrot.lane.b32.xlu0 %v4200, 64
    %v4979 = vpop.permute.xlu0 %4978
    %v4981 = vsel %vm196, %v4688, 0
    %v4984 = vsel %vm687, %v4979, 0
    %4986 = vmatprep.subr.bf16.mxu0 0
    %4987 = vmatpush1.bf16.msra.mxu0 0
    %4988 = vmatprep.subr.bf16.mxu0 0
    %4989 = vmatpush1.bf16.msra.mxu0 0
    %4990 = vmatprep.subr.bf16.mxu0 0
    %4991 = vmatpush1.bf16.msra.mxu0 0
    %4992 = vmatprep.subr.bf16.mxu0 0
    %4993 = vmatpush1.bf16.msra.mxu0 0
    %4994 = vmatprep.subr.bf16.mxu0 0
    %4995 = vmatpush1.bf16.msra.mxu0 0
    %4996 = vmatprep.subr.bf16.mxu0 0
    %4997 = vmatpush1.bf16.msra.mxu0 0
    %4998 = vmatprep.subr.bf16.mxu0 0
    %4999 = vmatpush1.bf16.msra.mxu0 0
    %5000 = vmatprep.subr.bf16.mxu0 0
    %5001 = vmatpush1.bf16.msra.mxu0 %v4984
    %5002 = vmatprep.subr.bf16.mxu0 0
    %5003 = vmatpush2.bf16.msra.mxu0 0
    %5004 = vmatprep.subr.bf16.mxu0 0
    %5005 = vmatpush2.bf16.msra.mxu0 0
    %5006 = vmatprep.subr.bf16.mxu0 0
    %5007 = vmatpush2.bf16.msra.mxu0 0
    %5008 = vmatprep.subr.bf16.mxu0 0
    %5009 = vmatpush2.bf16.msra.mxu0 0
    %5010 = vmatprep.subr.bf16.mxu0 0
    %5011 = vmatpush2.bf16.msra.mxu0 0
    %5012 = vmatprep.subr.bf16.mxu0 0
    %5013 = vmatpush2.bf16.msra.mxu0 0
    %5014 = vmatprep.subr.bf16.mxu0 0
    %5015 = vmatpush2.bf16.msra.mxu0 0
    %5016 = vmatprep.subr.bf16.mxu0 0
    %5017 = vmatpush2.bf16.msra.mxu0 0
    %5018 = vmatprep.mubr.bf16.mxu0 0
    %5019 = vmatmul.mubr.bf16.gmra.mxu0 %v4981
    %v5020 = vpop.f32.mrf.mxu0
    %v5021 = vadd.f32 0.0, %v5020
    %v5022 = vpop.f32.mrf.mxu0
    %v5023 = vpop.f32.mrf.mxu0
    %v5024 = vpop.f32.mrf.mxu0
    %5025 = vdwg.mxu0
    %5026 = vrot.lane.b32.xlu0 %v4201, 64
    %v5027 = vpop.permute.xlu0 %5026
    %v5029 = vsel %vm196, %v4689, 0
    %v5032 = vsel %vm687, %v5027, 0
    %5034 = vmatprep.subr.bf16.mxu0 0
    %5035 = vmatpush1.bf16.msra.mxu0 0
    %5036 = vmatprep.subr.bf16.mxu0 0
    %5037 = vmatpush1.bf16.msra.mxu0 0
    %5038 = vmatprep.subr.bf16.mxu0 0
    %5039 = vmatpush1.bf16.msra.mxu0 0
    %5040 = vmatprep.subr.bf16.mxu0 0
    %5041 = vmatpush1.bf16.msra.mxu0 0
    %5042 = vmatprep.subr.bf16.mxu0 0
    %5043 = vmatpush1.bf16.msra.mxu0 0
    %5044 = vmatprep.subr.bf16.mxu0 0
    %5045 = vmatpush1.bf16.msra.mxu0 0
    %5046 = vmatprep.subr.bf16.mxu0 0
    %5047 = vmatpush1.bf16.msra.mxu0 0
    %5048 = vmatprep.subr.bf16.mxu0 0
    %5049 = vmatpush1.bf16.msra.mxu0 %v5032
    %5050 = vmatprep.subr.bf16.mxu0 0
    %5051 = vmatpush2.bf16.msra.mxu0 0
    %5052 = vmatprep.subr.bf16.mxu0 0
    %5053 = vmatpush2.bf16.msra.mxu0 0
    %5054 = vmatprep.subr.bf16.mxu0 0
    %5055 = vmatpush2.bf16.msra.mxu0 0
    %5056 = vmatprep.subr.bf16.mxu0 0
    %5057 = vmatpush2.bf16.msra.mxu0 0
    %5058 = vmatprep.subr.bf16.mxu0 0
    %5059 = vmatpush2.bf16.msra.mxu0 0
    %5060 = vmatprep.subr.bf16.mxu0 0
    %5061 = vmatpush2.bf16.msra.mxu0 0
    %5062 = vmatprep.subr.bf16.mxu0 0
    %5063 = vmatpush2.bf16.msra.mxu0 0
    %5064 = vmatprep.subr.bf16.mxu0 0
    %5065 = vmatpush2.bf16.msra.mxu0 0
    %5066 = vmatprep.mubr.bf16.mxu0 0
    %5067 = vmatmul.mubr.bf16.gmra.mxu0 %v5029
    %v5068 = vpop.f32.mrf.mxu0
    %v5069 = vadd.f32 0.0, %v5068
    %v5070 = vpop.f32.mrf.mxu0
    %v5071 = vpop.f32.mrf.mxu0
    %v5072 = vpop.f32.mrf.mxu0
    %5073 = vdwg.mxu0
    %5076 = vrot.lane.b32.xlu0 %v4829, 8
    %v5077 = vpop.permute.xlu0 %5076
    %5078 = vrot.lane.b32.xlu0 %v4877, 8
    %v5079 = vpop.permute.xlu0 %5078
    %5084 = vrot.lane.b32.xlu0 %v4925, 16
    %v5085 = vpop.permute.xlu0 %5084
    %5086 = vrot.lane.b32.xlu0 %v4973, 16
    %v5087 = vpop.permute.xlu0 %5086
    %5092 = vrot.lane.b32.xlu0 %v5021, 24
    %v5093 = vpop.permute.xlu0 %5092
    %5094 = vrot.lane.b32.xlu0 %v5069, 24
    %v5095 = vpop.permute.xlu0 %5094
    %v5098 = vsel %vm196, %v4733, %v5077
    %v5099 = vsel %vm196, %v4781, %v5079
    %v5100 = vsel %vm1093, %v5098, %v5085
    %v5101 = vsel %vm1093, %v5099, %v5087
    %v5102 = vsel %vm1096, %v5100, %v5093
    %v5103 = vsel %vm1096, %v5101, %v5095
    %v5104 = vpack.c.bf16 %v5103, %v5102
    %v5109 = vunpack.c.l.b16 %v4045
    %v5110 = vunpack.c.l.b16 %v4046
    %v5111 = vunpack.c.l.b16 %v4047
    %v5112 = vunpack.c.l.b16 %v4048
    %v5113 = vpack.c.b16 %v5110, %v5109
    %v5114 = vpack.c.b16 %v5112, %v5111
    %v5118 = vsel %vm64, %v5104, 0
    %5120 = vmatprep.subr.bf16.mxu0 0
    %5121 = vmatpush1.bf16.msra.mxu0 0
    %5122 = vmatprep.subr.bf16.mxu0 0
    %5123 = vmatpush1.bf16.msra.mxu0 0
    %5124 = vmatprep.subr.bf16.mxu0 0
    %5125 = vmatpush1.bf16.msra.mxu0 0
    %5126 = vmatprep.subr.bf16.mxu0 0
    %5127 = vmatpush1.bf16.msra.mxu0 0
    %5128 = vmatprep.subr.bf16.mxu0 0
    %5129 = vmatpush1.bf16.msra.mxu0 0
    %5130 = vmatprep.subr.bf16.mxu0 0
    %5131 = vmatpush1.bf16.msra.mxu0 0
    %5132 = vmatprep.subr.bf16.mxu0 0
    %5133 = vmatpush1.bf16.msra.mxu0 %v5114
    %5134 = vmatprep.subr.bf16.mxu0 0
    %5135 = vmatpush1.bf16.msra.mxu0 %v5113
    %5136 = vmatprep.subr.bf16.mxu0 0
    %5137 = vmatpush2.bf16.msra.mxu0 0
    %5138 = vmatprep.subr.bf16.mxu0 0
    %5139 = vmatpush2.bf16.msra.mxu0 0
    %5140 = vmatprep.subr.bf16.mxu0 0
    %5141 = vmatpush2.bf16.msra.mxu0 0
    %5142 = vmatprep.subr.bf16.mxu0 0
    %5143 = vmatpush2.bf16.msra.mxu0 0
    %5144 = vmatprep.subr.bf16.mxu0 0
    %5145 = vmatpush2.bf16.msra.mxu0 0
    %5146 = vmatprep.subr.bf16.mxu0 0
    %5147 = vmatpush2.bf16.msra.mxu0 0
    %5148 = vmatprep.subr.bf16.mxu0 0
    %5149 = vmatpush2.bf16.msra.mxu0 0
    %5150 = vmatprep.subr.bf16.mxu0 0
    %5151 = vmatpush2.bf16.msra.mxu0 0
    %5152 = vmatprep.mubr.bf16.mxu0 0
    %5153 = vmatmul.mubr.bf16.gmra.mxu0 %v5118
    %v5154 = vpop.f32.mrf.mxu0
    %v5155 = vadd.f32 0.0, %v5154
    %v5156 = vpop.f32.mrf.mxu0
    %v5157 = vpop.f32.mrf.mxu0
    %v5158 = vadd.f32 0.0, %v5157
    %v5159 = vpop.f32.mrf.mxu0
    %5160 = vdwg.mxu0
    %v5161 = vadd.f32 %v4037, %v5155
    %v5162 = vadd.f32 %v4038, %v5158
    %v5163 = vlaneseq
    %v5164 = vshrl.u32 %v5163, 7
    %v5165 = vsub.s32 2, %v5164
    %v5166 = vrot.slane %v4072, %v5165
    %v5167 = vadd.f32 %v5161, %v5166
    %v5168 = vadd.f32 %v5162, %v5166
    %v5169 = vsel %vm64, %v5167, 0.0
    %5170 = vadd.xlane.f32.xlu0 %v5169
    %v5171 = vpop.xlane.xlu0 %5170
    %v5172 = vsel %vm64, %v5168, 0.0
    %5173 = vadd.xlane.f32.xlu0 %v5172
    %v5174 = vpop.xlane.xlu0 %5173
    %v5175 = vmul.f32 %v5171, %v71
    %v5176 = vmul.f32 %v5174, %v71
    %v5177 = vsub.f32 %v5167, %v5175
    %v5178 = vsub.f32 %v5168, %v5176
    %v5179 = vmul.f32 %v5177, %v5177
    %v5180 = vmul.f32 %v5178, %v5178
    %v5181 = vsel %vm64, %v5179, 0.0
    %5182 = vadd.xlane.f32.xlu0 %v5181
    %v5183 = vpop.xlane.xlu0 %5182
    %v5184 = vsel %vm64, %v5180, 0.0
    %5185 = vadd.xlane.f32.xlu0 %v5184
    %v5186 = vpop.xlane.xlu0 %5185
    %v5187 = vmul.f32 %v5183, %v71
    %v5188 = vmul.f32 %v5186, %v71
    %v5189 = vadd.f32 %v5187, 1e-05
    %v5190 = vadd.f32 %v5188, 1e-05
    %v5191 = vrsqrt.pop %v5189
    %v5192 = vrsqrt.pop %v5190
    %v5193 = vmul.f32 %v5177, %v5191
    %v5194 = vmul.f32 %v5178, %v5192
    %v5195 = vlaneseq
    %v5196 = vshrl.u32 %v5195, 7
    %v5197 = vsub.s32 3, %v5196
    %v5198 = vrot.slane %v4072, %v5197
    %v5199 = vmul.f32 %v5193, %v5198
    %v5200 = vmul.f32 %v5194, %v5198
    %v5201 = vlaneseq
    %v5202 = vshrl.u32 %v5201, 7
    %v5203 = vsub.s32 4, %v5202
    %v5204 = vrot.slane %v4072, %v5203
    %v5205 = vadd.f32 %v5199, %v5204
    %v5206 = vadd.f32 %v5200, %v5204
    %v5207 = vpack.c.bf16 %v5206, %v5205
    %v5208 = vlaneseq
    %v5209 = vshrl.u32 %v5208, 7
    %v5210 = vsub.s32 0, %v5209
    %v5211 = vrot.slane %v4074, %v5210
    %v5216 = vunpack.c.l.b16 %v4050
    %v5217 = vunpack.c.l.b16 %v4051
    %v5218 = vunpack.c.l.b16 %v4052
    %v5219 = vunpack.c.l.b16 %v4053
    %v5220 = vpack.c.b16 %v5217, %v5216
    %v5221 = vpack.c.b16 %v5219, %v5218
    %v5225 = vsel %vm64, %v5207, 0
    %5227 = vmatprep.subr.bf16.mxu0 0
    %5228 = vmatpush1.bf16.msra.mxu0 0
    %5229 = vmatprep.subr.bf16.mxu0 0
    %5230 = vmatpush1.bf16.msra.mxu0 0
    %5231 = vmatprep.subr.bf16.mxu0 0
    %5232 = vmatpush1.bf16.msra.mxu0 0
    %5233 = vmatprep.subr.bf16.mxu0 0
    %5234 = vmatpush1.bf16.msra.mxu0 0
    %5235 = vmatprep.subr.bf16.mxu0 0
    %5236 = vmatpush1.bf16.msra.mxu0 0
    %5237 = vmatprep.subr.bf16.mxu0 0
    %5238 = vmatpush1.bf16.msra.mxu0 0
    %5239 = vmatprep.subr.bf16.mxu0 0
    %5240 = vmatpush1.bf16.msra.mxu0 %v5221
    %5241 = vmatprep.subr.bf16.mxu0 0
    %5242 = vmatpush1.bf16.msra.mxu0 %v5220
    %5243 = vmatprep.subr.bf16.mxu0 0
    %5244 = vmatpush2.bf16.msra.mxu0 0
    %5245 = vmatprep.subr.bf16.mxu0 0
    %5246 = vmatpush2.bf16.msra.mxu0 0
    %5247 = vmatprep.subr.bf16.mxu0 0
    %5248 = vmatpush2.bf16.msra.mxu0 0
    %5249 = vmatprep.subr.bf16.mxu0 0
    %5250 = vmatpush2.bf16.msra.mxu0 0
    %5251 = vmatprep.subr.bf16.mxu0 0
    %5252 = vmatpush2.bf16.msra.mxu0 0
    %5253 = vmatprep.subr.bf16.mxu0 0
    %5254 = vmatpush2.bf16.msra.mxu0 0
    %5255 = vmatprep.subr.bf16.mxu0 0
    %5256 = vmatpush2.bf16.msra.mxu0 0
    %5257 = vmatprep.subr.bf16.mxu0 0
    %5258 = vmatpush2.bf16.msra.mxu0 0
    %5259 = vmatprep.mubr.bf16.mxu0 0
    %5260 = vmatmul.mubr.bf16.gmra.mxu0 %v5225
    %v5261 = vpop.f32.mrf.mxu0
    %v5262 = vadd.f32 %v5211, %v5261
    %v5263 = vpop.f32.mrf.mxu0
    %v5264 = vpop.f32.mrf.mxu0
    %v5265 = vadd.f32 %v5211, %v5264
    %v5266 = vpop.f32.mrf.mxu0
    %5267 = vdwg.mxu0
    %v5268 = vmul.f32 %v5262, 0.5
    %v5269 = vmul.f32 %v5265, 0.5
    %v5270 = vmul.f32 %v5262, 0.70710677
    %v5271 = vmul.f32 %v5265, 0.70710677
    %v5272 = verf.f32.pop %v5270
    %v5273 = verf.f32.pop %v5271
    %v5274 = vadd.f32 %v5272, 1.0
    %v5275 = vadd.f32 %v5273, 1.0
    %v5276 = vmul.f32 %v5268, %v5274
    %v5277 = vmul.f32 %v5269, %v5275
    %v5278 = vpack.c.bf16 %v5277, %v5276
    %v5279 = vlaneseq
    %v5280 = vshrl.u32 %v5279, 7
    %v5281 = vsub.s32 5, %v5280
    %v5282 = vrot.slane %v4072, %v5281
    %v5299 = vunpack.c.l.b16 %v4055
    %v5300 = vunpack.c.l.b16 %v4056
    %v5301 = vunpack.c.l.b16 %v4057
    %v5302 = vunpack.c.l.b16 %v4058
    %v5303 = vunpack.c.l.b16 %v4059
    %v5304 = vunpack.c.l.b16 %v4060
    %v5305 = vunpack.c.l.b16 %v4061
    %v5306 = vunpack.c.l.b16 %v4062
    %v5307 = vunpack.c.l.b16 %v4063
    %v5308 = vunpack.c.l.b16 %v4064
    %v5309 = vunpack.c.l.b16 %v4065
    %v5310 = vunpack.c.l.b16 %v4066
    %v5311 = vunpack.c.l.b16 %v4067
    %v5312 = vunpack.c.l.b16 %v4068
    %v5313 = vunpack.c.l.b16 %v4069
    %v5314 = vunpack.c.l.b16 %v4070
    %v5315 = vpack.c.b16 %v5300, %v5299
    %v5316 = vpack.c.b16 %v5302, %v5301
    %v5317 = vpack.c.b16 %v5304, %v5303
    %v5318 = vpack.c.b16 %v5306, %v5305
    %v5319 = vpack.c.b16 %v5308, %v5307
    %v5320 = vpack.c.b16 %v5310, %v5309
    %v5321 = vpack.c.b16 %v5312, %v5311
    %v5322 = vpack.c.b16 %v5314, %v5313
    %5331 = vmatprep.subr.bf16.mxu0 0
    %5332 = vmatpush1.bf16.msra.mxu0 %v5322
    %5333 = vmatprep.subr.bf16.mxu0 0
    %5334 = vmatpush1.bf16.msra.mxu0 %v5321
    %5335 = vmatprep.subr.bf16.mxu0 0
    %5336 = vmatpush1.bf16.msra.mxu0 %v5320
    %5337 = vmatprep.subr.bf16.mxu0 0
    %5338 = vmatpush1.bf16.msra.mxu0 %v5319
    %5339 = vmatprep.subr.bf16.mxu0 0
    %5340 = vmatpush1.bf16.msra.mxu0 %v5318
    %5341 = vmatprep.subr.bf16.mxu0 0
    %5342 = vmatpush1.bf16.msra.mxu0 %v5317
    %5343 = vmatprep.subr.bf16.mxu0 0
    %5344 = vmatpush1.bf16.msra.mxu0 %v5316
    %5345 = vmatprep.subr.bf16.mxu0 0
    %5346 = vmatpush1.bf16.msra.mxu0 %v5315
    %5347 = vmatprep.subr.bf16.mxu0 0
    %5348 = vmatpush2.bf16.msra.mxu0 0
    %5349 = vmatprep.subr.bf16.mxu0 0
    %5350 = vmatpush2.bf16.msra.mxu0 0
    %5351 = vmatprep.subr.bf16.mxu0 0
    %5352 = vmatpush2.bf16.msra.mxu0 0
    %5353 = vmatprep.subr.bf16.mxu0 0
    %5354 = vmatpush2.bf16.msra.mxu0 0
    %5355 = vmatprep.subr.bf16.mxu0 0
    %5356 = vmatpush2.bf16.msra.mxu0 0
    %5357 = vmatprep.subr.bf16.mxu0 0
    %5358 = vmatpush2.bf16.msra.mxu0 0
    %5359 = vmatprep.subr.bf16.mxu0 0
    %5360 = vmatpush2.bf16.msra.mxu0 0
    %5361 = vmatprep.subr.bf16.mxu0 0
    %5362 = vmatpush2.bf16.msra.mxu0 0
    %5363 = vmatprep.mubr.bf16.mxu0 0
    %5364 = vmatmul.mubr.bf16.gmra.mxu0 %v5278
    %v5365 = vpop.f32.mrf.mxu0
    %v5366 = vadd.f32 %v5282, %v5365
    %v5367 = vpop.f32.mrf.mxu0
    %v5368 = vpop.f32.mrf.mxu0
    %v5369 = vadd.f32 %v5282, %v5368
    %v5370 = vpop.f32.mrf.mxu0
    %5371 = vdwg.mxu0
    %v5372 = vadd.f32 %v5167, %v5366
    %v5373 = vadd.f32 %v5168, %v5369
    %5374 = vst.msk [vmem:[#allocation2] sm:$0xff] %vm64, %v5372
    %5375 = vst.msk [vmem:[#allocation2 + $0x8] sm:$0xff] %vm64, %v5373
    // Predicated region
    $region34: #{bert_forward_pallas.1} parent=1 // pred_check
      _
    $region35: #{bert_forward_pallas.1} parent=1 // pred_check_branch
      %5377 = sbr.rel (0) target = $region37
    $region36: #{bert_forward_pallas.1} parent=1 // pred_region
      %s5379 = ssub.s32 256, 256
      %5380 = vsyncadd [#allocation3], %s5379
      %s5381 = sshll.u32 [#allocation2], 4
      %s5382 = int_to_ptr.vmem [resolvable:$true] %s5381
      %5387 = dma.vmem_to_hbm [thread:$0]  %s5382, 256, %s8, [#allocation3], 128, 128, 8
    $region37: #{bert_forward_pallas.1} parent=1 // pred_fallthru
      _
    // Predicated region
    $region38: #{bert_forward_pallas.1} parent=1 // pred_check
      _
    $region39: #{bert_forward_pallas.1} parent=1 // pred_check_branch
      %5389 = sbr.rel (0) target = $region41
    $region40: #{bert_forward_pallas.1} parent=1 // pred_region
      %5390 = dma.done [#allocation3], 256
    $region41: #{bert_forward_pallas.1} parent=1 // pred_fallthru
      _
    %5391 = vsyncpa [#allocation3], 1

</llo_original>
